<compile_context>
chip_gen: v6e
topology: v6e:2x2x1
jax: 0.10.0
libtpu: 0.0.40
codegen_flags: <defaults>
</compile_context>

<pallas_src>
import jax
import jax.numpy as jnp
from jax.experimental import pallas as pl
from jax.experimental.pallas import tpu as pltpu

LN_EPS = 1e-5
BN_EPS = 1e-5


def _layernorm_bf16(x):
    """Row-wise LayerNorm (affine folded into conv1), one-pass stats, bf16 output."""
    e = x.shape[-1]
    s1 = jnp.sum(x, axis=-1, keepdims=True)
    s2 = jnp.sum(x * x, axis=-1, keepdims=True)
    mu = s1 * (1.0 / e)
    var = s2 * (1.0 / e) - mu * mu
    return ((x - mu) * jax.lax.rsqrt(var + LN_EPS)).astype(jnp.bfloat16)


def _conv_module_kernel(xc_ref, xl_ref, xr_ref, w1_ref, b1_ref, dwb_ref, w2_ref, o_ref):
    j = pl.program_id(0)                 # time-tile index (leading grid axis)
    n_t = pl.num_programs(0)

    xl = xl_ref[0]                       # [HB, E] left halo block (clamped at edges)
    xc = xc_ref[0]                       # [TT, E] centre tile
    xr = xr_ref[0]                       # [HB, E] right halo block (clamped at edges)
    HB = xl.shape[0]
    TT = xc.shape[0]
    Kp1, C = dwb_ref.shape
    K = Kp1 - 1
    pad = (K - 1) // 2

    # ---- LayerNorm per block (row-local), then concat the bf16 results ----
    xh16 = jnp.concatenate(
        [_layernorm_bf16(xl), _layernorm_bf16(xc), _layernorm_bf16(xr)], axis=0)
    L = xh16.shape[0]                    # TT + 2*HB

    # ---- fused pointwise conv1 + GLU: single [L,E]@[E,2C] bf16 MXU matmul ----
    y = jnp.dot(xh16, w1_ref[...], preferred_element_type=jnp.float32) + b1_ref[0]
    g = y[:, :C] * jax.nn.sigmoid(y[:, C:])        # lane-aligned halves, [L, C] f32

    # Zero halo rows that fall outside the sequence ('same' zero padding of the
    # depthwise conv).  Row l of the block maps to original time j*TT + l - HB.
    row = jax.lax.broadcasted_iota(jnp.int32, (L, 1), 0)
    valid = jnp.logical_and(
        jnp.logical_or(row >= HB, j > 0),              # left edge of the sequence
        jnp.logical_or(row < HB + TT, j < n_t - 1))    # right edge of the sequence
    g = jnp.where(valid, g, 0.0)

    # ---- depthwise conv (BN scale folded): K taps = XLU rolls + aligned slice ----
    dwb = dwb_ref[...]                   # [K+1, C]: rows 0..K-1 taps, row K = BN bias
    acc = jnp.zeros((TT, C), jnp.float32)
    for k in range(K):                   # K is static -> unrolled
        shifted = g if k == pad else pltpu.roll(g, shift=(pad - k) % L, axis=0)
        acc = acc + shifted[HB:HB + TT, :] * dwb[k, :]

    # ---- BatchNorm (eval) folded to a per-channel bias; SiLU ----
    h = acc + dwb[K, :]
    h = h * jax.nn.sigmoid(h)

    # ---- pointwise conv2 (bf16 MXU matmul, f32 acc) ----
    out = jnp.dot(h.astype(jnp.bfloat16), w2_ref[...],
                  preferred_element_type=jnp.float32)

    # Dropout is identity in eval mode.
    o_ref[0] = out.astype(o_ref.dtype)


def convolution_module(x, ln_w, ln_b, w1, dw, bn_w, bn_b, bn_rm, bn_rv, w2,
                       *, tile_t=None):
    """Eval-mode ConvolutionModule forward.

    x:         [B, T, E]
    ln_w/ln_b: [E]        LayerNorm affine
    w1:        [2C, E]    pointwise_conv1 weight (kernel dim squeezed), no bias
    dw:        [C, K]     depthwise_conv weight (groups=C), no bias
    bn_*:      [C]        BatchNorm1d eval params / running stats
    w2:        [E, C]     pointwise_conv2 weight, no bias
    tile_t:    time tile; None -> per-generation default, budgeted against VMEM.
    """
    B, T, E = x.shape
    C2, E_w1 = w1.shape
    C = C2 // 2
    C_dw, K = dw.shape
    assert E_w1 == E and C_dw == C
    assert (K - 1) % 2 == 0, "depthwise kernel size must be odd for 'SAME' padding"
    pad = (K - 1) // 2

    itemsize = jnp.dtype(x.dtype).itemsize
    pack_in = max(8, 32 // itemsize)      # sublane packing: 8 f32, 16 bf16, 32 int8
    align = max(pack_in, 16)              # keep the in-kernel bf16 concat seams aligned
    HB = ((max(pad, align) + align - 1) // align) * align
    assert T % HB == 0, "T must be a multiple of the halo block size (pad the sequence)"

    # ---- per-generation tile / scoped-VMEM selection ----
    try:
        vmem_cap = pltpu.get_tpu_info().vmem_capacity_bytes
    except Exception:
        vmem_cap = 64 * 1024 * 1024       # conservative (v7x-sized) fallback
    if tile_t is None:
        tile_t = 1024 if vmem_cap >= 96 * 1024 * 1024 else 512   # v5e/v6e vs v7x
    vmem_limit = int(min(vmem_cap * 3 // 4, 96 * 1024 * 1024))

    tile_t = max(HB, min(tile_t, T))
    tile_t = (tile_t // HB) * HB
    while T % tile_t != 0:
        tile_t -= HB

    def _vmem_budget(tt):
        # double-buffered centre in/out + halo streams, single-buffered weights,
        # in-kernel temporaries (xh16, y, g/shifted/acc, h, out).
        L = tt + 2 * HB
        io = 4 * tt * E * itemsize + 8 * HB * E * itemsize
        wts = (E * 2 * C + C * E) * 2 + ((K + 1) * C + 2 * C) * 4
        tmp = (L * E * (itemsize + 2) + L * 2 * C * 4 + 3 * L * C * 4
               + 2 * tt * C * 4 + tt * E * 4)
        return io + wts + tmp

    while tile_t > HB and _vmem_budget(tile_t) > vmem_limit - (8 << 20):
        nxt = tile_t - HB
        while T % nxt != 0:
            nxt -= HB
        tile_t = nxt

    n_t = T // tile_t
    nb = tile_t // HB                     # halo blocks per tile
    n_hb = T // HB                        # total halo blocks along T

    # ---- host-side folding of LayerNorm affine / BatchNorm into the weights ----
    w1t = jnp.transpose(w1)                                       # [E, 2C]
    b1 = (ln_b @ w1t).reshape(1, 2 * C).astype(jnp.float32)       # fused GLU bias
    w1f = (ln_w[:, None] * w1t).astype(jnp.bfloat16)              # fused GLU weight [E, 2C]
    bn_scale = bn_w * jax.lax.rsqrt(bn_rv + BN_EPS)
    bn_bias = (bn_b - bn_rm * bn_scale).reshape(1, C)
    dwb = jnp.concatenate([jnp.transpose(dw) * bn_scale[None, :], bn_bias],
                          axis=0).astype(jnp.float32)             # [K+1, C]
    w2t = jnp.transpose(w2).astype(jnp.bfloat16)                  # [C, E]

    flops = 2 * B * T * E * (2 * C) + 2 * B * T * C * E + 2 * B * T * C * K
    transcendentals = 2 * B * T * C                 # GLU sigmoid + SiLU
    bytes_accessed = (itemsize * B * (T + 2 * HB * n_t) * E       # x reads (incl. halos)
                      + itemsize * B * T * E                       # output writes
                      + 2 * (E * 2 * C + C * E)                    # bf16 matmul weights
                      + 4 * ((K + 1) * C + 2 * C))                 # small f32 params
    cost = pl.CostEstimate(flops=flops, transcendentals=transcendentals,
                           bytes_accessed=bytes_accessed)

    def build(weight_mode):
        const = lambda shape: pl.BlockSpec(shape, lambda j, b: (0, 0),
                                           pipeline_mode=weight_mode)
        grid_spec = pltpu.PrefetchScalarGridSpec(
            num_scalar_prefetch=0,
            grid=(n_t, B),            # time leads -> even 2-TC split on v7x even at B=1
            in_specs=[
                # centre tile of x
                pl.BlockSpec((1, tile_t, E), lambda j, b: (b, j, 0)),
                # left / right halo blocks (clamped at the sequence edges; the kernel
                # masks the out-of-range rows, so the clamped fetch is harmless)
                pl.BlockSpec((1, HB, E),
                             lambda j, b: (b, jnp.maximum(j * nb - 1, 0), 0)),
                pl.BlockSpec((1, HB, E),
                             lambda j, b: (b, jnp.minimum((j + 1) * nb, n_hb - 1), 0)),
                const((E, 2 * C)),    # fused conv1/GLU weight (bf16, LN scale folded)
                const((1, 2 * C)),    # fused conv1/GLU bias (f32, LN bias folded)
                const((K + 1, C)),    # depthwise taps (BN scale folded) + BN bias row
                const((C, E)),        # conv2 weight (bf16)
            ],
            out_specs=pl.BlockSpec((1, tile_t, E), lambda j, b: (b, j, 0)),
        )
        return pl.pallas_call(
            _conv_module_kernel,
            out_shape=jax.ShapeDtypeStruct((B, T, E), x.dtype),
            grid_spec=grid_spec,
            compiler_params=pltpu.CompilerParams(
                dimension_semantics=("parallel", "parallel"),
                vmem_limit_bytes=vmem_limit),
            cost_estimate=cost,
        )

    args = (x, x, x, w1f, b1, dwb, w2t)
    try:
        # Constant-index weight streams single-buffered: their block index never
        # changes, so double-buffering only wastes VMEM (matters most on v7x).
        return build(pl.Buffered(1))(*args)
    except Exception:
        # Fallback for JAX builds that reject per-spec buffer counts.
        return build(None)(*args)


def reference(x, ln_w, ln_b, w1, dw, bn_w, bn_b, bn_rm, bn_rv, w2):
    """Plain-JAX f32 reference mirroring the PyTorch forward (eval mode)."""
    C, K = dw.shape
    T = x.shape[1]
    mu = jnp.mean(x, -1, keepdims=True)
    var = jnp.mean((x - mu) ** 2, -1, keepdims=True)
    xn = (x - mu) / jnp.sqrt(var + LN_EPS) * ln_w + ln_b
    y = jnp.einsum("bte,ce->btc", xn, w1)
    a, b = y[..., :C], y[..., C:]
    g = a * jax.nn.sigmoid(b)
    pad = (K - 1) // 2
    gp = jnp.pad(g, ((0, 0), (pad, pad), (0, 0)))
    acc = sum(gp[:, k:k + T, :] * dw[None, None, :, k] for k in range(K))
    h = (acc - bn_rm) / jnp.sqrt(bn_rv + BN_EPS) * bn_w + bn_b
    h = h * jax.nn.sigmoid(h)
    return jnp.einsum("btc,ec->bte", h, w2)


if __name__ == "__main__":
    # Small but lane/sublane-aligned shapes (E, C multiples of 128; T multiple of HB).
    B, T, E, C, K = 2, 256, 128, 128, 5

    key = jax.random.PRNGKey(0)
    ks = jax.random.split(key, 10)

    x = jax.random.normal(ks[0], (B, T, E), jnp.float32)

    ln_w = 1.0 + 0.1 * jax.random.normal(ks[1], (E,), jnp.float32)
    ln_b = 0.1 * jax.random.normal(ks[2], (E,), jnp.float32)
    w1 = 0.1 * jax.random.normal(ks[3], (2 * C, E), jnp.float32)     # conv1 [2C,E,1]
    dw = 0.2 * jax.random.normal(ks[4], (C, K), jnp.float32)         # depthwise [C,1,K]
    bn_w = 1.0 + 0.1 * jax.random.normal(ks[5], (C,), jnp.float32)
    bn_b = 0.1 * jax.random.normal(ks[6], (C,), jnp.float32)
    bn_rm = 0.1 * jax.random.normal(ks[7], (C,), jnp.float32)
    bn_rv = 0.5 + jnp.abs(jax.random.normal(ks[8], (C,), jnp.float32))
    w2 = 0.1 * jax.random.normal(ks[9], (E, C), jnp.float32)         # conv2 [E,C,1]

    # tile_t=128 forces n_t=2 so the halo / masking path is exercised at small T.
    out = convolution_module(x, ln_w, ln_b, w1, dw, bn_w, bn_b, bn_rm, bn_rv, w2,
                             tile_t=128)
    out = jax.block_until_ready(out)

    ref = reference(x, ln_w, ln_b, w1, dw, bn_w, bn_b, bn_rm, bn_rv, w2)
    assert out.shape == (B, T, E)
    max_err = float(jnp.max(jnp.abs(out - ref)))
    rel_err = float(jnp.linalg.norm(out - ref) / (jnp.linalg.norm(ref) + 1e-12))
    # bf16 MXU operands with f32 accumulation -> loose absolute / tight relative check.
    assert max_err < 6e-2 and rel_err < 3e-2, (max_err, rel_err)

    print("KERNEL_OK")
</pallas_src>

<mosaic_0001>
module attributes {stable_mosaic.version = 11 : i64} {
  func.func @_conv_module_kernel(%arg0: i32, %arg1: i32, %arg2: memref<1x128x128xf32, #tpu.memory_space<vmem>>, %arg3: memref<1x16x128xf32, #tpu.memory_space<vmem>>, %arg4: memref<1x16x128xf32, #tpu.memory_space<vmem>>, %arg5: memref<128x256xbf16, #tpu.memory_space<vmem>>, %arg6: memref<1x256xf32, #tpu.memory_space<vmem>>, %arg7: memref<6x128xf32, #tpu.memory_space<vmem>>, %arg8: memref<128x128xbf16, #tpu.memory_space<vmem>>, %arg9: memref<1x128x128xf32, #tpu.memory_space<vmem>>) attributes {dimension_semantics = [#tpu.dimension_semantics<parallel>, #tpu.dimension_semantics<parallel>], iteration_bounds = array<i64: 2, 2>, scalar_prefetch = 0 : i64, scratch_operands = 0 : i64, tpu.core_type = #tpu.core_type<tc>, window_params = [{transform_indices = @transform_0, window_bounds = array<i64: 1, 128, 128>}, {transform_indices = @transform_1, window_bounds = array<i64: 1, 16, 128>}, {transform_indices = @transform_2, window_bounds = array<i64: 1, 16, 128>}, {pipeline_mode = #tpu.pipeline_mode<synchronous>, transform_indices = @transform_3, window_bounds = array<i64: 128, 256>}, {pipeline_mode = #tpu.pipeline_mode<synchronous>, transform_indices = @transform_4, window_bounds = array<i64: 1, 256>}, {pipeline_mode = #tpu.pipeline_mode<synchronous>, transform_indices = @transform_5, window_bounds = array<i64: 6, 128>}, {pipeline_mode = #tpu.pipeline_mode<synchronous>, transform_indices = @transform_6, window_bounds = array<i64: 128, 128>}, {transform_indices = @transform_7, window_bounds = array<i64: 1, 128, 128>}]} {
    %c0 = arith.constant 0 : index
    %c0_0 = arith.constant 0 : index
    %c0_1 = arith.constant 0 : index
    %0 = vector.load %arg3[%c0, %c0_0, %c0_1] : memref<1x16x128xf32, #tpu.memory_space<vmem>>, vector<1x16x128xf32>
    %1 = vector.shape_cast %0 : vector<1x16x128xf32> to vector<16x128xf32>
    %c0_2 = arith.constant 0 : index
    %c0_3 = arith.constant 0 : index
    %c0_4 = arith.constant 0 : index
    %2 = vector.load %arg2[%c0_2, %c0_3, %c0_4] : memref<1x128x128xf32, #tpu.memory_space<vmem>>, vector<1x128x128xf32>
    %3 = vector.shape_cast %2 : vector<1x128x128xf32> to vector<128x128xf32>
    %c0_5 = arith.constant 0 : index
    %c0_6 = arith.constant 0 : index
    %c0_7 = arith.constant 0 : index
    %4 = vector.load %arg4[%c0_5, %c0_6, %c0_7] : memref<1x16x128xf32, #tpu.memory_space<vmem>>, vector<1x16x128xf32>
    %5 = vector.shape_cast %4 : vector<1x16x128xf32> to vector<16x128xf32>
    %cst = arith.constant dense<0.000000e+00> : vector<16xf32>
    %6 = vector.multi_reduction <add>, %1, %cst [1] : vector<16x128xf32> to vector<16xf32>
    %7 = vector.shape_cast %6 : vector<16xf32> to vector<16x1xf32>
    %8 = arith.mulf %1, %1 : vector<16x128xf32>
    %cst_8 = arith.constant dense<0.000000e+00> : vector<16xf32>
    %9 = vector.multi_reduction <add>, %8, %cst_8 [1] : vector<16x128xf32> to vector<16xf32>
    %10 = vector.shape_cast %9 : vector<16xf32> to vector<16x1xf32>
    %cst_9 = arith.constant 7.812500e-03 : f32
    %11 = vector.broadcast %cst_9 : f32 to vector<16x1xf32>
    %12 = arith.mulf %7, %11 : vector<16x1xf32>
    %cst_10 = arith.constant 7.812500e-03 : f32
    %13 = vector.broadcast %cst_10 : f32 to vector<16x1xf32>
    %14 = arith.mulf %10, %13 : vector<16x1xf32>
    %15 = arith.mulf %12, %12 : vector<16x1xf32>
    %16 = arith.subf %14, %15 : vector<16x1xf32>
    %17 = vector.broadcast %12 : vector<16x1xf32> to vector<16x128xf32>
    %18 = arith.subf %1, %17 : vector<16x128xf32>
    %cst_11 = arith.constant 9.99999974E-6 : f32
    %19 = vector.broadcast %cst_11 : f32 to vector<16x1xf32>
    %20 = arith.addf %16, %19 : vector<16x1xf32>
    %21 = math.rsqrt %20 : vector<16x1xf32>
    %22 = vector.broadcast %21 : vector<16x1xf32> to vector<16x128xf32>
    %23 = arith.mulf %18, %22 : vector<16x128xf32>
    %24 = arith.truncf %23 : vector<16x128xf32> to vector<16x128xbf16>
    %cst_12 = arith.constant dense<0.000000e+00> : vector<128xf32>
    %25 = vector.multi_reduction <add>, %3, %cst_12 [1] : vector<128x128xf32> to vector<128xf32>
    %26 = vector.shape_cast %25 : vector<128xf32> to vector<128x1xf32>
    %27 = arith.mulf %3, %3 : vector<128x128xf32>
    %cst_13 = arith.constant dense<0.000000e+00> : vector<128xf32>
    %28 = vector.multi_reduction <add>, %27, %cst_13 [1] : vector<128x128xf32> to vector<128xf32>
    %29 = vector.shape_cast %28 : vector<128xf32> to vector<128x1xf32>
    %cst_14 = arith.constant 7.812500e-03 : f32
    %30 = vector.broadcast %cst_14 : f32 to vector<128x1xf32>
    %31 = arith.mulf %26, %30 : vector<128x1xf32>
    %cst_15 = arith.constant 7.812500e-03 : f32
    %32 = vector.broadcast %cst_15 : f32 to vector<128x1xf32>
    %33 = arith.mulf %29, %32 : vector<128x1xf32>
    %34 = arith.mulf %31, %31 : vector<128x1xf32>
    %35 = arith.subf %33, %34 : vector<128x1xf32>
    %36 = vector.broadcast %31 : vector<128x1xf32> to vector<128x128xf32>
    %37 = arith.subf %3, %36 : vector<128x128xf32>
    %cst_16 = arith.constant 9.99999974E-6 : f32
    %38 = vector.broadcast %cst_16 : f32 to vector<128x1xf32>
    %39 = arith.addf %35, %38 : vector<128x1xf32>
    %40 = math.rsqrt %39 : vector<128x1xf32>
    %41 = vector.broadcast %40 : vector<128x1xf32> to vector<128x128xf32>
    %42 = arith.mulf %37, %41 : vector<128x128xf32>
    %43 = arith.truncf %42 : vector<128x128xf32> to vector<128x128xbf16>
    %cst_17 = arith.constant dense<0.000000e+00> : vector<16xf32>
    %44 = vector.multi_reduction <add>, %5, %cst_17 [1] : vector<16x128xf32> to vector<16xf32>
    %45 = vector.shape_cast %44 : vector<16xf32> to vector<16x1xf32>
    %46 = arith.mulf %5, %5 : vector<16x128xf32>
    %cst_18 = arith.constant dense<0.000000e+00> : vector<16xf32>
    %47 = vector.multi_reduction <add>, %46, %cst_18 [1] : vector<16x128xf32> to vector<16xf32>
    %48 = vector.shape_cast %47 : vector<16xf32> to vector<16x1xf32>
    %cst_19 = arith.constant 7.812500e-03 : f32
    %49 = vector.broadcast %cst_19 : f32 to vector<16x1xf32>
    %50 = arith.mulf %45, %49 : vector<16x1xf32>
    %cst_20 = arith.constant 7.812500e-03 : f32
    %51 = vector.broadcast %cst_20 : f32 to vector<16x1xf32>
    %52 = arith.mulf %48, %51 : vector<16x1xf32>
    %53 = arith.mulf %50, %50 : vector<16x1xf32>
    %54 = arith.subf %52, %53 : vector<16x1xf32>
    %55 = vector.broadcast %50 : vector<16x1xf32> to vector<16x128xf32>
    %56 = arith.subf %5, %55 : vector<16x128xf32>
    %cst_21 = arith.constant 9.99999974E-6 : f32
    %57 = vector.broadcast %cst_21 : f32 to vector<16x1xf32>
    %58 = arith.addf %54, %57 : vector<16x1xf32>
    %59 = math.rsqrt %58 : vector<16x1xf32>
    %60 = vector.broadcast %59 : vector<16x1xf32> to vector<16x128xf32>
    %61 = arith.mulf %56, %60 : vector<16x128xf32>
    %62 = arith.truncf %61 : vector<16x128xf32> to vector<16x128xbf16>
    %63 = tpu.concatenate %24, %43, %62 in 0 : vector<16x128xbf16>, vector<128x128xbf16>, vector<16x128xbf16> -> vector<160x128xbf16>
    %c0_22 = arith.constant 0 : index
    %c0_23 = arith.constant 0 : index
    %64 = vector.load %arg5[%c0_22, %c0_23] : memref<128x256xbf16, #tpu.memory_space<vmem>>, vector<128x256xbf16>
    %cst_24 = arith.constant dense<0.000000e+00> : vector<160x256xf32>
    %65 = tpu.matmul %63, %64, %cst_24 {dimension_numbers = #tpu.dot_dimension_numbers<[1], [0], [0], [1], [0, 0, 1, 1], [], []>} : vector<160x128xbf16>, vector<128x256xbf16>, vector<160x256xf32> -> vector<160x256xf32>
    %c0_25 = arith.constant 0 : index
    %c0_26 = arith.constant 0 : index
    %66 = vector.load %arg6[%c0_25, %c0_26] : memref<1x256xf32, #tpu.memory_space<vmem>>, vector<1x256xf32>
    %67 = vector.shape_cast %66 : vector<1x256xf32> to vector<256xf32>
    %68 = vector.shape_cast %67 : vector<256xf32> to vector<1x256xf32>
    %69 = vector.broadcast %68 : vector<1x256xf32> to vector<160x256xf32>
    %70 = arith.addf %65, %69 : vector<160x256xf32>
    %71 = vector.extract_strided_slice %70 {offsets = [0, 0], sizes = [160, 128], strides = [1, 1]} : vector<160x256xf32> to vector<160x128xf32>
    %72 = vector.extract_strided_slice %70 {offsets = [0, 128], sizes = [160, 128], strides = [1, 1]} : vector<160x256xf32> to vector<160x128xf32>
    %73 = arith.negf %72 : vector<160x128xf32>
    %74 = math.exp %73 : vector<160x128xf32>
    %cst_27 = arith.constant 1.000000e+00 : f32
    %75 = vector.broadcast %cst_27 : f32 to vector<160x128xf32>
    %76 = arith.addf %75, %74 : vector<160x128xf32>
    %77 = arith.divf %75, %76 : vector<160x128xf32>
    %78 = arith.mulf %71, %77 : vector<160x128xf32>
    %79 = tpu.iota {dimensions = array<i32: 0>} : vector<160x1xi32>
    %c16_i32 = arith.constant 16 : i32
    %80 = vector.broadcast %c16_i32 : i32 to vector<160x1xi32>
    %81 = arith.cmpi sge, %79, %80 : vector<160x1xi32>
    %c0_i32 = arith.constant 0 : i32
    %82 = arith.cmpi sgt, %arg0, %c0_i32 : i32
    %83 = vector.broadcast %82 : i1 to vector<160x1xi1>
    %84 = arith.ori %81, %83 : vector<160x1xi1>
    %c144_i32 = arith.constant 144 : i32
    %85 = vector.broadcast %c144_i32 : i32 to vector<160x1xi32>
    %86 = arith.cmpi slt, %79, %85 : vector<160x1xi32>
    %c1_i32 = arith.constant 1 : i32
    %87 = arith.cmpi slt, %arg0, %c1_i32 : i32
    %88 = vector.broadcast %87 : i1 to vector<160x1xi1>
    %89 = arith.ori %86, %88 : vector<160x1xi1>
    %90 = arith.andi %84, %89 : vector<160x1xi1>
    %cst_28 = arith.constant 0.000000e+00 : f32
    %91 = vector.shape_cast %90 : vector<160x1xi1> to vector<160x1xi1>
    %92 = vector.broadcast %91 : vector<160x1xi1> to vector<160x128xi1>
    %93 = vector.broadcast %cst_28 : f32 to vector<160x128xf32>
    %94 = arith.select %92, %78, %93 : vector<160x128xi1>, vector<160x128xf32>
    %c0_29 = arith.constant 0 : index
    %c0_30 = arith.constant 0 : index
    %95 = vector.load %arg7[%c0_29, %c0_30] : memref<6x128xf32, #tpu.memory_space<vmem>>, vector<6x128xf32>
    %cst_31 = arith.constant 0.000000e+00 : f32
    %96 = vector.broadcast %cst_31 : f32 to vector<128x128xf32>
    %c2_i32 = arith.constant 2 : i32
    %97 = tpu.dynamic_rotate %94 by %c2_i32 dim 0 : vector<160x128xf32>, i32 -> vector<160x128xf32>
    %98 = vector.extract_strided_slice %97 {offsets = [16, 0], sizes = [128, 128], strides = [1, 1]} : vector<160x128xf32> to vector<128x128xf32>
    %99 = vector.extract_strided_slice %95 {offsets = [0, 0], sizes = [1, 128], strides = [1, 1]} : vector<6x128xf32> to vector<1x128xf32>
    %100 = vector.shape_cast %99 : vector<1x128xf32> to vector<128xf32>
    %101 = vector.shape_cast %100 : vector<128xf32> to vector<1x128xf32>
    %102 = vector.broadcast %101 : vector<1x128xf32> to vector<128x128xf32>
    %103 = arith.mulf %98, %102 : vector<128x128xf32>
    %104 = arith.addf %96, %103 : vector<128x128xf32>
    %c1_i32_32 = arith.constant 1 : i32
    %105 = tpu.dynamic_rotate %94 by %c1_i32_32 dim 0 : vector<160x128xf32>, i32 -> vector<160x128xf32>
    %106 = vector.extract_strided_slice %105 {offsets = [16, 0], sizes = [128, 128], strides = [1, 1]} : vector<160x128xf32> to vector<128x128xf32>
    %107 = vector.extract_strided_slice %95 {offsets = [1, 0], sizes = [1, 128], strides = [1, 1]} : vector<6x128xf32> to vector<1x128xf32>
    %108 = vector.shape_cast %107 : vector<1x128xf32> to vector<128xf32>
    %109 = vector.shape_cast %108 : vector<128xf32> to vector<1x128xf32>
    %110 = vector.broadcast %109 : vector<1x128xf32> to vector<128x128xf32>
    %111 = arith.mulf %106, %110 : vector<128x128xf32>
    %112 = arith.addf %104, %111 : vector<128x128xf32>
    %113 = vector.extract_strided_slice %94 {offsets = [16, 0], sizes = [128, 128], strides = [1, 1]} : vector<160x128xf32> to vector<128x128xf32>
    %114 = vector.extract_strided_slice %95 {offsets = [2, 0], sizes = [1, 128], strides = [1, 1]} : vector<6x128xf32> to vector<1x128xf32>
    %115 = vector.shape_cast %114 : vector<1x128xf32> to vector<128xf32>
    %116 = vector.shape_cast %115 : vector<128xf32> to vector<1x128xf32>
    %117 = vector.broadcast %116 : vector<1x128xf32> to vector<128x128xf32>
    %118 = arith.mulf %113, %117 : vector<128x128xf32>
    %119 = arith.addf %112, %118 : vector<128x128xf32>
    %c159_i32 = arith.constant 159 : i32
    %120 = tpu.dynamic_rotate %94 by %c159_i32 dim 0 : vector<160x128xf32>, i32 -> vector<160x128xf32>
    %121 = vector.extract_strided_slice %120 {offsets = [16, 0], sizes = [128, 128], strides = [1, 1]} : vector<160x128xf32> to vector<128x128xf32>
    %122 = vector.extract_strided_slice %95 {offsets = [3, 0], sizes = [1, 128], strides = [1, 1]} : vector<6x128xf32> to vector<1x128xf32>
    %123 = vector.shape_cast %122 : vector<1x128xf32> to vector<128xf32>
    %124 = vector.shape_cast %123 : vector<128xf32> to vector<1x128xf32>
    %125 = vector.broadcast %124 : vector<1x128xf32> to vector<128x128xf32>
    %126 = arith.mulf %121, %125 : vector<128x128xf32>
    %127 = arith.addf %119, %126 : vector<128x128xf32>
    %c158_i32 = arith.constant 158 : i32
    %128 = tpu.dynamic_rotate %94 by %c158_i32 dim 0 : vector<160x128xf32>, i32 -> vector<160x128xf32>
    %129 = vector.extract_strided_slice %128 {offsets = [16, 0], sizes = [128, 128], strides = [1, 1]} : vector<160x128xf32> to vector<128x128xf32>
    %130 = vector.extract_strided_slice %95 {offsets = [4, 0], sizes = [1, 128], strides = [1, 1]} : vector<6x128xf32> to vector<1x128xf32>
    %131 = vector.shape_cast %130 : vector<1x128xf32> to vector<128xf32>
    %132 = vector.shape_cast %131 : vector<128xf32> to vector<1x128xf32>
    %133 = vector.broadcast %132 : vector<1x128xf32> to vector<128x128xf32>
    %134 = arith.mulf %129, %133 : vector<128x128xf32>
    %135 = arith.addf %127, %134 : vector<128x128xf32>
    %136 = vector.extract_strided_slice %95 {offsets = [5, 0], sizes = [1, 128], strides = [1, 1]} : vector<6x128xf32> to vector<1x128xf32>
    %137 = vector.shape_cast %136 : vector<1x128xf32> to vector<128xf32>
    %138 = vector.shape_cast %137 : vector<128xf32> to vector<1x128xf32>
    %139 = vector.broadcast %138 : vector<1x128xf32> to vector<128x128xf32>
    %140 = arith.addf %135, %139 : vector<128x128xf32>
    %141 = arith.negf %140 : vector<128x128xf32>
    %142 = math.exp %141 : vector<128x128xf32>
    %cst_33 = arith.constant 1.000000e+00 : f32
    %143 = vector.broadcast %cst_33 : f32 to vector<128x128xf32>
    %144 = arith.addf %143, %142 : vector<128x128xf32>
    %145 = arith.divf %143, %144 : vector<128x128xf32>
    %146 = arith.mulf %140, %145 : vector<128x128xf32>
    %147 = arith.truncf %146 : vector<128x128xf32> to vector<128x128xbf16>
    %c0_34 = arith.constant 0 : index
    %c0_35 = arith.constant 0 : index
    %148 = vector.load %arg8[%c0_34, %c0_35] : memref<128x128xbf16, #tpu.memory_space<vmem>>, vector<128x128xbf16>
    %cst_36 = arith.constant dense<0.000000e+00> : vector<128x128xf32>
    %149 = tpu.matmul %147, %148, %cst_36 {dimension_numbers = #tpu.dot_dimension_numbers<[1], [0], [0], [1], [0, 0, 1, 1], [], []>} : vector<128x128xbf16>, vector<128x128xbf16>, vector<128x128xf32> -> vector<128x128xf32>
    %c0_37 = arith.constant 0 : index
    %c0_38 = arith.constant 0 : index
    %c0_39 = arith.constant 0 : index
    %150 = vector.load %arg9[%c0_37, %c0_38, %c0_39] : memref<1x128x128xf32, #tpu.memory_space<vmem>>, vector<1x128x128xf32>
    %151 = vector.shape_cast %150 : vector<1x128x128xf32> to vector<128x128xf32>
    %152 = vector.shape_cast %149 : vector<128x128xf32> to vector<1x128x128xf32>
    tpu.vector_store %arg9[%c0_37, %c0_38, %c0_39], %152 {strides = array<i32>} : memref<1x128x128xf32, #tpu.memory_space<vmem>>, vector<1x128x128xf32>,
    return
  }
  func.func @transform_0(%arg0: i32, %arg1: i32) -> (i32, i32, i32) {
    %c0_i32 = arith.constant 0 : i32
    %c0_i32_0 = arith.constant 0 : i32
    return %arg1, %arg0, %c0_i32 : i32, i32, i32
  }
  func.func @transform_1(%arg0: i32, %arg1: i32) -> (i32, i32, i32) {
    %c8_i32 = arith.constant 8 : i32
    %0 = arith.muli %arg0, %c8_i32 : i32
    %c1_i32 = arith.constant 1 : i32
    %1 = arith.subi %0, %c1_i32 : i32
    %c0_i32 = arith.constant 0 : i32
    %2 = arith.maxsi %1, %c0_i32 : i32
    %c0_i32_0 = arith.constant 0 : i32
    %c0_i32_1 = arith.constant 0 : i32
    return %arg1, %2, %c0_i32_0 : i32, i32, i32
  }
  func.func @transform_2(%arg0: i32, %arg1: i32) -> (i32, i32, i32) {
    %c1_i32 = arith.constant 1 : i32
    %0 = arith.addi %arg0, %c1_i32 : i32
    %c8_i32 = arith.constant 8 : i32
    %1 = arith.muli %0, %c8_i32 : i32
    %c15_i32 = arith.constant 15 : i32
    %2 = arith.minsi %1, %c15_i32 : i32
    %c0_i32 = arith.constant 0 : i32
    %c0_i32_0 = arith.constant 0 : i32
    return %arg1, %2, %c0_i32 : i32, i32, i32
  }
  func.func @transform_3(%arg0: i32, %arg1: i32) -> (i32, i32) {
    %c0_i32 = arith.constant 0 : i32
    %c0_i32_0 = arith.constant 0 : i32
    %c0_i32_1 = arith.constant 0 : i32
    return %c0_i32, %c0_i32_0 : i32, i32
  }
  func.func @transform_4(%arg0: i32, %arg1: i32) -> (i32, i32) {
    %c0_i32 = arith.constant 0 : i32
    %c0_i32_0 = arith.constant 0 : i32
    %c0_i32_1 = arith.constant 0 : i32
    return %c0_i32, %c0_i32_0 : i32, i32
  }
  func.func @transform_5(%arg0: i32, %arg1: i32) -> (i32, i32) {
    %c0_i32 = arith.constant 0 : i32
    %c0_i32_0 = arith.constant 0 : i32
    %c0_i32_1 = arith.constant 0 : i32
    return %c0_i32, %c0_i32_0 : i32, i32
  }
  func.func @transform_6(%arg0: i32, %arg1: i32) -> (i32, i32) {
    %c0_i32 = arith.constant 0 : i32
    %c0_i32_0 = arith.constant 0 : i32
    %c0_i32_1 = arith.constant 0 : i32
    return %c0_i32, %c0_i32_0 : i32, i32
  }
  func.func @transform_7(%arg0: i32, %arg1: i32) -> (i32, i32, i32) {
    %c0_i32 = arith.constant 0 : i32
    %c0_i32_0 = arith.constant 0 : i32
    return %arg1, %arg0, %c0_i32 : i32, i32, i32
  }
}

module attributes {stable_mosaic.version = 11 : i64} {
  func.func @_conv_module_kernel(%arg0: i32, %arg1: i32, %arg2: memref<1x128x128xf32, #tpu.memory_space<vmem>>, %arg3: memref<1x16x128xf32, #tpu.memory_space<vmem>>, %arg4: memref<1x16x128xf32, #tpu.memory_space<vmem>>, %arg5: memref<128x256xbf16, #tpu.memory_space<vmem>>, %arg6: memref<1x256xf32, #tpu.memory_space<vmem>>, %arg7: memref<6x128xf32, #tpu.memory_space<vmem>>, %arg8: memref<128x128xbf16, #tpu.memory_space<vmem>>, %arg9: memref<1x128x128xf32, #tpu.memory_space<vmem>>) attributes {dimension_semantics = [#tpu.dimension_semantics<parallel>, #tpu.dimension_semantics<parallel>], iteration_bounds = array<i64: 2, 2>, scalar_prefetch = 0 : i64, scratch_operands = 0 : i64, tpu.core_type = #tpu.core_type<tc>, window_params = [{transform_indices = @transform_0, window_bounds = array<i64: 1, 128, 128>}, {transform_indices = @transform_1, window_bounds = array<i64: 1, 16, 128>}, {transform_indices = @transform_2, window_bounds = array<i64: 1, 16, 128>}, {pipeline_mode = #tpu.pipeline_mode<synchronous>, transform_indices = @transform_3, window_bounds = array<i64: 128, 256>}, {pipeline_mode = #tpu.pipeline_mode<synchronous>, transform_indices = @transform_4, window_bounds = array<i64: 1, 256>}, {pipeline_mode = #tpu.pipeline_mode<synchronous>, transform_indices = @transform_5, window_bounds = array<i64: 6, 128>}, {pipeline_mode = #tpu.pipeline_mode<synchronous>, transform_indices = @transform_6, window_bounds = array<i64: 128, 128>}, {transform_indices = @transform_7, window_bounds = array<i64: 1, 128, 128>}]} {
    %c0 = arith.constant 0 : index
    %c0_0 = arith.constant 0 : index
    %c0_1 = arith.constant 0 : index
    %0 = vector.load %arg3[%c0, %c0_0, %c0_1] : memref<1x16x128xf32, #tpu.memory_space<vmem>>, vector<1x16x128xf32>
    %1 = vector.shape_cast %0 : vector<1x16x128xf32> to vector<16x128xf32>
    %c0_2 = arith.constant 0 : index
    %c0_3 = arith.constant 0 : index
    %c0_4 = arith.constant 0 : index
    %2 = vector.load %arg2[%c0_2, %c0_3, %c0_4] : memref<1x128x128xf32, #tpu.memory_space<vmem>>, vector<1x128x128xf32>
    %3 = vector.shape_cast %2 : vector<1x128x128xf32> to vector<128x128xf32>
    %c0_5 = arith.constant 0 : index
    %c0_6 = arith.constant 0 : index
    %c0_7 = arith.constant 0 : index
    %4 = vector.load %arg4[%c0_5, %c0_6, %c0_7] : memref<1x16x128xf32, #tpu.memory_space<vmem>>, vector<1x16x128xf32>
    %5 = vector.shape_cast %4 : vector<1x16x128xf32> to vector<16x128xf32>
    %cst = arith.constant dense<0.000000e+00> : vector<16xf32>
    %6 = vector.multi_reduction <add>, %1, %cst [1] : vector<16x128xf32> to vector<16xf32>
    %7 = vector.shape_cast %6 : vector<16xf32> to vector<16x1xf32>
    %8 = arith.mulf %1, %1 : vector<16x128xf32>
    %cst_8 = arith.constant dense<0.000000e+00> : vector<16xf32>
    %9 = vector.multi_reduction <add>, %8, %cst_8 [1] : vector<16x128xf32> to vector<16xf32>
    %10 = vector.shape_cast %9 : vector<16xf32> to vector<16x1xf32>
    %cst_9 = arith.constant 7.812500e-03 : f32
    %11 = vector.broadcast %cst_9 : f32 to vector<16x1xf32>
    %12 = arith.mulf %7, %11 : vector<16x1xf32>
    %cst_10 = arith.constant 7.812500e-03 : f32
    %13 = vector.broadcast %cst_10 : f32 to vector<16x1xf32>
    %14 = arith.mulf %10, %13 : vector<16x1xf32>
    %15 = arith.mulf %12, %12 : vector<16x1xf32>
    %16 = arith.subf %14, %15 : vector<16x1xf32>
    %17 = vector.broadcast %12 : vector<16x1xf32> to vector<16x128xf32>
    %18 = arith.subf %1, %17 : vector<16x128xf32>
    %cst_11 = arith.constant 9.99999974E-6 : f32
    %19 = vector.broadcast %cst_11 : f32 to vector<16x1xf32>
    %20 = arith.addf %16, %19 : vector<16x1xf32>
    %21 = math.rsqrt %20 : vector<16x1xf32>
    %22 = vector.broadcast %21 : vector<16x1xf32> to vector<16x128xf32>
    %23 = arith.mulf %18, %22 : vector<16x128xf32>
    %24 = arith.truncf %23 : vector<16x128xf32> to vector<16x128xbf16>
    %cst_12 = arith.constant dense<0.000000e+00> : vector<128xf32>
    %25 = vector.multi_reduction <add>, %3, %cst_12 [1] : vector<128x128xf32> to vector<128xf32>
    %26 = vector.shape_cast %25 : vector<128xf32> to vector<128x1xf32>
    %27 = arith.mulf %3, %3 : vector<128x128xf32>
    %cst_13 = arith.constant dense<0.000000e+00> : vector<128xf32>
    %28 = vector.multi_reduction <add>, %27, %cst_13 [1] : vector<128x128xf32> to vector<128xf32>
    %29 = vector.shape_cast %28 : vector<128xf32> to vector<128x1xf32>
    %cst_14 = arith.constant 7.812500e-03 : f32
    %30 = vector.broadcast %cst_14 : f32 to vector<128x1xf32>
    %31 = arith.mulf %26, %30 : vector<128x1xf32>
    %cst_15 = arith.constant 7.812500e-03 : f32
    %32 = vector.broadcast %cst_15 : f32 to vector<128x1xf32>
    %33 = arith.mulf %29, %32 : vector<128x1xf32>
    %34 = arith.mulf %31, %31 : vector<128x1xf32>
    %35 = arith.subf %33, %34 : vector<128x1xf32>
    %36 = vector.broadcast %31 : vector<128x1xf32> to vector<128x128xf32>
    %37 = arith.subf %3, %36 : vector<128x128xf32>
    %cst_16 = arith.constant 9.99999974E-6 : f32
    %38 = vector.broadcast %cst_16 : f32 to vector<128x1xf32>
    %39 = arith.addf %35, %38 : vector<128x1xf32>
    %40 = math.rsqrt %39 : vector<128x1xf32>
    %41 = vector.broadcast %40 : vector<128x1xf32> to vector<128x128xf32>
    %42 = arith.mulf %37, %41 : vector<128x128xf32>
    %43 = arith.truncf %42 : vector<128x128xf32> to vector<128x128xbf16>
    %cst_17 = arith.constant dense<0.000000e+00> : vector<16xf32>
    %44 = vector.multi_reduction <add>, %5, %cst_17 [1] : vector<16x128xf32> to vector<16xf32>
    %45 = vector.shape_cast %44 : vector<16xf32> to vector<16x1xf32>
    %46 = arith.mulf %5, %5 : vector<16x128xf32>
    %cst_18 = arith.constant dense<0.000000e+00> : vector<16xf32>
    %47 = vector.multi_reduction <add>, %46, %cst_18 [1] : vector<16x128xf32> to vector<16xf32>
    %48 = vector.shape_cast %47 : vector<16xf32> to vector<16x1xf32>
    %cst_19 = arith.constant 7.812500e-03 : f32
    %49 = vector.broadcast %cst_19 : f32 to vector<16x1xf32>
    %50 = arith.mulf %45, %49 : vector<16x1xf32>
    %cst_20 = arith.constant 7.812500e-03 : f32
    %51 = vector.broadcast %cst_20 : f32 to vector<16x1xf32>
    %52 = arith.mulf %48, %51 : vector<16x1xf32>
    %53 = arith.mulf %50, %50 : vector<16x1xf32>
    %54 = arith.subf %52, %53 : vector<16x1xf32>
    %55 = vector.broadcast %50 : vector<16x1xf32> to vector<16x128xf32>
    %56 = arith.subf %5, %55 : vector<16x128xf32>
    %cst_21 = arith.constant 9.99999974E-6 : f32
    %57 = vector.broadcast %cst_21 : f32 to vector<16x1xf32>
    %58 = arith.addf %54, %57 : vector<16x1xf32>
    %59 = math.rsqrt %58 : vector<16x1xf32>
    %60 = vector.broadcast %59 : vector<16x1xf32> to vector<16x128xf32>
    %61 = arith.mulf %56, %60 : vector<16x128xf32>
    %62 = arith.truncf %61 : vector<16x128xf32> to vector<16x128xbf16>
    %63 = tpu.concatenate %24, %43, %62 in 0 : vector<16x128xbf16>, vector<128x128xbf16>, vector<16x128xbf16> -> vector<160x128xbf16>
    %c0_22 = arith.constant 0 : index
    %c0_23 = arith.constant 0 : index
    %64 = vector.load %arg5[%c0_22, %c0_23] : memref<128x256xbf16, #tpu.memory_space<vmem>>, vector<128x256xbf16>
    %cst_24 = arith.constant dense<0.000000e+00> : vector<160x256xf32>
    %65 = tpu.matmul %63, %64, %cst_24 {dimension_numbers = #tpu.dot_dimension_numbers<[1], [0], [0], [1], [0, 0, 1, 1], [], []>} : vector<160x128xbf16>, vector<128x256xbf16>, vector<160x256xf32> -> vector<160x256xf32>
    %c0_25 = arith.constant 0 : index
    %c0_26 = arith.constant 0 : index
    %66 = vector.load %arg6[%c0_25, %c0_26] : memref<1x256xf32, #tpu.memory_space<vmem>>, vector<1x256xf32>
    %67 = vector.shape_cast %66 : vector<1x256xf32> to vector<256xf32>
    %68 = vector.shape_cast %67 : vector<256xf32> to vector<1x256xf32>
    %69 = vector.broadcast %68 : vector<1x256xf32> to vector<160x256xf32>
    %70 = arith.addf %65, %69 : vector<160x256xf32>
    %71 = vector.extract_strided_slice %70 {offsets = [0, 0], sizes = [160, 128], strides = [1, 1]} : vector<160x256xf32> to vector<160x128xf32>
    %72 = vector.extract_strided_slice %70 {offsets = [0, 128], sizes = [160, 128], strides = [1, 1]} : vector<160x256xf32> to vector<160x128xf32>
    %73 = arith.negf %72 : vector<160x128xf32>
    %74 = math.exp %73 : vector<160x128xf32>
    %cst_27 = arith.constant 1.000000e+00 : f32
    %75 = vector.broadcast %cst_27 : f32 to vector<160x128xf32>
    %76 = arith.addf %75, %74 : vector<160x128xf32>
    %77 = arith.divf %75, %76 : vector<160x128xf32>
    %78 = arith.mulf %71, %77 : vector<160x128xf32>
    %79 = tpu.iota {dimensions = array<i32: 0>} : vector<160x1xi32>
    %c16_i32 = arith.constant 16 : i32
    %80 = vector.broadcast %c16_i32 : i32 to vector<160x1xi32>
    %81 = arith.cmpi sge, %79, %80 : vector<160x1xi32>
    %c0_i32 = arith.constant 0 : i32
    %82 = arith.cmpi sgt, %arg0, %c0_i32 : i32
    %83 = vector.broadcast %82 : i1 to vector<160x1xi1>
    %84 = arith.ori %81, %83 : vector<160x1xi1>
    %c144_i32 = arith.constant 144 : i32
    %85 = vector.broadcast %c144_i32 : i32 to vector<160x1xi32>
    %86 = arith.cmpi slt, %79, %85 : vector<160x1xi32>
    %c1_i32 = arith.constant 1 : i32
    %87 = arith.cmpi slt, %arg0, %c1_i32 : i32
    %88 = vector.broadcast %87 : i1 to vector<160x1xi1>
    %89 = arith.ori %86, %88 : vector<160x1xi1>
    %90 = arith.andi %84, %89 : vector<160x1xi1>
    %cst_28 = arith.constant 0.000000e+00 : f32
    %91 = vector.shape_cast %90 : vector<160x1xi1> to vector<160x1xi1>
    %92 = vector.broadcast %91 : vector<160x1xi1> to vector<160x128xi1>
    %93 = vector.broadcast %cst_28 : f32 to vector<160x128xf32>
    %94 = arith.select %92, %78, %93 : vector<160x128xi1>, vector<160x128xf32>
    %c0_29 = arith.constant 0 : index
    %c0_30 = arith.constant 0 : index
    %95 = vector.load %arg7[%c0_29, %c0_30] : memref<6x128xf32, #tpu.memory_space<vmem>>, vector<6x128xf32>
    %cst_31 = arith.constant 0.000000e+00 : f32
    %96 = vector.broadcast %cst_31 : f32 to vector<128x128xf32>
    %c2_i32 = arith.constant 2 : i32
    %97 = tpu.dynamic_rotate %94 by %c2_i32 dim 0 : vector<160x128xf32>, i32 -> vector<160x128xf32>
    %98 = vector.extract_strided_slice %97 {offsets = [16, 0], sizes = [128, 128], strides = [1, 1]} : vector<160x128xf32> to vector<128x128xf32>
    %99 = vector.extract_strided_slice %95 {offsets = [0, 0], sizes = [1, 128], strides = [1, 1]} : vector<6x128xf32> to vector<1x128xf32>
    %100 = vector.shape_cast %99 : vector<1x128xf32> to vector<128xf32>
    %101 = vector.shape_cast %100 : vector<128xf32> to vector<1x128xf32>
    %102 = vector.broadcast %101 : vector<1x128xf32> to vector<128x128xf32>
    %103 = arith.mulf %98, %102 : vector<128x128xf32>
    %104 = arith.addf %96, %103 : vector<128x128xf32>
    %c1_i32_32 = arith.constant 1 : i32
    %105 = tpu.dynamic_rotate %94 by %c1_i32_32 dim 0 : vector<160x128xf32>, i32 -> vector<160x128xf32>
    %106 = vector.extract_strided_slice %105 {offsets = [16, 0], sizes = [128, 128], strides = [1, 1]} : vector<160x128xf32> to vector<128x128xf32>
    %107 = vector.extract_strided_slice %95 {offsets = [1, 0], sizes = [1, 128], strides = [1, 1]} : vector<6x128xf32> to vector<1x128xf32>
    %108 = vector.shape_cast %107 : vector<1x128xf32> to vector<128xf32>
    %109 = vector.shape_cast %108 : vector<128xf32> to vector<1x128xf32>
    %110 = vector.broadcast %109 : vector<1x128xf32> to vector<128x128xf32>
    %111 = arith.mulf %106, %110 : vector<128x128xf32>
    %112 = arith.addf %104, %111 : vector<128x128xf32>
    %113 = vector.extract_strided_slice %94 {offsets = [16, 0], sizes = [128, 128], strides = [1, 1]} : vector<160x128xf32> to vector<128x128xf32>
    %114 = vector.extract_strided_slice %95 {offsets = [2, 0], sizes = [1, 128], strides = [1, 1]} : vector<6x128xf32> to vector<1x128xf32>
    %115 = vector.shape_cast %114 : vector<1x128xf32> to vector<128xf32>
    %116 = vector.shape_cast %115 : vector<128xf32> to vector<1x128xf32>
    %117 = vector.broadcast %116 : vector<1x128xf32> to vector<128x128xf32>
    %118 = arith.mulf %113, %117 : vector<128x128xf32>
    %119 = arith.addf %112, %118 : vector<128x128xf32>
    %c159_i32 = arith.constant 159 : i32
    %120 = tpu.dynamic_rotate %94 by %c159_i32 dim 0 : vector<160x128xf32>, i32 -> vector<160x128xf32>
    %121 = vector.extract_strided_slice %120 {offsets = [16, 0], sizes = [128, 128], strides = [1, 1]} : vector<160x128xf32> to vector<128x128xf32>
    %122 = vector.extract_strided_slice %95 {offsets = [3, 0], sizes = [1, 128], strides = [1, 1]} : vector<6x128xf32> to vector<1x128xf32>
    %123 = vector.shape_cast %122 : vector<1x128xf32> to vector<128xf32>
    %124 = vector.shape_cast %123 : vector<128xf32> to vector<1x128xf32>
    %125 = vector.broadcast %124 : vector<1x128xf32> to vector<128x128xf32>
    %126 = arith.mulf %121, %125 : vector<128x128xf32>
    %127 = arith.addf %119, %126 : vector<128x128xf32>
    %c158_i32 = arith.constant 158 : i32
    %128 = tpu.dynamic_rotate %94 by %c158_i32 dim 0 : vector<160x128xf32>, i32 -> vector<160x128xf32>
    %129 = vector.extract_strided_slice %128 {offsets = [16, 0], sizes = [128, 128], strides = [1, 1]} : vector<160x128xf32> to vector<128x128xf32>
    %130 = vector.extract_strided_slice %95 {offsets = [4, 0], sizes = [1, 128], strides = [1, 1]} : vector<6x128xf32> to vector<1x128xf32>
    %131 = vector.shape_cast %130 : vector<1x128xf32> to vector<128xf32>
    %132 = vector.shape_cast %131 : vector<128xf32> to vector<1x128xf32>
    %133 = vector.broadcast %132 : vector<1x128xf32> to vector<128x128xf32>
    %134 = arith.mulf %129, %133 : vector<128x128xf32>
    %135 = arith.addf %127, %134 : vector<128x128xf32>
    %136 = vector.extract_strided_slice %95 {offsets = [5, 0], sizes = [1, 128], strides = [1, 1]} : vector<6x128xf32> to vector<1x128xf32>
    %137 = vector.shape_cast %136 : vector<1x128xf32> to vector<128xf32>
    %138 = vector.shape_cast %137 : vector<128xf32> to vector<1x128xf32>
    %139 = vector.broadcast %138 : vector<1x128xf32> to vector<128x128xf32>
    %140 = arith.addf %135, %139 : vector<128x128xf32>
    %141 = arith.negf %140 : vector<128x128xf32>
    %142 = math.exp %141 : vector<128x128xf32>
    %cst_33 = arith.constant 1.000000e+00 : f32
    %143 = vector.broadcast %cst_33 : f32 to vector<128x128xf32>
    %144 = arith.addf %143, %142 : vector<128x128xf32>
    %145 = arith.divf %143, %144 : vector<128x128xf32>
    %146 = arith.mulf %140, %145 : vector<128x128xf32>
    %147 = arith.truncf %146 : vector<128x128xf32> to vector<128x128xbf16>
    %c0_34 = arith.constant 0 : index
    %c0_35 = arith.constant 0 : index
    %148 = vector.load %arg8[%c0_34, %c0_35] : memref<128x128xbf16, #tpu.memory_space<vmem>>, vector<128x128xbf16>
    %cst_36 = arith.constant dense<0.000000e+00> : vector<128x128xf32>
    %149 = tpu.matmul %147, %148, %cst_36 {dimension_numbers = #tpu.dot_dimension_numbers<[1], [0], [0], [1], [0, 0, 1, 1], [], []>} : vector<128x128xbf16>, vector<128x128xbf16>, vector<128x128xf32> -> vector<128x128xf32>
    %c0_37 = arith.constant 0 : index
    %c0_38 = arith.constant 0 : index
    %c0_39 = arith.constant 0 : index
    %150 = vector.load %arg9[%c0_37, %c0_38, %c0_39] : memref<1x128x128xf32, #tpu.memory_space<vmem>>, vector<1x128x128xf32>
    %151 = vector.shape_cast %150 : vector<1x128x128xf32> to vector<128x128xf32>
    %152 = vector.shape_cast %149 : vector<128x128xf32> to vector<1x128x128xf32>
    tpu.vector_store %arg9[%c0_37, %c0_38, %c0_39], %152 {strides = array<i32>} : memref<1x128x128xf32, #tpu.memory_space<vmem>>, vector<1x128x128xf32>,
    return
  }
  func.func @transform_0(%arg0: i32, %arg1: i32) -> (i32, i32, i32) {
    %c0_i32 = arith.constant 0 : i32
    %c0_i32_0 = arith.constant 0 : i32
    return %arg1, %arg0, %c0_i32 : i32, i32, i32
  }
  func.func @transform_1(%arg0: i32, %arg1: i32) -> (i32, i32, i32) {
    %c8_i32 = arith.constant 8 : i32
    %0 = arith.muli %arg0, %c8_i32 : i32
    %c1_i32 = arith.constant 1 : i32
    %1 = arith.subi %0, %c1_i32 : i32
    %c0_i32 = arith.constant 0 : i32
    %2 = arith.maxsi %1, %c0_i32 : i32
    %c0_i32_0 = arith.constant 0 : i32
    %c0_i32_1 = arith.constant 0 : i32
    return %arg1, %2, %c0_i32_0 : i32, i32, i32
  }
  func.func @transform_2(%arg0: i32, %arg1: i32) -> (i32, i32, i32) {
    %c1_i32 = arith.constant 1 : i32
    %0 = arith.addi %arg0, %c1_i32 : i32
    %c8_i32 = arith.constant 8 : i32
    %1 = arith.muli %0, %c8_i32 : i32
    %c15_i32 = arith.constant 15 : i32
    %2 = arith.minsi %1, %c15_i32 : i32
    %c0_i32 = arith.constant 0 : i32
    %c0_i32_0 = arith.constant 0 : i32
    return %arg1, %2, %c0_i32 : i32, i32, i32
  }
  func.func @transform_3(%arg0: i32, %arg1: i32) -> (i32, i32) {
    %c0_i32 = arith.constant 0 : i32
    %c0_i32_0 = arith.constant 0 : i32
    %c0_i32_1 = arith.constant 0 : i32
    return %c0_i32, %c0_i32_0 : i32, i32
  }
  func.func @transform_4(%arg0: i32, %arg1: i32) -> (i32, i32) {
    %c0_i32 = arith.constant 0 : i32
    %c0_i32_0 = arith.constant 0 : i32
    %c0_i32_1 = arith.constant 0 : i32
    return %c0_i32, %c0_i32_0 : i32, i32
  }
  func.func @transform_5(%arg0: i32, %arg1: i32) -> (i32, i32) {
    %c0_i32 = arith.constant 0 : i32
    %c0_i32_0 = arith.constant 0 : i32
    %c0_i32_1 = arith.constant 0 : i32
    return %c0_i32, %c0_i32_0 : i32, i32
  }
  func.func @transform_6(%arg0: i32, %arg1: i32) -> (i32, i32) {
    %c0_i32 = arith.constant 0 : i32
    %c0_i32_0 = arith.constant 0 : i32
    %c0_i32_1 = arith.constant 0 : i32
    return %c0_i32, %c0_i32_0 : i32, i32
  }
  func.func @transform_7(%arg0: i32, %arg1: i32) -> (i32, i32, i32) {
    %c0_i32 = arith.constant 0 : i32
    %c0_i32_0 = arith.constant 0 : i32
    return %arg1, %arg0, %c0_i32 : i32, i32, i32
  }
}

</mosaic_0001>

<llo_original>
// kernel: tpu_custom_call.1
$region0: #{tpu_custom_call.1}
  #allocation0 [shape = 'u32[]', space=smem, size = 0x4, offset = 0x4, fixed_abs, tag = 'smem constant byte address 0x4 - core index']
  #allocation1 [shape = 'u32[144,128]{1,0:T(1,128)}', space=vmem, size = 0x12000, scoped, tag = 'internal scratch']
  %s0 = inlined_call_operand.hbm [shape: f32[2,256,128], index: 0, kind: input, shape index: {}]
  %s1 = inlined_call_operand.hbm [shape: f32[2,256,128], index: 1, kind: input, shape index: {}]
  %s2 = inlined_call_operand.hbm [shape: f32[2,256,128], index: 2, kind: input, shape index: {}]
  %s3 = inlined_call_operand.hbm [shape: bf16[128,256], index: 3, kind: input, shape index: {}]
  %s4 = inlined_call_operand.hbm [shape: f32[1,256], index: 4, kind: input, shape index: {}]
  %s5 = inlined_call_operand.vmem [shape: f32[6,128], index: 5, kind: input, shape index: {}]
  %s6 = inlined_call_operand.hbm [shape: bf16[128,128], index: 6, kind: input, shape index: {}]
  %s7 = inlined_call_operand.hbm [shape: f32[2,256,128], index: 7, kind: output, shape index: {}]
  %s8 = sld [smem:[#allocation0]]
  $region85: #{tpu_custom_call.1} parent=0
    _
  %s10 = ssub.s32 1, %s8
  %s11 = scalar_select 0, %s10, %s8
  $region1: #{tpu_custom_call.1} parent=0
    #allocation2 [shape = 'u8[131072]{0}', space=vmem, size = 0x20000, scoped, tag = 'input window, operand 0']
    #allocation3 [shape = 's32[2]{0}', space=sflag, size = 0x8, scoped, tag = 'scoped memory for tpu_custom_call.1']
    #allocation4 [shape = 's32[2]{0}', space=sflag, size = 0x8, scoped, tag = 'scoped memory for tpu_custom_call.1']
    #allocation5 [shape = 'u8[16384]{0}', space=vmem, size = 0x4000, scoped, tag = 'input window, operand 1']
    #allocation6 [shape = 's32[2]{0}', space=sflag, size = 0x8, scoped, tag = 'scoped memory for tpu_custom_call.1']
    #allocation7 [shape = 'u8[16384]{0}', space=vmem, size = 0x4000, scoped, tag = 'input window, operand 2']
    #allocation8 [shape = 'u8[65536]{0}', space=vmem, size = 0x10000, scoped, tag = 'input window, operand 3, single buffered']
    #allocation9 [shape = 's32[1]{0}', space=sflag, size = 0x4, scoped, tag = 'scoped memory for tpu_custom_call.1']
    #allocation10 [shape = 'u8[1024]{0}', space=vmem, size = 0x400, scoped, tag = 'input window, operand 4, single buffered']
    #allocation11 [shape = 'u8[32768]{0}', space=vmem, size = 0x8000, scoped, tag = 'input window, operand 6, single buffered']
    #allocation12 [shape = 's32[1]{0}', space=sflag, size = 0x4, scoped, tag = 'scoped memory for tpu_custom_call.1']
    #allocation13 [shape = 'u8[131072]{0}', space=vmem, size = 0x20000, scoped, tag = 'output window, operand 0']
    %12 = vsyncpa [#allocation3], 0
    %s13 = scalar_lea.sflag [#allocation3], 1
    %14 = vsyncpa %s13, 0
    %15 = vsyncpa [#allocation6], 0
    %s16 = scalar_lea.sflag [#allocation6], 1
    %17 = vsyncpa %s16, 0
    %18 = vsyncpa [#allocation9], 0
    %19 = vsyncpa [#allocation12], 0
    %20 = vsyncpa [#allocation4], 0
    %s21 = scalar_lea.sflag [#allocation4], 1
    %22 = vsyncpa %s21, 0
    loop: start=0, step=1, limit=6
    $region2: #{tpu_custom_call.1} parent=1 // loop_pre_header
      _
    $region3: #{tpu_custom_call.1} parent=1 // loop_header
      %s24 = sphi 0, %s28
      %p25 = scmp.ge.s32.totalorder %s24, 6
      %s31 = sphi 0, %s43
      %s32 = sphi 0, %s39
      %s33 = sphi 0, %s31
      %s34 = sphi 0, %s32
      %s35 = sphi 0, %s33
      %s36 = sphi 0, %s34
      %s48 = sphi 0, %s50
      %s51 = sphi 0, %s48
      %s52 = sphi 0, %s51
      %s68 = sphi 0, %s52
      %s84 = sphi 0, %s86
      %s87 = sphi 0, %s84
      %s88 = sphi 0, %s87
      %s104 = sphi 0, %s88
      %s120 = sphi 0, %s122
      %s123 = sphi 0, %s120
      %s124 = sphi 0, %s123
      %s140 = sphi 0, %s124
      %s144 = sphi 0, %s144
      %s146 = sphi 0, %s144
      %s147 = sphi 0, %s146
      %s161 = sphi 0, %s147
      %s165 = sphi 0, %s165
      %s167 = sphi 0, %s165
      %s168 = sphi 0, %s167
      %s182 = sphi 0, %s168
      %s186 = sphi 0, %s186
      %s188 = sphi 0, %s186
      %s189 = sphi 0, %s188
      %s203 = sphi 0, %s189
      %s207 = sphi 0, %s207
      %s209 = sphi 0, %s207
      %s210 = sphi 0, %s209
      %s224 = sphi 0, %s210
      %s232 = sphi 0, %s234
      %s235 = sphi 0, %s232
      %s236 = sphi 0, %s235
      %s252 = sphi 0, %s236
    $region4: #{tpu_custom_call.1} parent=1 // loop_header_branch
      %27 = sbr.rel (%p25) target = $region8
    $region5: #{tpu_custom_call.1} parent=1 // loop_body
      %s29 = ssub.s32 %s24, 1
      %s30 = ssub.s32 %s24, 2
      %s37 = sadd.s32 1, %s32
      %p38 = scmp.ge.s32.totalorder %s37, 2
      %s39 = scalar_select %p38, 0, %s37
      %s40 = sadd.s32 1, %s31
      %s41 = scalar_select %p38, %s40, %s31
      %p42 = scmp.ge.s32.totalorder %s41, 2
      %s43 = scalar_select %p42, 0, %s41
      %s44 = ssub.s32 %s32, %s39
      %s45 = ssub.s32 %s31, %s43
      %s46 = sor.u32 %s44, %s45
      %p47 = scmp.eq.s32.totalorder %s46, 0
      %s49 = sadd.s32 %s48, 1
      %s50 = scalar_select %p47, %s48, %s49
      %p53 = pneg %p47
      %p54 = scmp.eq.s32.totalorder %s24, 3
      %p55 = por %p53, %p54
      %p56 = scmp.ne.s32.totalorder %s48, %s51
      %p57 = scmp.eq.s32.totalorder %s24, 0
      %p58 = por %p56, %p57
      %p59 = scmp.ne.s32.totalorder %s48, %s51
      %p60 = scmp.eq.s32.totalorder %s29, 3
      %p61 = por %p59, %p60
      %p62 = scmp.ne.s32.totalorder %s51, %s52
      %p63 = scmp.eq.s32.totalorder %s29, 0
      %p64 = por %p62, %p63
      %p65 = scmp.ne.s32.totalorder %s51, %s52
      %p66 = scmp.eq.s32.totalorder %s30, 3
      %p67 = por %p65, %p66
      %p69 = scmp.ne.s32.totalorder %s52, %s68
      %p70 = scmp.eq.s32.totalorder %s30, 0
      %p71 = por %p69, %p70
      %s72 = smul.u32 %s31, 8
      %s73 = ssub.s32 %s72, 1
      %p74 = scmp.gt.s32.totalorder %s73, 0
      %s75 = scalar_select %p74, %s73, 0
      %s76 = smul.u32 %s43, 8
      %s77 = ssub.s32 %s76, 1
      %p78 = scmp.gt.s32.totalorder %s77, 0
      %s79 = scalar_select %p78, %s77, 0
      %s80 = ssub.s32 %s32, %s39
      %s81 = ssub.s32 %s75, %s79
      %s82 = sor.u32 %s80, %s81
      %p83 = scmp.eq.s32.totalorder %s82, 0
      %s85 = sadd.s32 %s84, 1
      %s86 = scalar_select %p83, %s84, %s85
      %p89 = pneg %p83
      %p90 = scmp.eq.s32.totalorder %s24, 3
      %p91 = por %p89, %p90
      %p92 = scmp.ne.s32.totalorder %s84, %s87
      %p93 = scmp.eq.s32.totalorder %s24, 0
      %p94 = por %p92, %p93
      %p95 = scmp.ne.s32.totalorder %s84, %s87
      %p96 = scmp.eq.s32.totalorder %s29, 3
      %p97 = por %p95, %p96
      %p98 = scmp.ne.s32.totalorder %s87, %s88
      %p99 = scmp.eq.s32.totalorder %s29, 0
      %p100 = por %p98, %p99
      %p101 = scmp.ne.s32.totalorder %s87, %s88
      %p102 = scmp.eq.s32.totalorder %s30, 3
      %p103 = por %p101, %p102
      %p105 = scmp.ne.s32.totalorder %s88, %s104
      %p106 = scmp.eq.s32.totalorder %s30, 0
      %p107 = por %p105, %p106
      %s108 = sadd.s32 %s31, 1
      %s109 = smul.u32 %s108, 8
      %p110 = scmp.lt.s32.totalorder %s109, 15
      %s111 = scalar_select %p110, %s109, 15
      %s112 = sadd.s32 %s43, 1
      %s113 = smul.u32 %s112, 8
      %p114 = scmp.lt.s32.totalorder %s113, 15
      %s115 = scalar_select %p114, %s113, 15
      %s116 = ssub.s32 %s32, %s39
      %s117 = ssub.s32 %s111, %s115
      %s118 = sor.u32 %s116, %s117
      %p119 = scmp.eq.s32.totalorder %s118, 0
      %s121 = sadd.s32 %s120, 1
      %s122 = scalar_select %p119, %s120, %s121
      %p125 = pneg %p119
      %p126 = scmp.eq.s32.totalorder %s24, 3
      %p127 = por %p125, %p126
      %p128 = scmp.ne.s32.totalorder %s120, %s123
      %p129 = scmp.eq.s32.totalorder %s24, 0
      %p130 = por %p128, %p129
      %p131 = scmp.ne.s32.totalorder %s120, %s123
      %p132 = scmp.eq.s32.totalorder %s29, 3
      %p133 = por %p131, %p132
      %p134 = scmp.ne.s32.totalorder %s123, %s124
      %p135 = scmp.eq.s32.totalorder %s29, 0
      %p136 = por %p134, %p135
      %p137 = scmp.ne.s32.totalorder %s123, %s124
      %p138 = scmp.eq.s32.totalorder %s30, 3
      %p139 = por %p137, %p138
      %p141 = scmp.ne.s32.totalorder %s124, %s140
      %p142 = scmp.eq.s32.totalorder %s30, 0
      %p143 = por %p141, %p142
      %s145 = sadd.s32 %s144, 1
      %p148 = scmp.eq.s32.totalorder %s24, 3
      %p149 = scmp.ne.s32.totalorder %s144, %s146
      %p150 = scmp.eq.s32.totalorder %s24, 0
      %p151 = por %p149, %p150
      %p152 = scmp.ne.s32.totalorder %s144, %s146
      %p153 = scmp.eq.s32.totalorder %s29, 3
      %p154 = por %p152, %p153
      %p155 = scmp.ne.s32.totalorder %s146, %s147
      %p156 = scmp.eq.s32.totalorder %s29, 0
      %p157 = por %p155, %p156
      %p158 = scmp.ne.s32.totalorder %s146, %s147
      %p159 = scmp.eq.s32.totalorder %s30, 3
      %p160 = por %p158, %p159
      %p162 = scmp.ne.s32.totalorder %s147, %s161
      %p163 = scmp.eq.s32.totalorder %s30, 0
      %p164 = por %p162, %p163
      %s166 = sadd.s32 %s165, 1
      %p169 = scmp.eq.s32.totalorder %s24, 3
      %p170 = scmp.ne.s32.totalorder %s165, %s167
      %p171 = scmp.eq.s32.totalorder %s24, 0
      %p172 = por %p170, %p171
      %p173 = scmp.ne.s32.totalorder %s165, %s167
      %p174 = scmp.eq.s32.totalorder %s29, 3
      %p175 = por %p173, %p174
      %p176 = scmp.ne.s32.totalorder %s167, %s168
      %p177 = scmp.eq.s32.totalorder %s29, 0
      %p178 = por %p176, %p177
      %p179 = scmp.ne.s32.totalorder %s167, %s168
      %p180 = scmp.eq.s32.totalorder %s30, 3
      %p181 = por %p179, %p180
      %p183 = scmp.ne.s32.totalorder %s168, %s182
      %p184 = scmp.eq.s32.totalorder %s30, 0
      %p185 = por %p183, %p184
      %s187 = sadd.s32 %s186, 1
      %p190 = scmp.eq.s32.totalorder %s24, 3
      %p191 = scmp.ne.s32.totalorder %s186, %s188
      %p192 = scmp.eq.s32.totalorder %s24, 0
      %p193 = por %p191, %p192
      %p194 = scmp.ne.s32.totalorder %s186, %s188
      %p195 = scmp.eq.s32.totalorder %s29, 3
      %p196 = por %p194, %p195
      %p197 = scmp.ne.s32.totalorder %s188, %s189
      %p198 = scmp.eq.s32.totalorder %s29, 0
      %p199 = por %p197, %p198
      %p200 = scmp.ne.s32.totalorder %s188, %s189
      %p201 = scmp.eq.s32.totalorder %s30, 3
      %p202 = por %p200, %p201
      %p204 = scmp.ne.s32.totalorder %s189, %s203
      %p205 = scmp.eq.s32.totalorder %s30, 0
      %p206 = por %p204, %p205
      %s208 = sadd.s32 %s207, 1
      %p211 = scmp.eq.s32.totalorder %s24, 3
      %p212 = scmp.ne.s32.totalorder %s207, %s209
      %p213 = scmp.eq.s32.totalorder %s24, 0
      %p214 = por %p212, %p213
      %p215 = scmp.ne.s32.totalorder %s207, %s209
      %p216 = scmp.eq.s32.totalorder %s29, 3
      %p217 = por %p215, %p216
      %p218 = scmp.ne.s32.totalorder %s209, %s210
      %p219 = scmp.eq.s32.totalorder %s29, 0
      %p220 = por %p218, %p219
      %p221 = scmp.ne.s32.totalorder %s209, %s210
      %p222 = scmp.eq.s32.totalorder %s30, 3
      %p223 = por %p221, %p222
      %p225 = scmp.ne.s32.totalorder %s210, %s224
      %p226 = scmp.eq.s32.totalorder %s30, 0
      %p227 = por %p225, %p226
      %s228 = ssub.s32 %s32, %s39
      %s229 = ssub.s32 %s31, %s43
      %s230 = sor.u32 %s228, %s229
      %p231 = scmp.eq.s32.totalorder %s230, 0
      %s233 = sadd.s32 %s232, 1
      %s234 = scalar_select %p231, %s232, %s233
      %p237 = pneg %p231
      %p238 = scmp.eq.s32.totalorder %s24, 3
      %p239 = por %p237, %p238
      %p240 = scmp.ne.s32.totalorder %s232, %s235
      %p241 = scmp.eq.s32.totalorder %s24, 0
      %p242 = por %p240, %p241
      %p243 = scmp.ne.s32.totalorder %s232, %s235
      %p244 = scmp.eq.s32.totalorder %s29, 3
      %p245 = por %p243, %p244
      %p246 = scmp.ne.s32.totalorder %s235, %s236
      %p247 = scmp.eq.s32.totalorder %s29, 0
      %p248 = por %p246, %p247
      %p249 = scmp.ne.s32.totalorder %s235, %s236
      %p250 = scmp.eq.s32.totalorder %s30, 3
      %p251 = por %p249, %p250
      %p253 = scmp.ne.s32.totalorder %s236, %s252
      %p254 = scmp.eq.s32.totalorder %s30, 0
      %p255 = por %p253, %p254
      %p256 = scmp.le.s32.totalorder 1, %s24
      %p257 = scmp.lt.s32.totalorder %s24, 5
      %p258 = pnand %p256, %p257
      %p259 = pneg %p258
      // Predicated region
      $region9: #{tpu_custom_call.1} parent=5 // pred_check
        _
      $region10: #{tpu_custom_call.1} parent=5 // pred_check_branch
        %261 = sbr.rel (%p258) target = $region12
      $region11: #{tpu_custom_call.1} parent=5 // pred_region
        %s262 = ssub.s32 %s24, 1
        // Predicated region
        $region13: #{tpu_custom_call.1} parent=11 // pred_check
          %p263 = pneg %p157
        $region14: #{tpu_custom_call.1} parent=11 // pred_check_branch
          %265 = sbr.rel (%p263) target = $region16
        $region15: #{tpu_custom_call.1} parent=11 // pred_region
          %s267 = ssub.s32 2048, 2048
          %268 = vsyncadd [#allocation9], %s267
          %s269 = sshll.u32 [#allocation8], 4
          %s270 = int_to_ptr.vmem [resolvable:$true] %s269
          %275 = dma.hbm_to_vmem [thread:$0]  %s3, 2048, %s270, [#allocation9], 128, 128, 8
        $region16: #{tpu_custom_call.1} parent=11 // pred_fallthru
          _
        // Predicated region
        $region17: #{tpu_custom_call.1} parent=11 // pred_check
          %p276 = pneg %p178
        $region18: #{tpu_custom_call.1} parent=11 // pred_check_branch
          %278 = sbr.rel (%p276) target = $region20
        $region19: #{tpu_custom_call.1} parent=11 // pred_region
          %s280 = ssub.s32 32, 32
          %281 = vsyncadd [#allocation9], %s280
          %s283 = sshll.u32 [#allocation10], 4
          %s284 = int_to_ptr.vmem [resolvable:$true] %s283
          %286 = dma.hbm_to_vmem [thread:$0]  %s4, 32, %s284, [#allocation9]
        $region20: #{tpu_custom_call.1} parent=11 // pred_fallthru
          _
        // Predicated region
        $region21: #{tpu_custom_call.1} parent=11 // pred_check
          %p287 = pneg %p199
        $region22: #{tpu_custom_call.1} parent=11 // pred_check_branch
          %289 = sbr.rel (%p287) target = $region24
        $region23: #{tpu_custom_call.1} parent=11 // pred_region
          _
        $region24: #{tpu_custom_call.1} parent=11 // pred_fallthru
          _
        // Predicated region
        $region25: #{tpu_custom_call.1} parent=11 // pred_check
          %p290 = pneg %p220
        $region26: #{tpu_custom_call.1} parent=11 // pred_check_branch
          %292 = sbr.rel (%p290) target = $region28
        $region27: #{tpu_custom_call.1} parent=11 // pred_region
          %s294 = ssub.s32 1024, 1024
          %295 = vsyncadd [#allocation12], %s294
          %s296 = sshll.u32 [#allocation11], 4
          %s297 = int_to_ptr.vmem [resolvable:$true] %s296
          %302 = dma.hbm_to_vmem [thread:$0]  %s6, 1024, %s297, [#allocation12], 64, 64, 4
        $region28: #{tpu_custom_call.1} parent=11 // pred_fallthru
          _
      $region12: #{tpu_custom_call.1} parent=5 // pred_fallthru
        _
      %p303 = scmp.lt.s32.totalorder %s24, 4
      // Predicated region
      $region29: #{tpu_custom_call.1} parent=5 // pred_check
        %p304 = pneg %p303
      $region30: #{tpu_custom_call.1} parent=5 // pred_check_branch
        %306 = sbr.rel (%p304) target = $region32
      $region31: #{tpu_custom_call.1} parent=5 // pred_region
        // Predicated region
        $region33: #{tpu_custom_call.1} parent=31 // pred_check
          %p307 = pneg %p58
        $region34: #{tpu_custom_call.1} parent=31 // pred_check_branch
          %309 = sbr.rel (%p307) target = $region36
        $region35: #{tpu_custom_call.1} parent=31 // pred_region
          %s310 = sand.u32 %s48, 1
          %s311 = scalar_lea.sflag [#allocation3], %s310
          %s312 = sand.u32 %s48, 1
          %s313 = smul.addr %s312, 128
          %s314 = scalar_lea.vmem [#allocation2], %s313
          %s315 = smul.u32 16, %s31
          %s317 = ssub.s32 2048, 2048
          %318 = vsyncadd %s311, %s317
          %s319 = smul.addr %s32, 32
          %s320 = sadd.s32 %s315, %s319
          %s321 = smul.addr %s320, 128
          %s322 = scalar_lea.hbm %s0, %s321
          %s323 = sshll.u32 %s314, 4
          %s324 = int_to_ptr.vmem [resolvable:$true] %s323
          %329 = dma.hbm_to_vmem [thread:$0]  %s322, 2048, %s324, %s311, 128, 128, 8
        $region36: #{tpu_custom_call.1} parent=31 // pred_fallthru
          _
        // Predicated region
        $region37: #{tpu_custom_call.1} parent=31 // pred_check
          %p330 = pneg %p94
        $region38: #{tpu_custom_call.1} parent=31 // pred_check_branch
          %332 = sbr.rel (%p330) target = $region40
        $region39: #{tpu_custom_call.1} parent=31 // pred_region
          %s333 = sand.u32 %s24, 1
          %s334 = scalar_lea.sflag [#allocation6], %s333
          %s335 = sand.u32 %s84, 1
          %s336 = smul.addr %s335, 16
          %s337 = scalar_lea.vmem [#allocation5], %s336
          %s338 = smul.u32 %s31, 8
          %s339 = ssub.s32 %s338, 1
          %p340 = scmp.gt.s32.totalorder %s339, 0
          %s341 = scalar_select %p340, %s339, 0
          %s342 = smul.u32 2, %s341
          %s344 = ssub.s32 256, 256
          %345 = vsyncadd %s334, %s344
          %s346 = smul.addr %s32, 32
          %s347 = sadd.s32 %s342, %s346
          %s348 = smul.addr %s347, 128
          %s349 = scalar_lea.hbm %s1, %s348
          %s350 = sshll.u32 %s337, 4
          %s351 = int_to_ptr.vmem [resolvable:$true] %s350
          %356 = dma.hbm_to_vmem [thread:$0]  %s349, 256, %s351, %s334, 128, 128, 8
        $region40: #{tpu_custom_call.1} parent=31 // pred_fallthru
          _
        // Predicated region
        $region41: #{tpu_custom_call.1} parent=31 // pred_check
          %p357 = pneg %p130
        $region42: #{tpu_custom_call.1} parent=31 // pred_check_branch
          %359 = sbr.rel (%p357) target = $region44
        $region43: #{tpu_custom_call.1} parent=31 // pred_region
          %s360 = sand.u32 %s24, 1
          %s361 = scalar_lea.sflag [#allocation6], %s360
          %s362 = sand.u32 %s120, 1
          %s363 = smul.addr %s362, 16
          %s364 = scalar_lea.vmem [#allocation7], %s363
          %s365 = sadd.s32 %s31, 1
          %s366 = smul.u32 %s365, 8
          %p367 = scmp.lt.s32.totalorder %s366, 15
          %s368 = scalar_select %p367, %s366, 15
          %s369 = smul.u32 2, %s368
          %s371 = ssub.s32 256, 256
          %372 = vsyncadd %s361, %s371
          %s373 = smul.addr %s32, 32
          %s374 = sadd.s32 %s369, %s373
          %s375 = smul.addr %s374, 128
          %s376 = scalar_lea.hbm %s2, %s375
          %s377 = sshll.u32 %s364, 4
          %s378 = int_to_ptr.vmem [resolvable:$true] %s377
          %383 = dma.hbm_to_vmem [thread:$0]  %s376, 256, %s378, %s361, 128, 128, 8
        $region44: #{tpu_custom_call.1} parent=31 // pred_fallthru
          _
      $region32: #{tpu_custom_call.1} parent=5 // pred_fallthru
        _
      %p384 = scmp.le.s32.totalorder 1, %s24
      %p385 = scmp.lt.s32.totalorder %s24, 5
      %p386 = pnand %p384, %p385
      %p387 = pneg %p386
      // Predicated region
      $region45: #{tpu_custom_call.1} parent=5 // pred_check
        _
      $region46: #{tpu_custom_call.1} parent=5 // pred_check_branch
        %389 = sbr.rel (%p386) target = $region48
      $region47: #{tpu_custom_call.1} parent=5 // pred_region
        %s390 = ssub.s32 %s24, 1
        %s391 = sand.u32 %s51, 1
        %s392 = scalar_lea.sflag [#allocation3], %s391
        %s393 = sand.u32 %s51, 1
        %s394 = smul.addr %s393, 128
        %s395 = scalar_lea.vmem [#allocation2], %s394
        // Predicated region
        $region49: #{tpu_custom_call.1} parent=47 // pred_check
          %p396 = pneg %p64
        $region50: #{tpu_custom_call.1} parent=47 // pred_check_branch
          %398 = sbr.rel (%p396) target = $region52
        $region51: #{tpu_custom_call.1} parent=47 // pred_region
          %399 = dma.done %s392, 2048
        $region52: #{tpu_custom_call.1} parent=47 // pred_fallthru
          _
        %s400 = sand.u32 %s29, 1
        %s401 = scalar_lea.sflag [#allocation6], %s400
        %s402 = sand.u32 %s87, 1
        %s403 = smul.addr %s402, 16
        %s404 = scalar_lea.vmem [#allocation5], %s403
        // Predicated region
        $region53: #{tpu_custom_call.1} parent=47 // pred_check
          %p405 = pneg %p100
        $region54: #{tpu_custom_call.1} parent=47 // pred_check_branch
          %407 = sbr.rel (%p405) target = $region56
        $region55: #{tpu_custom_call.1} parent=47 // pred_region
          %408 = dma.done %s401, 256
        $region56: #{tpu_custom_call.1} parent=47 // pred_fallthru
          _
        %s409 = sand.u32 %s29, 1
        %s410 = scalar_lea.sflag [#allocation6], %s409
        %s411 = sand.u32 %s123, 1
        %s412 = smul.addr %s411, 16
        %s413 = scalar_lea.vmem [#allocation7], %s412
        // Predicated region
        $region57: #{tpu_custom_call.1} parent=47 // pred_check
          %p414 = pneg %p136
        $region58: #{tpu_custom_call.1} parent=47 // pred_check_branch
          %416 = sbr.rel (%p414) target = $region60
        $region59: #{tpu_custom_call.1} parent=47 // pred_region
          %417 = dma.done %s410, 256
        $region60: #{tpu_custom_call.1} parent=47 // pred_fallthru
          _
        // Predicated region
        $region61: #{tpu_custom_call.1} parent=47 // pred_check
          %p418 = pneg %p157
        $region62: #{tpu_custom_call.1} parent=47 // pred_check_branch
          %420 = sbr.rel (%p418) target = $region64
        $region63: #{tpu_custom_call.1} parent=47 // pred_region
          %421 = dma.done [#allocation9], 2048
        $region64: #{tpu_custom_call.1} parent=47 // pred_fallthru
          _
        // Predicated region
        $region65: #{tpu_custom_call.1} parent=47 // pred_check
          %p422 = pneg %p178
        $region66: #{tpu_custom_call.1} parent=47 // pred_check_branch
          %424 = sbr.rel (%p422) target = $region68
        $region67: #{tpu_custom_call.1} parent=47 // pred_region
          %425 = dma.done [#allocation9], 32
        $region68: #{tpu_custom_call.1} parent=47 // pred_fallthru
          _
        // Predicated region
        $region69: #{tpu_custom_call.1} parent=47 // pred_check
          %p426 = pneg %p220
        $region70: #{tpu_custom_call.1} parent=47 // pred_check_branch
          %428 = sbr.rel (%p426) target = $region72
        $region71: #{tpu_custom_call.1} parent=47 // pred_region
          %429 = dma.done [#allocation12], 1024
        $region72: #{tpu_custom_call.1} parent=47 // pred_fallthru
          _
        %s430 = sand.u32 %s51, 1
        %s431 = scalar_lea.sflag [#allocation3], %s430
        %s432 = sand.u32 %s51, 1
        %s433 = smul.addr %s432, 128
        %s434 = scalar_lea.vmem [#allocation2], %s433
        %p435 = pneg %p64
        %p436 = pneg %p61
        %s437 = sand.u32 %s29, 1
        %s438 = scalar_lea.sflag [#allocation6], %s437
        %s439 = sand.u32 %s87, 1
        %s440 = smul.addr %s439, 16
        %s441 = scalar_lea.vmem [#allocation5], %s440
        %p442 = pneg %p100
        %p443 = pneg %p97
        %s444 = sand.u32 %s29, 1
        %s445 = scalar_lea.sflag [#allocation6], %s444
        %s446 = sand.u32 %s123, 1
        %s447 = smul.addr %s446, 16
        %s448 = scalar_lea.vmem [#allocation7], %s447
        %p449 = pneg %p136
        %p450 = pneg %p133
        %p451 = pneg %p157
        %p452 = pneg %p154
        %p453 = pneg %p178
        %p454 = pneg %p175
        %p455 = pneg %p199
        %p456 = pneg %p196
        %p457 = pneg %p220
        %p458 = pneg %p217
        %p459 = pneg %p248
        %p460 = pneg %p245
        %s461 = sand.u32 %s235, 1
        %s462 = scalar_lea.sflag [#allocation4], %s461
        %s463 = sand.u32 %s235, 1
        %s464 = smul.addr %s463, 128
        %s465 = scalar_lea.vmem [#allocation13], %s464
        %s466 = smul.u32 16, %s33
        %s467 = smul.u32 %s33, 8
        %s468 = ssub.s32 %s467, 1
        %p469 = scmp.gt.s32.totalorder %s468, 0
        %s470 = scalar_select %p469, %s468, 0
        %s471 = smul.u32 2, %s470
        %s472 = sadd.s32 %s33, 1
        %s473 = smul.u32 %s472, 8
        %p474 = scmp.lt.s32.totalorder %s473, 15
        %s475 = scalar_select %p474, %s473, 15
        %s476 = smul.u32 2, %s475
        %s477 = smul.u32 16, %s33
        %v479 = vld [vmem:[%s404] sm:$0xff]
        %v480 = vld [vmem:[%s404 + $0x8] sm:$0xff]
        %v481 = vld [vmem:[%s395] sm:$0xff]
        %v482 = vld [vmem:[%s395 + $0x8] sm:$0xff]
        %v483 = vld [vmem:[%s395 + $0x10] sm:$0xff]
        %v484 = vld [vmem:[%s395 + $0x18] sm:$0xff]
        %v485 = vld [vmem:[%s395 + $0x20] sm:$0xff]
        %v486 = vld [vmem:[%s395 + $0x28] sm:$0xff]
        %v487 = vld [vmem:[%s395 + $0x30] sm:$0xff]
        %v488 = vld [vmem:[%s395 + $0x38] sm:$0xff]
        %v489 = vld [vmem:[%s395 + $0x40] sm:$0xff]
        %v490 = vld [vmem:[%s395 + $0x48] sm:$0xff]
        %v491 = vld [vmem:[%s395 + $0x50] sm:$0xff]
        %v492 = vld [vmem:[%s395 + $0x58] sm:$0xff]
        %v493 = vld [vmem:[%s395 + $0x60] sm:$0xff]
        %v494 = vld [vmem:[%s395 + $0x68] sm:$0xff]
        %v495 = vld [vmem:[%s395 + $0x70] sm:$0xff]
        %v496 = vld [vmem:[%s395 + $0x78] sm:$0xff]
        %v497 = vld [vmem:[%s413] sm:$0xff]
        %v498 = vld [vmem:[%s413 + $0x8] sm:$0xff]
        %499 = vadd.xlane.f32.xlu0 %v479
        %v500 = vpop.xlane.xlu0 %499
        %501 = vadd.xlane.f32.xlu0 %v480
        %v502 = vpop.xlane.xlu0 %501
        %v503 = vmul.f32 %v479, %v479
        %v504 = vmul.f32 %v480, %v480
        %505 = vadd.xlane.f32.xlu0 %v503
        %v506 = vpop.xlane.xlu0 %505
        %507 = vadd.xlane.f32.xlu0 %v504
        %v508 = vpop.xlane.xlu0 %507
        %v509 = vmul.f32 %v500, 0.0078125
        %v510 = vmul.f32 %v502, 0.0078125
        %v511 = vmul.f32 %v506, 0.0078125
        %v512 = vmul.f32 %v508, 0.0078125
        %v513 = vmul.f32 %v509, %v509
        %v514 = vmul.f32 %v510, %v510
        %v515 = vsub.f32 %v511, %v513
        %v516 = vsub.f32 %v512, %v514
        %v517 = vsub.f32 %v479, %v509
        %v518 = vsub.f32 %v480, %v510
        %v519 = vadd.f32 %v515, 1e-05
        %v520 = vadd.f32 %v516, 1e-05
        %v521 = vrsqrt.pop %v519
        %v522 = vrsqrt.pop %v520
        %v523 = vmul.f32 %v517, %v521
        %v524 = vmul.f32 %v518, %v522
        %v525 = vpack.c.bf16 %v524, %v523
        %526 = vadd.xlane.f32.xlu0 %v481
        %v527 = vpop.xlane.xlu0 %526
        %528 = vadd.xlane.f32.xlu0 %v482
        %v529 = vpop.xlane.xlu0 %528
        %530 = vadd.xlane.f32.xlu0 %v483
        %v531 = vpop.xlane.xlu0 %530
        %532 = vadd.xlane.f32.xlu0 %v484
        %v533 = vpop.xlane.xlu0 %532
        %534 = vadd.xlane.f32.xlu0 %v485
        %v535 = vpop.xlane.xlu0 %534
        %536 = vadd.xlane.f32.xlu0 %v486
        %v537 = vpop.xlane.xlu0 %536
        %538 = vadd.xlane.f32.xlu0 %v487
        %v539 = vpop.xlane.xlu0 %538
        %540 = vadd.xlane.f32.xlu0 %v488
        %v541 = vpop.xlane.xlu0 %540
        %542 = vadd.xlane.f32.xlu0 %v489
        %v543 = vpop.xlane.xlu0 %542
        %544 = vadd.xlane.f32.xlu0 %v490
        %v545 = vpop.xlane.xlu0 %544
        %546 = vadd.xlane.f32.xlu0 %v491
        %v547 = vpop.xlane.xlu0 %546
        %548 = vadd.xlane.f32.xlu0 %v492
        %v549 = vpop.xlane.xlu0 %548
        %550 = vadd.xlane.f32.xlu0 %v493
        %v551 = vpop.xlane.xlu0 %550
        %552 = vadd.xlane.f32.xlu0 %v494
        %v553 = vpop.xlane.xlu0 %552
        %554 = vadd.xlane.f32.xlu0 %v495
        %v555 = vpop.xlane.xlu0 %554
        %556 = vadd.xlane.f32.xlu0 %v496
        %v557 = vpop.xlane.xlu0 %556
        %v558 = vmul.f32 %v481, %v481
        %v559 = vmul.f32 %v482, %v482
        %v560 = vmul.f32 %v483, %v483
        %v561 = vmul.f32 %v484, %v484
        %v562 = vmul.f32 %v485, %v485
        %v563 = vmul.f32 %v486, %v486
        %v564 = vmul.f32 %v487, %v487
        %v565 = vmul.f32 %v488, %v488
        %v566 = vmul.f32 %v489, %v489
        %v567 = vmul.f32 %v490, %v490
        %v568 = vmul.f32 %v491, %v491
        %v569 = vmul.f32 %v492, %v492
        %v570 = vmul.f32 %v493, %v493
        %v571 = vmul.f32 %v494, %v494
        %v572 = vmul.f32 %v495, %v495
        %v573 = vmul.f32 %v496, %v496
        %574 = vadd.xlane.f32.xlu0 %v558
        %v575 = vpop.xlane.xlu0 %574
        %576 = vadd.xlane.f32.xlu0 %v559
        %v577 = vpop.xlane.xlu0 %576
        %578 = vadd.xlane.f32.xlu0 %v560
        %v579 = vpop.xlane.xlu0 %578
        %580 = vadd.xlane.f32.xlu0 %v561
        %v581 = vpop.xlane.xlu0 %580
        %582 = vadd.xlane.f32.xlu0 %v562
        %v583 = vpop.xlane.xlu0 %582
        %584 = vadd.xlane.f32.xlu0 %v563
        %v585 = vpop.xlane.xlu0 %584
        %586 = vadd.xlane.f32.xlu0 %v564
        %v587 = vpop.xlane.xlu0 %586
        %588 = vadd.xlane.f32.xlu0 %v565
        %v589 = vpop.xlane.xlu0 %588
        %590 = vadd.xlane.f32.xlu0 %v566
        %v591 = vpop.xlane.xlu0 %590
        %592 = vadd.xlane.f32.xlu0 %v567
        %v593 = vpop.xlane.xlu0 %592
        %594 = vadd.xlane.f32.xlu0 %v568
        %v595 = vpop.xlane.xlu0 %594
        %596 = vadd.xlane.f32.xlu0 %v569
        %v597 = vpop.xlane.xlu0 %596
        %598 = vadd.xlane.f32.xlu0 %v570
        %v599 = vpop.xlane.xlu0 %598
        %600 = vadd.xlane.f32.xlu0 %v571
        %v601 = vpop.xlane.xlu0 %600
        %602 = vadd.xlane.f32.xlu0 %v572
        %v603 = vpop.xlane.xlu0 %602
        %604 = vadd.xlane.f32.xlu0 %v573
        %v605 = vpop.xlane.xlu0 %604
        %v606 = vmul.f32 %v527, 0.0078125
        %v607 = vmul.f32 %v529, 0.0078125
        %v608 = vmul.f32 %v531, 0.0078125
        %v609 = vmul.f32 %v533, 0.0078125
        %v610 = vmul.f32 %v535, 0.0078125
        %v611 = vmul.f32 %v537, 0.0078125
        %v612 = vmul.f32 %v539, 0.0078125
        %v613 = vmul.f32 %v541, 0.0078125
        %v614 = vmul.f32 %v543, 0.0078125
        %v615 = vmul.f32 %v545, 0.0078125
        %v616 = vmul.f32 %v547, 0.0078125
        %v617 = vmul.f32 %v549, 0.0078125
        %v618 = vmul.f32 %v551, 0.0078125
        %v619 = vmul.f32 %v553, 0.0078125
        %v620 = vmul.f32 %v555, 0.0078125
        %v621 = vmul.f32 %v557, 0.0078125
        %v622 = vmul.f32 %v575, 0.0078125
        %v623 = vmul.f32 %v577, 0.0078125
        %v624 = vmul.f32 %v579, 0.0078125
        %v625 = vmul.f32 %v581, 0.0078125
        %v626 = vmul.f32 %v583, 0.0078125
        %v627 = vmul.f32 %v585, 0.0078125
        %v628 = vmul.f32 %v587, 0.0078125
        %v629 = vmul.f32 %v589, 0.0078125
        %v630 = vmul.f32 %v591, 0.0078125
        %v631 = vmul.f32 %v593, 0.0078125
        %v632 = vmul.f32 %v595, 0.0078125
        %v633 = vmul.f32 %v597, 0.0078125
        %v634 = vmul.f32 %v599, 0.0078125
        %v635 = vmul.f32 %v601, 0.0078125
        %v636 = vmul.f32 %v603, 0.0078125
        %v637 = vmul.f32 %v605, 0.0078125
        %v638 = vmul.f32 %v606, %v606
        %v639 = vmul.f32 %v607, %v607
        %v640 = vmul.f32 %v608, %v608
        %v641 = vmul.f32 %v609, %v609
        %v642 = vmul.f32 %v610, %v610
        %v643 = vmul.f32 %v611, %v611
        %v644 = vmul.f32 %v612, %v612
        %v645 = vmul.f32 %v613, %v613
        %v646 = vmul.f32 %v614, %v614
        %v647 = vmul.f32 %v615, %v615
        %v648 = vmul.f32 %v616, %v616
        %v649 = vmul.f32 %v617, %v617
        %v650 = vmul.f32 %v618, %v618
        %v651 = vmul.f32 %v619, %v619
        %v652 = vmul.f32 %v620, %v620
        %v653 = vmul.f32 %v621, %v621
        %v654 = vsub.f32 %v622, %v638
        %v655 = vsub.f32 %v623, %v639
        %v656 = vsub.f32 %v624, %v640
        %v657 = vsub.f32 %v625, %v641
        %v658 = vsub.f32 %v626, %v642
        %v659 = vsub.f32 %v627, %v643
        %v660 = vsub.f32 %v628, %v644
        %v661 = vsub.f32 %v629, %v645
        %v662 = vsub.f32 %v630, %v646
        %v663 = vsub.f32 %v631, %v647
        %v664 = vsub.f32 %v632, %v648
        %v665 = vsub.f32 %v633, %v649
        %v666 = vsub.f32 %v634, %v650
        %v667 = vsub.f32 %v635, %v651
        %v668 = vsub.f32 %v636, %v652
        %v669 = vsub.f32 %v637, %v653
        %v670 = vsub.f32 %v481, %v606
        %v671 = vsub.f32 %v482, %v607
        %v672 = vsub.f32 %v483, %v608
        %v673 = vsub.f32 %v484, %v609
        %v674 = vsub.f32 %v485, %v610
        %v675 = vsub.f32 %v486, %v611
        %v676 = vsub.f32 %v487, %v612
        %v677 = vsub.f32 %v488, %v613
        %v678 = vsub.f32 %v489, %v614
        %v679 = vsub.f32 %v490, %v615
        %v680 = vsub.f32 %v491, %v616
        %v681 = vsub.f32 %v492, %v617
        %v682 = vsub.f32 %v493, %v618
        %v683 = vsub.f32 %v494, %v619
        %v684 = vsub.f32 %v495, %v620
        %v685 = vsub.f32 %v496, %v621
        %v686 = vadd.f32 %v654, 1e-05
        %v687 = vadd.f32 %v655, 1e-05
        %v688 = vadd.f32 %v656, 1e-05
        %v689 = vadd.f32 %v657, 1e-05
        %v690 = vadd.f32 %v658, 1e-05
        %v691 = vadd.f32 %v659, 1e-05
        %v692 = vadd.f32 %v660, 1e-05
        %v693 = vadd.f32 %v661, 1e-05
        %v694 = vadd.f32 %v662, 1e-05
        %v695 = vadd.f32 %v663, 1e-05
        %v696 = vadd.f32 %v664, 1e-05
        %v697 = vadd.f32 %v665, 1e-05
        %v698 = vadd.f32 %v666, 1e-05
        %v699 = vadd.f32 %v667, 1e-05
        %v700 = vadd.f32 %v668, 1e-05
        %v701 = vadd.f32 %v669, 1e-05
        %v702 = vrsqrt.pop %v686
        %v703 = vrsqrt.pop %v687
        %v704 = vrsqrt.pop %v688
        %v705 = vrsqrt.pop %v689
        %v706 = vrsqrt.pop %v690
        %v707 = vrsqrt.pop %v691
        %v708 = vrsqrt.pop %v692
        %v709 = vrsqrt.pop %v693
        %v710 = vrsqrt.pop %v694
        %v711 = vrsqrt.pop %v695
        %v712 = vrsqrt.pop %v696
        %v713 = vrsqrt.pop %v697
        %v714 = vrsqrt.pop %v698
        %v715 = vrsqrt.pop %v699
        %v716 = vrsqrt.pop %v700
        %v717 = vrsqrt.pop %v701
        %v718 = vmul.f32 %v670, %v702
        %v719 = vmul.f32 %v671, %v703
        %v720 = vmul.f32 %v672, %v704
        %v721 = vmul.f32 %v673, %v705
        %v722 = vmul.f32 %v674, %v706
        %v723 = vmul.f32 %v675, %v707
        %v724 = vmul.f32 %v676, %v708
        %v725 = vmul.f32 %v677, %v709
        %v726 = vmul.f32 %v678, %v710
        %v727 = vmul.f32 %v679, %v711
        %v728 = vmul.f32 %v680, %v712
        %v729 = vmul.f32 %v681, %v713
        %v730 = vmul.f32 %v682, %v714
        %v731 = vmul.f32 %v683, %v715
        %v732 = vmul.f32 %v684, %v716
        %v733 = vmul.f32 %v685, %v717
        %v734 = vpack.c.bf16 %v719, %v718
        %v735 = vpack.c.bf16 %v721, %v720
        %v736 = vpack.c.bf16 %v723, %v722
        %v737 = vpack.c.bf16 %v725, %v724
        %v738 = vpack.c.bf16 %v727, %v726
        %v739 = vpack.c.bf16 %v729, %v728
        %v740 = vpack.c.bf16 %v731, %v730
        %v741 = vpack.c.bf16 %v733, %v732
        %742 = vadd.xlane.f32.xlu0 %v497
        %v743 = vpop.xlane.xlu0 %742
        %744 = vadd.xlane.f32.xlu0 %v498
        %v745 = vpop.xlane.xlu0 %744
        %v746 = vmul.f32 %v497, %v497
        %v747 = vmul.f32 %v498, %v498
        %748 = vadd.xlane.f32.xlu0 %v746
        %v749 = vpop.xlane.xlu0 %748
        %750 = vadd.xlane.f32.xlu0 %v747
        %v751 = vpop.xlane.xlu0 %750
        %v752 = vmul.f32 %v743, 0.0078125
        %v753 = vmul.f32 %v745, 0.0078125
        %v754 = vmul.f32 %v749, 0.0078125
        %v755 = vmul.f32 %v751, 0.0078125
        %v756 = vmul.f32 %v752, %v752
        %v757 = vmul.f32 %v753, %v753
        %v758 = vsub.f32 %v754, %v756
        %v759 = vsub.f32 %v755, %v757
        %v760 = vsub.f32 %v497, %v752
        %v761 = vsub.f32 %v498, %v753
        %v762 = vadd.f32 %v758, 1e-05
        %v763 = vadd.f32 %v759, 1e-05
        %v764 = vrsqrt.pop %v762
        %v765 = vrsqrt.pop %v763
        %v766 = vmul.f32 %v760, %v764
        %v767 = vmul.f32 %v761, %v765
        %v768 = vpack.c.bf16 %v767, %v766
        %v769 = vld [vmem:[#allocation8] sm:$0xff]
        %v770 = vld [vmem:[#allocation8 + $0x8] sm:$0xff]
        %v771 = vld [vmem:[#allocation8 + $0x10] sm:$0xff]
        %v772 = vld [vmem:[#allocation8 + $0x18] sm:$0xff]
        %v773 = vld [vmem:[#allocation8 + $0x20] sm:$0xff]
        %v774 = vld [vmem:[#allocation8 + $0x28] sm:$0xff]
        %v775 = vld [vmem:[#allocation8 + $0x30] sm:$0xff]
        %v776 = vld [vmem:[#allocation8 + $0x38] sm:$0xff]
        %v777 = vld [vmem:[#allocation8 + $0x40] sm:$0xff]
        %v778 = vld [vmem:[#allocation8 + $0x48] sm:$0xff]
        %v779 = vld [vmem:[#allocation8 + $0x50] sm:$0xff]
        %v780 = vld [vmem:[#allocation8 + $0x58] sm:$0xff]
        %v781 = vld [vmem:[#allocation8 + $0x60] sm:$0xff]
        %v782 = vld [vmem:[#allocation8 + $0x68] sm:$0xff]
        %v783 = vld [vmem:[#allocation8 + $0x70] sm:$0xff]
        %v784 = vld [vmem:[#allocation8 + $0x78] sm:$0xff]
        %v785 = vld [vmem:[#allocation10] sm:$0x3]
        %v787 = vlaneseq
        %v788 = vshrl.u32 %v787, 7
        %v789 = vsub.s32 0, %v788
        %v790 = vrot.slane %v785, %v789
        %v791 = vlaneseq
        %v792 = vshrl.u32 %v791, 7
        %v793 = vsub.s32 1, %v792
        %v794 = vrot.slane %v785, %v793
        %v813 = vunpack.c.l.b16 %v769
        %v814 = vunpack.c.h.b16 %v769
        %v815 = vunpack.c.l.b16 %v770
        %v816 = vunpack.c.h.b16 %v770
        %v817 = vunpack.c.l.b16 %v771
        %v818 = vunpack.c.h.b16 %v771
        %v819 = vunpack.c.l.b16 %v772
        %v820 = vunpack.c.h.b16 %v772
        %v821 = vunpack.c.l.b16 %v773
        %v822 = vunpack.c.h.b16 %v773
        %v823 = vunpack.c.l.b16 %v774
        %v824 = vunpack.c.h.b16 %v774
        %v825 = vunpack.c.l.b16 %v775
        %v826 = vunpack.c.h.b16 %v775
        %v827 = vunpack.c.l.b16 %v776
        %v828 = vunpack.c.h.b16 %v776
        %v829 = vunpack.c.l.b16 %v777
        %v830 = vunpack.c.h.b16 %v777
        %v831 = vunpack.c.l.b16 %v778
        %v832 = vunpack.c.h.b16 %v778
        %v833 = vunpack.c.l.b16 %v779
        %v834 = vunpack.c.h.b16 %v779
        %v835 = vunpack.c.l.b16 %v780
        %v836 = vunpack.c.h.b16 %v780
        %v837 = vunpack.c.l.b16 %v781
        %v838 = vunpack.c.h.b16 %v781
        %v839 = vunpack.c.l.b16 %v782
        %v840 = vunpack.c.h.b16 %v782
        %v841 = vunpack.c.l.b16 %v783
        %v842 = vunpack.c.h.b16 %v783
        %v843 = vunpack.c.l.b16 %v784
        %v844 = vunpack.c.h.b16 %v784
        %v845 = vpack.c.b16 %v815, %v813
        %v846 = vpack.c.b16 %v816, %v814
        %v847 = vpack.c.b16 %v819, %v817
        %v848 = vpack.c.b16 %v820, %v818
        %v849 = vpack.c.b16 %v823, %v821
        %v850 = vpack.c.b16 %v824, %v822
        %v851 = vpack.c.b16 %v827, %v825
        %v852 = vpack.c.b16 %v828, %v826
        %v853 = vpack.c.b16 %v831, %v829
        %v854 = vpack.c.b16 %v832, %v830
        %v855 = vpack.c.b16 %v835, %v833
        %v856 = vpack.c.b16 %v836, %v834
        %v857 = vpack.c.b16 %v839, %v837
        %v858 = vpack.c.b16 %v840, %v838
        %v859 = vpack.c.b16 %v843, %v841
        %v860 = vpack.c.b16 %v844, %v842
        %877 = vmatprep.subr.bf16.mxu0 %v860
        %878 = vmatpush1.bf16.msra.mxu0 %v859
        %879 = vmatprep.subr.bf16.mxu0 %v858
        %880 = vmatpush1.bf16.msra.mxu0 %v857
        %881 = vmatprep.subr.bf16.mxu0 %v856
        %882 = vmatpush1.bf16.msra.mxu0 %v855
        %883 = vmatprep.subr.bf16.mxu0 %v854
        %884 = vmatpush1.bf16.msra.mxu0 %v853
        %885 = vmatprep.subr.bf16.mxu0 %v852
        %886 = vmatpush1.bf16.msra.mxu0 %v851
        %887 = vmatprep.subr.bf16.mxu0 %v850
        %888 = vmatpush1.bf16.msra.mxu0 %v849
        %889 = vmatprep.subr.bf16.mxu0 %v848
        %890 = vmatpush1.bf16.msra.mxu0 %v847
        %891 = vmatprep.subr.bf16.mxu0 %v846
        %892 = vmatpush1.bf16.msra.mxu0 %v845
        %893 = vmatprep.subr.bf16.mxu0 0
        %894 = vmatpush2.bf16.msra.mxu0 0
        %895 = vmatprep.subr.bf16.mxu0 0
        %896 = vmatpush2.bf16.msra.mxu0 0
        %897 = vmatprep.subr.bf16.mxu0 0
        %898 = vmatpush2.bf16.msra.mxu0 0
        %899 = vmatprep.subr.bf16.mxu0 0
        %900 = vmatpush2.bf16.msra.mxu0 0
        %901 = vmatprep.subr.bf16.mxu0 0
        %902 = vmatpush2.bf16.msra.mxu0 0
        %903 = vmatprep.subr.bf16.mxu0 0
        %904 = vmatpush2.bf16.msra.mxu0 0
        %905 = vmatprep.subr.bf16.mxu0 0
        %906 = vmatpush2.bf16.msra.mxu0 0
        %907 = vmatprep.subr.bf16.mxu0 0
        %908 = vmatpush2.bf16.msra.mxu0 0
        %909 = vmatprep.mubr.bf16.mxu0 0
        %910 = vmatmul.mubr.bf16.gmra.mxu0 %v525
        %v911 = vpop.f32.mrf.mxu0
        %v912 = vpop.f32.mrf.mxu0
        %v913 = vpop.f32.mrf.mxu0
        %v914 = vadd.f32 %v790, %v913
        %v915 = vpop.f32.mrf.mxu0
        %v916 = vadd.f32 %v794, %v915
        %917 = vmatprep.mubr.bf16.mxu0 0
        %918 = vmatmul.mubr.bf16.gmra.mxu0 %v734
        %v919 = vpop.f32.mrf.mxu0
        %v920 = vadd.f32 %v790, %v919
        %v921 = vpop.f32.mrf.mxu0
        %v922 = vadd.f32 %v794, %v921
        %v923 = vpop.f32.mrf.mxu0
        %v924 = vadd.f32 %v790, %v923
        %v925 = vpop.f32.mrf.mxu0
        %v926 = vadd.f32 %v794, %v925
        %927 = vmatprep.mubr.bf16.mxu0 0
        %928 = vmatmul.mubr.bf16.gmra.mxu0 %v735
        %v929 = vpop.f32.mrf.mxu0
        %v930 = vadd.f32 %v790, %v929
        %v931 = vpop.f32.mrf.mxu0
        %v932 = vadd.f32 %v794, %v931
        %v933 = vpop.f32.mrf.mxu0
        %v934 = vadd.f32 %v790, %v933
        %v935 = vpop.f32.mrf.mxu0
        %v936 = vadd.f32 %v794, %v935
        %937 = vmatprep.mubr.bf16.mxu0 0
        %938 = vmatmul.mubr.bf16.gmra.mxu0 %v736
        %v939 = vpop.f32.mrf.mxu0
        %v940 = vadd.f32 %v790, %v939
        %v941 = vpop.f32.mrf.mxu0
        %v942 = vadd.f32 %v794, %v941
        %v943 = vpop.f32.mrf.mxu0
        %v944 = vadd.f32 %v790, %v943
        %v945 = vpop.f32.mrf.mxu0
        %v946 = vadd.f32 %v794, %v945
        %947 = vmatprep.mubr.bf16.mxu0 0
        %948 = vmatmul.mubr.bf16.gmra.mxu0 %v737
        %v949 = vpop.f32.mrf.mxu0
        %v950 = vadd.f32 %v790, %v949
        %v951 = vpop.f32.mrf.mxu0
        %v952 = vadd.f32 %v794, %v951
        %v953 = vpop.f32.mrf.mxu0
        %v954 = vadd.f32 %v790, %v953
        %v955 = vpop.f32.mrf.mxu0
        %v956 = vadd.f32 %v794, %v955
        %957 = vmatprep.mubr.bf16.mxu0 0
        %958 = vmatmul.mubr.bf16.gmra.mxu0 %v738
        %v959 = vpop.f32.mrf.mxu0
        %v960 = vadd.f32 %v790, %v959
        %v961 = vpop.f32.mrf.mxu0
        %v962 = vadd.f32 %v794, %v961
        %v963 = vpop.f32.mrf.mxu0
        %v964 = vadd.f32 %v790, %v963
        %v965 = vpop.f32.mrf.mxu0
        %v966 = vadd.f32 %v794, %v965
        %967 = vmatprep.mubr.bf16.mxu0 0
        %968 = vmatmul.mubr.bf16.gmra.mxu0 %v739
        %v969 = vpop.f32.mrf.mxu0
        %v970 = vadd.f32 %v790, %v969
        %v971 = vpop.f32.mrf.mxu0
        %v972 = vadd.f32 %v794, %v971
        %v973 = vpop.f32.mrf.mxu0
        %v974 = vadd.f32 %v790, %v973
        %v975 = vpop.f32.mrf.mxu0
        %v976 = vadd.f32 %v794, %v975
        %977 = vmatprep.mubr.bf16.mxu0 0
        %978 = vmatmul.mubr.bf16.gmra.mxu0 %v740
        %v979 = vpop.f32.mrf.mxu0
        %v980 = vadd.f32 %v790, %v979
        %v981 = vpop.f32.mrf.mxu0
        %v982 = vadd.f32 %v794, %v981
        %v983 = vpop.f32.mrf.mxu0
        %v984 = vadd.f32 %v790, %v983
        %v985 = vpop.f32.mrf.mxu0
        %v986 = vadd.f32 %v794, %v985
        %987 = vmatprep.mubr.bf16.mxu0 0
        %988 = vmatmul.mubr.bf16.gmra.mxu0 %v741
        %v989 = vpop.f32.mrf.mxu0
        %v990 = vadd.f32 %v790, %v989
        %v991 = vpop.f32.mrf.mxu0
        %v992 = vadd.f32 %v794, %v991
        %v993 = vpop.f32.mrf.mxu0
        %v994 = vadd.f32 %v790, %v993
        %v995 = vpop.f32.mrf.mxu0
        %v996 = vadd.f32 %v794, %v995
        %997 = vmatprep.mubr.bf16.mxu0 0
        %998 = vmatmul.mubr.bf16.gmra.mxu0 %v768
        %v999 = vpop.f32.mrf.mxu0
        %v1000 = vadd.f32 %v790, %v999
        %v1001 = vpop.f32.mrf.mxu0
        %v1002 = vadd.f32 %v794, %v1001
        %v1003 = vpop.f32.mrf.mxu0
        %v1004 = vpop.f32.mrf.mxu0
        %1005 = vdwg.mxu0
        %v1006 = vxor.u32 %v916, 2147483648
        %v1007 = vxor.u32 %v922, 2147483648
        %v1008 = vxor.u32 %v926, 2147483648
        %v1009 = vxor.u32 %v932, 2147483648
        %v1010 = vxor.u32 %v936, 2147483648
        %v1011 = vxor.u32 %v942, 2147483648
        %v1012 = vxor.u32 %v946, 2147483648
        %v1013 = vxor.u32 %v952, 2147483648
        %v1014 = vxor.u32 %v956, 2147483648
        %v1015 = vxor.u32 %v962, 2147483648
        %v1016 = vxor.u32 %v966, 2147483648
        %v1017 = vxor.u32 %v972, 2147483648
        %v1018 = vxor.u32 %v976, 2147483648
        %v1019 = vxor.u32 %v982, 2147483648
        %v1020 = vxor.u32 %v986, 2147483648
        %v1021 = vxor.u32 %v992, 2147483648
        %v1022 = vxor.u32 %v996, 2147483648
        %v1023 = vxor.u32 %v1002, 2147483648
        %v1024 = vmul.f32 %v1006, 1.442695
        %v1025 = vpow.pop %v1024
        %v1026 = vmul.f32 %v1007, 1.442695
        %v1027 = vpow.pop %v1026
        %v1028 = vmul.f32 %v1008, 1.442695
        %v1029 = vpow.pop %v1028
        %v1030 = vmul.f32 %v1009, 1.442695
        %v1031 = vpow.pop %v1030
        %v1032 = vmul.f32 %v1010, 1.442695
        %v1033 = vpow.pop %v1032
        %v1034 = vmul.f32 %v1011, 1.442695
        %v1035 = vpow.pop %v1034
        %v1036 = vmul.f32 %v1012, 1.442695
        %v1037 = vpow.pop %v1036
        %v1038 = vmul.f32 %v1013, 1.442695
        %v1039 = vpow.pop %v1038
        %v1040 = vmul.f32 %v1014, 1.442695
        %v1041 = vpow.pop %v1040
        %v1042 = vmul.f32 %v1015, 1.442695
        %v1043 = vpow.pop %v1042
        %v1044 = vmul.f32 %v1016, 1.442695
        %v1045 = vpow.pop %v1044
        %v1046 = vmul.f32 %v1017, 1.442695
        %v1047 = vpow.pop %v1046
        %v1048 = vmul.f32 %v1018, 1.442695
        %v1049 = vpow.pop %v1048
        %v1050 = vmul.f32 %v1019, 1.442695
        %v1051 = vpow.pop %v1050
        %v1052 = vmul.f32 %v1020, 1.442695
        %v1053 = vpow.pop %v1052
        %v1054 = vmul.f32 %v1021, 1.442695
        %v1055 = vpow.pop %v1054
        %v1056 = vmul.f32 %v1022, 1.442695
        %v1057 = vpow.pop %v1056
        %v1058 = vmul.f32 %v1023, 1.442695
        %v1059 = vpow.pop %v1058
        %v1060 = vadd.f32 %v1025, 1.0
        %v1061 = vadd.f32 %v1027, 1.0
        %v1062 = vadd.f32 %v1029, 1.0
        %v1063 = vadd.f32 %v1031, 1.0
        %v1064 = vadd.f32 %v1033, 1.0
        %v1065 = vadd.f32 %v1035, 1.0
        %v1066 = vadd.f32 %v1037, 1.0
        %v1067 = vadd.f32 %v1039, 1.0
        %v1068 = vadd.f32 %v1041, 1.0
        %v1069 = vadd.f32 %v1043, 1.0
        %v1070 = vadd.f32 %v1045, 1.0
        %v1071 = vadd.f32 %v1047, 1.0
        %v1072 = vadd.f32 %v1049, 1.0
        %v1073 = vadd.f32 %v1051, 1.0
        %v1074 = vadd.f32 %v1053, 1.0
        %v1075 = vadd.f32 %v1055, 1.0
        %v1076 = vadd.f32 %v1057, 1.0
        %v1077 = vadd.f32 %v1059, 1.0
        %v1078 = vrcp.pop %v1060
        %v1079 = vmul.f32 1.0, %v1078
        %v1080 = vrcp.pop %v1061
        %v1081 = vmul.f32 1.0, %v1080
        %v1082 = vrcp.pop %v1062
        %v1083 = vmul.f32 1.0, %v1082
        %v1084 = vrcp.pop %v1063
        %v1085 = vmul.f32 1.0, %v1084
        %v1086 = vrcp.pop %v1064
        %v1087 = vmul.f32 1.0, %v1086
        %v1088 = vrcp.pop %v1065
        %v1089 = vmul.f32 1.0, %v1088
        %v1090 = vrcp.pop %v1066
        %v1091 = vmul.f32 1.0, %v1090
        %v1092 = vrcp.pop %v1067
        %v1093 = vmul.f32 1.0, %v1092
        %v1094 = vrcp.pop %v1068
        %v1095 = vmul.f32 1.0, %v1094
        %v1096 = vrcp.pop %v1069
        %v1097 = vmul.f32 1.0, %v1096
        %v1098 = vrcp.pop %v1070
        %v1099 = vmul.f32 1.0, %v1098
        %v1100 = vrcp.pop %v1071
        %v1101 = vmul.f32 1.0, %v1100
        %v1102 = vrcp.pop %v1072
        %v1103 = vmul.f32 1.0, %v1102
        %v1104 = vrcp.pop %v1073
        %v1105 = vmul.f32 1.0, %v1104
        %v1106 = vrcp.pop %v1074
        %v1107 = vmul.f32 1.0, %v1106
        %v1108 = vrcp.pop %v1075
        %v1109 = vmul.f32 1.0, %v1108
        %v1110 = vrcp.pop %v1076
        %v1111 = vmul.f32 1.0, %v1110
        %v1112 = vrcp.pop %v1077
        %v1113 = vmul.f32 1.0, %v1112
        %v1114 = vmul.f32 %v914, %v1079
        %v1115 = vmul.f32 %v920, %v1081
        %v1116 = vmul.f32 %v924, %v1083
        %v1117 = vmul.f32 %v930, %v1085
        %v1118 = vmul.f32 %v934, %v1087
        %v1119 = vmul.f32 %v940, %v1089
        %v1120 = vmul.f32 %v944, %v1091
        %v1121 = vmul.f32 %v950, %v1093
        %v1122 = vmul.f32 %v954, %v1095
        %v1123 = vmul.f32 %v960, %v1097
        %v1124 = vmul.f32 %v964, %v1099
        %v1125 = vmul.f32 %v970, %v1101
        %v1126 = vmul.f32 %v974, %v1103
        %v1127 = vmul.f32 %v980, %v1105
        %v1128 = vmul.f32 %v984, %v1107
        %v1129 = vmul.f32 %v990, %v1109
        %v1130 = vmul.f32 %v994, %v1111
        %v1131 = vmul.f32 %v1000, %v1113
        %v1132 = vlaneseq
        %v1133 = vshrl.u32 %v1132, 7
        %v1134 = vadd.s32 %v1133, 8
        %v1135 = vadd.s32 %v1133, 16
        %v1136 = vadd.s32 %v1133, 24
        %v1137 = vadd.s32 %v1133, 32
        %v1138 = vadd.s32 %v1133, 40
        %v1139 = vadd.s32 %v1133, 48
        %v1140 = vadd.s32 %v1133, 56
        %v1141 = vadd.s32 %v1133, 64
        %v1142 = vadd.s32 %v1133, 72
        %v1143 = vadd.s32 %v1133, 80
        %v1144 = vadd.s32 %v1133, 88
        %v1145 = vadd.s32 %v1133, 96
        %v1146 = vadd.s32 %v1133, 104
        %v1147 = vadd.s32 %v1133, 112
        %v1148 = vadd.s32 %v1133, 120
        %v1149 = vadd.s32 %v1133, 128
        %v1150 = vadd.s32 %v1133, 136
        %v1151 = vadd.s32 %v1133, 144
        %vm1152 = vcmp.ge.s32.totalorder %v1134, 16
        %vm1153 = vcmp.ge.s32.totalorder %v1135, 16
        %vm1154 = vcmp.ge.s32.totalorder %v1136, 16
        %vm1155 = vcmp.ge.s32.totalorder %v1137, 16
        %vm1156 = vcmp.ge.s32.totalorder %v1138, 16
        %vm1157 = vcmp.ge.s32.totalorder %v1139, 16
        %vm1158 = vcmp.ge.s32.totalorder %v1140, 16
        %vm1159 = vcmp.ge.s32.totalorder %v1141, 16
        %vm1160 = vcmp.ge.s32.totalorder %v1142, 16
        %vm1161 = vcmp.ge.s32.totalorder %v1143, 16
        %vm1162 = vcmp.ge.s32.totalorder %v1144, 16
        %vm1163 = vcmp.ge.s32.totalorder %v1145, 16
        %vm1164 = vcmp.ge.s32.totalorder %v1146, 16
        %vm1165 = vcmp.ge.s32.totalorder %v1147, 16
        %vm1166 = vcmp.ge.s32.totalorder %v1148, 16
        %vm1167 = vcmp.ge.s32.totalorder %v1149, 16
        %vm1168 = vcmp.ge.s32.totalorder %v1150, 16
        %vm1169 = vcmp.ge.s32.totalorder %v1151, 16
        %p1170 = scmp.gt.s32.totalorder %s33, 0
        %s1171 = scalar_select %p1170, 1, 0
        %v1172 = vstv %s1171
        %vm1173 = vcmp.eq.s32.totalorder %v1172, 1
        %vm1174 = vmor %vm1152, %vm1173
        %vm1175 = vmor %vm1153, %vm1173
        %vm1176 = vmor %vm1154, %vm1173
        %vm1177 = vmor %vm1155, %vm1173
        %vm1178 = vmor %vm1156, %vm1173
        %vm1179 = vmor %vm1157, %vm1173
        %vm1180 = vmor %vm1158, %vm1173
        %vm1181 = vmor %vm1159, %vm1173
        %vm1182 = vmor %vm1160, %vm1173
        %vm1183 = vmor %vm1161, %vm1173
        %vm1184 = vmor %vm1162, %vm1173
        %vm1185 = vmor %vm1163, %vm1173
        %vm1186 = vmor %vm1164, %vm1173
        %vm1187 = vmor %vm1165, %vm1173
        %vm1188 = vmor %vm1166, %vm1173
        %vm1189 = vmor %vm1167, %vm1173
        %vm1190 = vmor %vm1168, %vm1173
        %vm1191 = vmor %vm1169, %vm1173
        %vm1192 = vcmp.lt.s32.totalorder %v1134, 144
        %vm1193 = vcmp.lt.s32.totalorder %v1135, 144
        %vm1194 = vcmp.lt.s32.totalorder %v1136, 144
        %vm1195 = vcmp.lt.s32.totalorder %v1137, 144
        %vm1196 = vcmp.lt.s32.totalorder %v1138, 144
        %vm1197 = vcmp.lt.s32.totalorder %v1139, 144
        %vm1198 = vcmp.lt.s32.totalorder %v1140, 144
        %vm1199 = vcmp.lt.s32.totalorder %v1141, 144
        %vm1200 = vcmp.lt.s32.totalorder %v1142, 144
        %vm1201 = vcmp.lt.s32.totalorder %v1143, 144
        %vm1202 = vcmp.lt.s32.totalorder %v1144, 144
        %vm1203 = vcmp.lt.s32.totalorder %v1145, 144
        %vm1204 = vcmp.lt.s32.totalorder %v1146, 144
        %vm1205 = vcmp.lt.s32.totalorder %v1147, 144
        %vm1206 = vcmp.lt.s32.totalorder %v1148, 144
        %vm1207 = vcmp.lt.s32.totalorder %v1149, 144
        %vm1208 = vcmp.lt.s32.totalorder %v1150, 144
        %vm1209 = vcmp.lt.s32.totalorder %v1151, 144
        %p1210 = scmp.lt.s32.totalorder %s33, 1
        %s1211 = scalar_select %p1210, 1, 0
        %v1212 = vstv %s1211
        %vm1213 = vcmp.eq.s32.totalorder %v1212, 1
        %vm1214 = vmor %vm1192, %vm1213
        %vm1215 = vmor %vm1193, %vm1213
        %vm1216 = vmor %vm1194, %vm1213
        %vm1217 = vmor %vm1195, %vm1213
        %vm1218 = vmor %vm1196, %vm1213
        %vm1219 = vmor %vm1197, %vm1213
        %vm1220 = vmor %vm1198, %vm1213
        %vm1221 = vmor %vm1199, %vm1213
        %vm1222 = vmor %vm1200, %vm1213
        %vm1223 = vmor %vm1201, %vm1213
        %vm1224 = vmor %vm1202, %vm1213
        %vm1225 = vmor %vm1203, %vm1213
        %vm1226 = vmor %vm1204, %vm1213
        %vm1227 = vmor %vm1205, %vm1213
        %vm1228 = vmor %vm1206, %vm1213
        %vm1229 = vmor %vm1207, %vm1213
        %vm1230 = vmor %vm1208, %vm1213
        %vm1231 = vmor %vm1209, %vm1213
        %vm1232 = vmand %vm1174, %vm1214
        %vm1233 = vmand %vm1175, %vm1215
        %vm1234 = vmand %vm1176, %vm1216
        %vm1235 = vmand %vm1177, %vm1217
        %vm1236 = vmand %vm1178, %vm1218
        %vm1237 = vmand %vm1179, %vm1219
        %vm1238 = vmand %vm1180, %vm1220
        %vm1239 = vmand %vm1181, %vm1221
        %vm1240 = vmand %vm1182, %vm1222
        %vm1241 = vmand %vm1183, %vm1223
        %vm1242 = vmand %vm1184, %vm1224
        %vm1243 = vmand %vm1185, %vm1225
        %vm1244 = vmand %vm1186, %vm1226
        %vm1245 = vmand %vm1187, %vm1227
        %vm1246 = vmand %vm1188, %vm1228
        %vm1247 = vmand %vm1189, %vm1229
        %vm1248 = vmand %vm1190, %vm1230
        %vm1249 = vmand %vm1191, %vm1231
        %v1250 = vsel %vm1232, 1, 0
        %v1251 = vsel %vm1233, 1, 0
        %v1252 = vsel %vm1234, 1, 0
        %v1253 = vsel %vm1235, 1, 0
        %v1254 = vsel %vm1236, 1, 0
        %v1255 = vsel %vm1237, 1, 0
        %v1256 = vsel %vm1238, 1, 0
        %v1257 = vsel %vm1239, 1, 0
        %v1258 = vsel %vm1240, 1, 0
        %v1259 = vsel %vm1241, 1, 0
        %v1260 = vsel %vm1242, 1, 0
        %v1261 = vsel %vm1243, 1, 0
        %v1262 = vsel %vm1244, 1, 0
        %v1263 = vsel %vm1245, 1, 0
        %v1264 = vsel %vm1246, 1, 0
        %v1265 = vsel %vm1247, 1, 0
        %v1266 = vsel %vm1248, 1, 0
        %v1267 = vsel %vm1249, 1, 0
        %vm1268 = vcmp.eq.s32.totalorder %v1250, 1
        %vm1269 = vcmp.eq.s32.totalorder %v1251, 1
        %vm1270 = vcmp.eq.s32.totalorder %v1252, 1
        %vm1271 = vcmp.eq.s32.totalorder %v1253, 1
        %vm1272 = vcmp.eq.s32.totalorder %v1254, 1
        %vm1273 = vcmp.eq.s32.totalorder %v1255, 1
        %vm1274 = vcmp.eq.s32.totalorder %v1256, 1
        %vm1275 = vcmp.eq.s32.totalorder %v1257, 1
        %vm1276 = vcmp.eq.s32.totalorder %v1258, 1
        %vm1277 = vcmp.eq.s32.totalorder %v1259, 1
        %vm1278 = vcmp.eq.s32.totalorder %v1260, 1
        %vm1279 = vcmp.eq.s32.totalorder %v1261, 1
        %vm1280 = vcmp.eq.s32.totalorder %v1262, 1
        %vm1281 = vcmp.eq.s32.totalorder %v1263, 1
        %vm1282 = vcmp.eq.s32.totalorder %v1264, 1
        %vm1283 = vcmp.eq.s32.totalorder %v1265, 1
        %vm1284 = vcmp.eq.s32.totalorder %v1266, 1
        %vm1285 = vcmp.eq.s32.totalorder %v1267, 1
        %v1286 = vsel %vm1268, %v1114, 0.0
        %v1287 = vsel %vm1269, %v1115, 0.0
        %v1288 = vsel %vm1270, %v1116, 0.0
        %v1289 = vsel %vm1271, %v1117, 0.0
        %v1290 = vsel %vm1272, %v1118, 0.0
        %v1291 = vsel %vm1273, %v1119, 0.0
        %v1292 = vsel %vm1274, %v1120, 0.0
        %v1293 = vsel %vm1275, %v1121, 0.0
        %v1294 = vsel %vm1276, %v1122, 0.0
        %v1295 = vsel %vm1277, %v1123, 0.0
        %v1296 = vsel %vm1278, %v1124, 0.0
        %v1297 = vsel %vm1279, %v1125, 0.0
        %v1298 = vsel %vm1280, %v1126, 0.0
        %v1299 = vsel %vm1281, %v1127, 0.0
        %v1300 = vsel %vm1282, %v1128, 0.0
        %v1301 = vsel %vm1283, %v1129, 0.0
        %v1302 = vsel %vm1284, %v1130, 0.0
        %v1303 = vsel %vm1285, %v1131, 0.0
        %v1304 = vld [vmem:[%s5] sm:$0x3f]
        %v1305 = vrot.slane %v1286, 6
        %v1306 = vrot.slane %v1287, 6
        %v1307 = vrot.slane %v1288, 6
        %v1308 = vrot.slane %v1289, 6
        %v1309 = vrot.slane %v1290, 6
        %v1310 = vrot.slane %v1291, 6
        %v1311 = vrot.slane %v1292, 6
        %v1312 = vrot.slane %v1293, 6
        %v1313 = vrot.slane %v1294, 6
        %v1314 = vrot.slane %v1295, 6
        %v1315 = vrot.slane %v1296, 6
        %v1316 = vrot.slane %v1297, 6
        %v1317 = vrot.slane %v1298, 6
        %v1318 = vrot.slane %v1299, 6
        %v1319 = vrot.slane %v1300, 6
        %v1320 = vrot.slane %v1301, 6
        %v1321 = vrot.slane %v1302, 6
        %vm1322 = vcmp.lt.s32.totalorder %v1133, 2
        %v1323 = vsel %vm1322, %v1320, %v1321
        %v1324 = vsel %vm1322, %v1319, %v1320
        %v1325 = vsel %vm1322, %v1318, %v1319
        %v1326 = vsel %vm1322, %v1317, %v1318
        %v1327 = vsel %vm1322, %v1316, %v1317
        %v1328 = vsel %vm1322, %v1315, %v1316
        %v1329 = vsel %vm1322, %v1314, %v1315
        %v1330 = vsel %vm1322, %v1313, %v1314
        %v1331 = vsel %vm1322, %v1312, %v1313
        %v1332 = vsel %vm1322, %v1311, %v1312
        %v1333 = vsel %vm1322, %v1310, %v1311
        %v1334 = vsel %vm1322, %v1309, %v1310
        %v1335 = vsel %vm1322, %v1308, %v1309
        %v1336 = vsel %vm1322, %v1307, %v1308
        %v1337 = vsel %vm1322, %v1306, %v1307
        %v1338 = vsel %vm1322, %v1305, %v1306
        %v1339 = vlaneseq
        %v1340 = vshrl.u32 %v1339, 7
        %v1341 = vsub.s32 0, %v1340
        %v1342 = vrot.slane %v1304, %v1341
        %v1343 = vmul.f32 %v1338, %v1342
        %v1344 = vmul.f32 %v1337, %v1342
        %v1345 = vmul.f32 %v1336, %v1342
        %v1346 = vmul.f32 %v1335, %v1342
        %v1347 = vmul.f32 %v1334, %v1342
        %v1348 = vmul.f32 %v1333, %v1342
        %v1349 = vmul.f32 %v1332, %v1342
        %v1350 = vmul.f32 %v1331, %v1342
        %v1351 = vmul.f32 %v1330, %v1342
        %v1352 = vmul.f32 %v1329, %v1342
        %v1353 = vmul.f32 %v1328, %v1342
        %v1354 = vmul.f32 %v1327, %v1342
        %v1355 = vmul.f32 %v1326, %v1342
        %v1356 = vmul.f32 %v1325, %v1342
        %v1357 = vmul.f32 %v1324, %v1342
        %v1358 = vmul.f32 %v1323, %v1342
        %v1359 = vadd.f32 %v1343, 0.0
        %v1360 = vadd.f32 %v1344, 0.0
        %v1361 = vadd.f32 %v1345, 0.0
        %v1362 = vadd.f32 %v1346, 0.0
        %v1363 = vadd.f32 %v1347, 0.0
        %v1364 = vadd.f32 %v1348, 0.0
        %v1365 = vadd.f32 %v1349, 0.0
        %v1366 = vadd.f32 %v1350, 0.0
        %v1367 = vadd.f32 %v1351, 0.0
        %v1368 = vadd.f32 %v1352, 0.0
        %v1369 = vadd.f32 %v1353, 0.0
        %v1370 = vadd.f32 %v1354, 0.0
        %v1371 = vadd.f32 %v1355, 0.0
        %v1372 = vadd.f32 %v1356, 0.0
        %v1373 = vadd.f32 %v1357, 0.0
        %v1374 = vadd.f32 %v1358, 0.0
        %v1375 = vrot.slane %v1286, 7
        %v1376 = vrot.slane %v1287, 7
        %v1377 = vrot.slane %v1288, 7
        %v1378 = vrot.slane %v1289, 7
        %v1379 = vrot.slane %v1290, 7
        %v1380 = vrot.slane %v1291, 7
        %v1381 = vrot.slane %v1292, 7
        %v1382 = vrot.slane %v1293, 7
        %v1383 = vrot.slane %v1294, 7
        %v1384 = vrot.slane %v1295, 7
        %v1385 = vrot.slane %v1296, 7
        %v1386 = vrot.slane %v1297, 7
        %v1387 = vrot.slane %v1298, 7
        %v1388 = vrot.slane %v1299, 7
        %v1389 = vrot.slane %v1300, 7
        %v1390 = vrot.slane %v1301, 7
        %v1391 = vrot.slane %v1302, 7
        %vm1392 = vcmp.lt.s32.totalorder %v1133, 1
        %v1393 = vsel %vm1392, %v1390, %v1391
        %v1394 = vsel %vm1392, %v1389, %v1390
        %v1395 = vsel %vm1392, %v1388, %v1389
        %v1396 = vsel %vm1392, %v1387, %v1388
        %v1397 = vsel %vm1392, %v1386, %v1387
        %v1398 = vsel %vm1392, %v1385, %v1386
        %v1399 = vsel %vm1392, %v1384, %v1385
        %v1400 = vsel %vm1392, %v1383, %v1384
        %v1401 = vsel %vm1392, %v1382, %v1383
        %v1402 = vsel %vm1392, %v1381, %v1382
        %v1403 = vsel %vm1392, %v1380, %v1381
        %v1404 = vsel %vm1392, %v1379, %v1380
        %v1405 = vsel %vm1392, %v1378, %v1379
        %v1406 = vsel %vm1392, %v1377, %v1378
        %v1407 = vsel %vm1392, %v1376, %v1377
        %v1408 = vsel %vm1392, %v1375, %v1376
        %v1409 = vlaneseq
        %v1410 = vshrl.u32 %v1409, 7
        %v1411 = vsub.s32 1, %v1410
        %v1412 = vrot.slane %v1304, %v1411
        %v1413 = vmul.f32 %v1408, %v1412
        %v1414 = vmul.f32 %v1407, %v1412
        %v1415 = vmul.f32 %v1406, %v1412
        %v1416 = vmul.f32 %v1405, %v1412
        %v1417 = vmul.f32 %v1404, %v1412
        %v1418 = vmul.f32 %v1403, %v1412
        %v1419 = vmul.f32 %v1402, %v1412
        %v1420 = vmul.f32 %v1401, %v1412
        %v1421 = vmul.f32 %v1400, %v1412
        %v1422 = vmul.f32 %v1399, %v1412
        %v1423 = vmul.f32 %v1398, %v1412
        %v1424 = vmul.f32 %v1397, %v1412
        %v1425 = vmul.f32 %v1396, %v1412
        %v1426 = vmul.f32 %v1395, %v1412
        %v1427 = vmul.f32 %v1394, %v1412
        %v1428 = vmul.f32 %v1393, %v1412
        %v1429 = vadd.f32 %v1359, %v1413
        %v1430 = vadd.f32 %v1360, %v1414
        %v1431 = vadd.f32 %v1361, %v1415
        %v1432 = vadd.f32 %v1362, %v1416
        %v1433 = vadd.f32 %v1363, %v1417
        %v1434 = vadd.f32 %v1364, %v1418
        %v1435 = vadd.f32 %v1365, %v1419
        %v1436 = vadd.f32 %v1366, %v1420
        %v1437 = vadd.f32 %v1367, %v1421
        %v1438 = vadd.f32 %v1368, %v1422
        %v1439 = vadd.f32 %v1369, %v1423
        %v1440 = vadd.f32 %v1370, %v1424
        %v1441 = vadd.f32 %v1371, %v1425
        %v1442 = vadd.f32 %v1372, %v1426
        %v1443 = vadd.f32 %v1373, %v1427
        %v1444 = vadd.f32 %v1374, %v1428
        %v1445 = vlaneseq
        %v1446 = vshrl.u32 %v1445, 7
        %v1447 = vsub.s32 2, %v1446
        %v1448 = vrot.slane %v1304, %v1447
        %v1449 = vmul.f32 %v1287, %v1448
        %v1450 = vmul.f32 %v1288, %v1448
        %v1451 = vmul.f32 %v1289, %v1448
        %v1452 = vmul.f32 %v1290, %v1448
        %v1453 = vmul.f32 %v1291, %v1448
        %v1454 = vmul.f32 %v1292, %v1448
        %v1455 = vmul.f32 %v1293, %v1448
        %v1456 = vmul.f32 %v1294, %v1448
        %v1457 = vmul.f32 %v1295, %v1448
        %v1458 = vmul.f32 %v1296, %v1448
        %v1459 = vmul.f32 %v1297, %v1448
        %v1460 = vmul.f32 %v1298, %v1448
        %v1461 = vmul.f32 %v1299, %v1448
        %v1462 = vmul.f32 %v1300, %v1448
        %v1463 = vmul.f32 %v1301, %v1448
        %v1464 = vmul.f32 %v1302, %v1448
        %v1465 = vadd.f32 %v1429, %v1449
        %v1466 = vadd.f32 %v1430, %v1450
        %v1467 = vadd.f32 %v1431, %v1451
        %v1468 = vadd.f32 %v1432, %v1452
        %v1469 = vadd.f32 %v1433, %v1453
        %v1470 = vadd.f32 %v1434, %v1454
        %v1471 = vadd.f32 %v1435, %v1455
        %v1472 = vadd.f32 %v1436, %v1456
        %v1473 = vadd.f32 %v1437, %v1457
        %v1474 = vadd.f32 %v1438, %v1458
        %v1475 = vadd.f32 %v1439, %v1459
        %v1476 = vadd.f32 %v1440, %v1460
        %v1477 = vadd.f32 %v1441, %v1461
        %v1478 = vadd.f32 %v1442, %v1462
        %v1479 = vadd.f32 %v1443, %v1463
        %v1480 = vadd.f32 %v1444, %v1464
        %v1481 = vrot.slane %v1287, 1
        %v1482 = vrot.slane %v1288, 1
        %v1483 = vrot.slane %v1289, 1
        %v1484 = vrot.slane %v1290, 1
        %v1485 = vrot.slane %v1291, 1
        %v1486 = vrot.slane %v1292, 1
        %v1487 = vrot.slane %v1293, 1
        %v1488 = vrot.slane %v1294, 1
        %v1489 = vrot.slane %v1295, 1
        %v1490 = vrot.slane %v1296, 1
        %v1491 = vrot.slane %v1297, 1
        %v1492 = vrot.slane %v1298, 1
        %v1493 = vrot.slane %v1299, 1
        %v1494 = vrot.slane %v1300, 1
        %v1495 = vrot.slane %v1301, 1
        %v1496 = vrot.slane %v1302, 1
        %v1497 = vrot.slane %v1303, 1
        %vm1498 = vcmp.lt.s32.totalorder %v1133, 7
        %v1499 = vsel %vm1498, %v1496, %v1497
        %v1500 = vsel %vm1498, %v1495, %v1496
        %v1501 = vsel %vm1498, %v1494, %v1495
        %v1502 = vsel %vm1498, %v1493, %v1494
        %v1503 = vsel %vm1498, %v1492, %v1493
        %v1504 = vsel %vm1498, %v1491, %v1492
        %v1505 = vsel %vm1498, %v1490, %v1491
        %v1506 = vsel %vm1498, %v1489, %v1490
        %v1507 = vsel %vm1498, %v1488, %v1489
        %v1508 = vsel %vm1498, %v1487, %v1488
        %v1509 = vsel %vm1498, %v1486, %v1487
        %v1510 = vsel %vm1498, %v1485, %v1486
        %v1511 = vsel %vm1498, %v1484, %v1485
        %v1512 = vsel %vm1498, %v1483, %v1484
        %v1513 = vsel %vm1498, %v1482, %v1483
        %v1514 = vsel %vm1498, %v1481, %v1482
        %v1515 = vlaneseq
        %v1516 = vshrl.u32 %v1515, 7
        %v1517 = vsub.s32 3, %v1516
        %v1518 = vrot.slane %v1304, %v1517
        %v1519 = vmul.f32 %v1514, %v1518
        %v1520 = vmul.f32 %v1513, %v1518
        %v1521 = vmul.f32 %v1512, %v1518
        %v1522 = vmul.f32 %v1511, %v1518
        %v1523 = vmul.f32 %v1510, %v1518
        %v1524 = vmul.f32 %v1509, %v1518
        %v1525 = vmul.f32 %v1508, %v1518
        %v1526 = vmul.f32 %v1507, %v1518
        %v1527 = vmul.f32 %v1506, %v1518
        %v1528 = vmul.f32 %v1505, %v1518
        %v1529 = vmul.f32 %v1504, %v1518
        %v1530 = vmul.f32 %v1503, %v1518
        %v1531 = vmul.f32 %v1502, %v1518
        %v1532 = vmul.f32 %v1501, %v1518
        %v1533 = vmul.f32 %v1500, %v1518
        %v1534 = vmul.f32 %v1499, %v1518
        %v1535 = vadd.f32 %v1465, %v1519
        %v1536 = vadd.f32 %v1466, %v1520
        %v1537 = vadd.f32 %v1467, %v1521
        %v1538 = vadd.f32 %v1468, %v1522
        %v1539 = vadd.f32 %v1469, %v1523
        %v1540 = vadd.f32 %v1470, %v1524
        %v1541 = vadd.f32 %v1471, %v1525
        %v1542 = vadd.f32 %v1472, %v1526
        %v1543 = vadd.f32 %v1473, %v1527
        %v1544 = vadd.f32 %v1474, %v1528
        %v1545 = vadd.f32 %v1475, %v1529
        %v1546 = vadd.f32 %v1476, %v1530
        %v1547 = vadd.f32 %v1477, %v1531
        %v1548 = vadd.f32 %v1478, %v1532
        %v1549 = vadd.f32 %v1479, %v1533
        %v1550 = vadd.f32 %v1480, %v1534
        %v1551 = vrot.slane %v1287, 2
        %v1552 = vrot.slane %v1288, 2
        %v1553 = vrot.slane %v1289, 2
        %v1554 = vrot.slane %v1290, 2
        %v1555 = vrot.slane %v1291, 2
        %v1556 = vrot.slane %v1292, 2
        %v1557 = vrot.slane %v1293, 2
        %v1558 = vrot.slane %v1294, 2
        %v1559 = vrot.slane %v1295, 2
        %v1560 = vrot.slane %v1296, 2
        %v1561 = vrot.slane %v1297, 2
        %v1562 = vrot.slane %v1298, 2
        %v1563 = vrot.slane %v1299, 2
        %v1564 = vrot.slane %v1300, 2
        %v1565 = vrot.slane %v1301, 2
        %v1566 = vrot.slane %v1302, 2
        %v1567 = vrot.slane %v1303, 2
        %vm1568 = vcmp.lt.s32.totalorder %v1133, 6
        %v1569 = vsel %vm1568, %v1566, %v1567
        %v1570 = vsel %vm1568, %v1565, %v1566
        %v1571 = vsel %vm1568, %v1564, %v1565
        %v1572 = vsel %vm1568, %v1563, %v1564
        %v1573 = vsel %vm1568, %v1562, %v1563
        %v1574 = vsel %vm1568, %v1561, %v1562
        %v1575 = vsel %vm1568, %v1560, %v1561
        %v1576 = vsel %vm1568, %v1559, %v1560
        %v1577 = vsel %vm1568, %v1558, %v1559
        %v1578 = vsel %vm1568, %v1557, %v1558
        %v1579 = vsel %vm1568, %v1556, %v1557
        %v1580 = vsel %vm1568, %v1555, %v1556
        %v1581 = vsel %vm1568, %v1554, %v1555
        %v1582 = vsel %vm1568, %v1553, %v1554
        %v1583 = vsel %vm1568, %v1552, %v1553
        %v1584 = vsel %vm1568, %v1551, %v1552
        %v1585 = vlaneseq
        %v1586 = vshrl.u32 %v1585, 7
        %v1587 = vsub.s32 4, %v1586
        %v1588 = vrot.slane %v1304, %v1587
        %v1589 = vmul.f32 %v1584, %v1588
        %v1590 = vmul.f32 %v1583, %v1588
        %v1591 = vmul.f32 %v1582, %v1588
        %v1592 = vmul.f32 %v1581, %v1588
        %v1593 = vmul.f32 %v1580, %v1588
        %v1594 = vmul.f32 %v1579, %v1588
        %v1595 = vmul.f32 %v1578, %v1588
        %v1596 = vmul.f32 %v1577, %v1588
        %v1597 = vmul.f32 %v1576, %v1588
        %v1598 = vmul.f32 %v1575, %v1588
        %v1599 = vmul.f32 %v1574, %v1588
        %v1600 = vmul.f32 %v1573, %v1588
        %v1601 = vmul.f32 %v1572, %v1588
        %v1602 = vmul.f32 %v1571, %v1588
        %v1603 = vmul.f32 %v1570, %v1588
        %v1604 = vmul.f32 %v1569, %v1588
        %v1605 = vadd.f32 %v1535, %v1589
        %v1606 = vadd.f32 %v1536, %v1590
        %v1607 = vadd.f32 %v1537, %v1591
        %v1608 = vadd.f32 %v1538, %v1592
        %v1609 = vadd.f32 %v1539, %v1593
        %v1610 = vadd.f32 %v1540, %v1594
        %v1611 = vadd.f32 %v1541, %v1595
        %v1612 = vadd.f32 %v1542, %v1596
        %v1613 = vadd.f32 %v1543, %v1597
        %v1614 = vadd.f32 %v1544, %v1598
        %v1615 = vadd.f32 %v1545, %v1599
        %v1616 = vadd.f32 %v1546, %v1600
        %v1617 = vadd.f32 %v1547, %v1601
        %v1618 = vadd.f32 %v1548, %v1602
        %v1619 = vadd.f32 %v1549, %v1603
        %v1620 = vadd.f32 %v1550, %v1604
        %v1621 = vlaneseq
        %v1622 = vshrl.u32 %v1621, 7
        %v1623 = vsub.s32 5, %v1622
        %v1624 = vrot.slane %v1304, %v1623
        %v1625 = vadd.f32 %v1605, %v1624
        %v1626 = vadd.f32 %v1606, %v1624
        %v1627 = vadd.f32 %v1607, %v1624
        %v1628 = vadd.f32 %v1608, %v1624
        %v1629 = vadd.f32 %v1609, %v1624
        %v1630 = vadd.f32 %v1610, %v1624
        %v1631 = vadd.f32 %v1611, %v1624
        %v1632 = vadd.f32 %v1612, %v1624
        %v1633 = vadd.f32 %v1613, %v1624
        %v1634 = vadd.f32 %v1614, %v1624
        %v1635 = vadd.f32 %v1615, %v1624
        %v1636 = vadd.f32 %v1616, %v1624
        %v1637 = vadd.f32 %v1617, %v1624
        %v1638 = vadd.f32 %v1618, %v1624
        %v1639 = vadd.f32 %v1619, %v1624
        %v1640 = vadd.f32 %v1620, %v1624
        %v1641 = vxor.u32 %v1625, 2147483648
        %v1642 = vxor.u32 %v1626, 2147483648
        %v1643 = vxor.u32 %v1627, 2147483648
        %v1644 = vxor.u32 %v1628, 2147483648
        %v1645 = vxor.u32 %v1629, 2147483648
        %v1646 = vxor.u32 %v1630, 2147483648
        %v1647 = vxor.u32 %v1631, 2147483648
        %v1648 = vxor.u32 %v1632, 2147483648
        %v1649 = vxor.u32 %v1633, 2147483648
        %v1650 = vxor.u32 %v1634, 2147483648
        %v1651 = vxor.u32 %v1635, 2147483648
        %v1652 = vxor.u32 %v1636, 2147483648
        %v1653 = vxor.u32 %v1637, 2147483648
        %v1654 = vxor.u32 %v1638, 2147483648
        %v1655 = vxor.u32 %v1639, 2147483648
        %v1656 = vxor.u32 %v1640, 2147483648
        %v1657 = vmul.f32 %v1641, 1.442695
        %v1658 = vpow.pop %v1657
        %v1659 = vmul.f32 %v1642, 1.442695
        %v1660 = vpow.pop %v1659
        %v1661 = vmul.f32 %v1643, 1.442695
        %v1662 = vpow.pop %v1661
        %v1663 = vmul.f32 %v1644, 1.442695
        %v1664 = vpow.pop %v1663
        %v1665 = vmul.f32 %v1645, 1.442695
        %v1666 = vpow.pop %v1665
        %v1667 = vmul.f32 %v1646, 1.442695
        %v1668 = vpow.pop %v1667
        %v1669 = vmul.f32 %v1647, 1.442695
        %v1670 = vpow.pop %v1669
        %v1671 = vmul.f32 %v1648, 1.442695
        %v1672 = vpow.pop %v1671
        %v1673 = vmul.f32 %v1649, 1.442695
        %v1674 = vpow.pop %v1673
        %v1675 = vmul.f32 %v1650, 1.442695
        %v1676 = vpow.pop %v1675
        %v1677 = vmul.f32 %v1651, 1.442695
        %v1678 = vpow.pop %v1677
        %v1679 = vmul.f32 %v1652, 1.442695
        %v1680 = vpow.pop %v1679
        %v1681 = vmul.f32 %v1653, 1.442695
        %v1682 = vpow.pop %v1681
        %v1683 = vmul.f32 %v1654, 1.442695
        %v1684 = vpow.pop %v1683
        %v1685 = vmul.f32 %v1655, 1.442695
        %v1686 = vpow.pop %v1685
        %v1687 = vmul.f32 %v1656, 1.442695
        %v1688 = vpow.pop %v1687
        %v1689 = vadd.f32 %v1658, 1.0
        %v1690 = vadd.f32 %v1660, 1.0
        %v1691 = vadd.f32 %v1662, 1.0
        %v1692 = vadd.f32 %v1664, 1.0
        %v1693 = vadd.f32 %v1666, 1.0
        %v1694 = vadd.f32 %v1668, 1.0
        %v1695 = vadd.f32 %v1670, 1.0
        %v1696 = vadd.f32 %v1672, 1.0
        %v1697 = vadd.f32 %v1674, 1.0
        %v1698 = vadd.f32 %v1676, 1.0
        %v1699 = vadd.f32 %v1678, 1.0
        %v1700 = vadd.f32 %v1680, 1.0
        %v1701 = vadd.f32 %v1682, 1.0
        %v1702 = vadd.f32 %v1684, 1.0
        %v1703 = vadd.f32 %v1686, 1.0
        %v1704 = vadd.f32 %v1688, 1.0
        %v1705 = vrcp.pop %v1689
        %v1706 = vmul.f32 1.0, %v1705
        %v1707 = vrcp.pop %v1690
        %v1708 = vmul.f32 1.0, %v1707
        %v1709 = vrcp.pop %v1691
        %v1710 = vmul.f32 1.0, %v1709
        %v1711 = vrcp.pop %v1692
        %v1712 = vmul.f32 1.0, %v1711
        %v1713 = vrcp.pop %v1693
        %v1714 = vmul.f32 1.0, %v1713
        %v1715 = vrcp.pop %v1694
        %v1716 = vmul.f32 1.0, %v1715
        %v1717 = vrcp.pop %v1695
        %v1718 = vmul.f32 1.0, %v1717
        %v1719 = vrcp.pop %v1696
        %v1720 = vmul.f32 1.0, %v1719
        %v1721 = vrcp.pop %v1697
        %v1722 = vmul.f32 1.0, %v1721
        %v1723 = vrcp.pop %v1698
        %v1724 = vmul.f32 1.0, %v1723
        %v1725 = vrcp.pop %v1699
        %v1726 = vmul.f32 1.0, %v1725
        %v1727 = vrcp.pop %v1700
        %v1728 = vmul.f32 1.0, %v1727
        %v1729 = vrcp.pop %v1701
        %v1730 = vmul.f32 1.0, %v1729
        %v1731 = vrcp.pop %v1702
        %v1732 = vmul.f32 1.0, %v1731
        %v1733 = vrcp.pop %v1703
        %v1734 = vmul.f32 1.0, %v1733
        %v1735 = vrcp.pop %v1704
        %v1736 = vmul.f32 1.0, %v1735
        %v1737 = vmul.f32 %v1625, %v1706
        %v1738 = vmul.f32 %v1626, %v1708
        %v1739 = vmul.f32 %v1627, %v1710
        %v1740 = vmul.f32 %v1628, %v1712
        %v1741 = vmul.f32 %v1629, %v1714
        %v1742 = vmul.f32 %v1630, %v1716
        %v1743 = vmul.f32 %v1631, %v1718
        %v1744 = vmul.f32 %v1632, %v1720
        %v1745 = vmul.f32 %v1633, %v1722
        %v1746 = vmul.f32 %v1634, %v1724
        %v1747 = vmul.f32 %v1635, %v1726
        %v1748 = vmul.f32 %v1636, %v1728
        %v1749 = vmul.f32 %v1637, %v1730
        %v1750 = vmul.f32 %v1638, %v1732
        %v1751 = vmul.f32 %v1639, %v1734
        %v1752 = vmul.f32 %v1640, %v1736
        %v1753 = vpack.c.bf16 %v1738, %v1737
        %v1754 = vpack.c.bf16 %v1740, %v1739
        %v1755 = vpack.c.bf16 %v1742, %v1741
        %v1756 = vpack.c.bf16 %v1744, %v1743
        %v1757 = vpack.c.bf16 %v1746, %v1745
        %v1758 = vpack.c.bf16 %v1748, %v1747
        %v1759 = vpack.c.bf16 %v1750, %v1749
        %v1760 = vpack.c.bf16 %v1752, %v1751
        %v1761 = vld [vmem:[#allocation11] sm:$0xf]
        %v1762 = vld [vmem:[#allocation11 + $0x4] sm:$0xf]
        %v1763 = vld [vmem:[#allocation11 + $0x8] sm:$0xf]
        %v1764 = vld [vmem:[#allocation11 + $0xc] sm:$0xf]
        %v1765 = vld [vmem:[#allocation11 + $0x10] sm:$0xf]
        %v1766 = vld [vmem:[#allocation11 + $0x14] sm:$0xf]
        %v1767 = vld [vmem:[#allocation11 + $0x18] sm:$0xf]
        %v1768 = vld [vmem:[#allocation11 + $0x1c] sm:$0xf]
        %v1769 = vld [vmem:[#allocation11 + $0x20] sm:$0xf]
        %v1770 = vld [vmem:[#allocation11 + $0x24] sm:$0xf]
        %v1771 = vld [vmem:[#allocation11 + $0x28] sm:$0xf]
        %v1772 = vld [vmem:[#allocation11 + $0x2c] sm:$0xf]
        %v1773 = vld [vmem:[#allocation11 + $0x30] sm:$0xf]
        %v1774 = vld [vmem:[#allocation11 + $0x34] sm:$0xf]
        %v1775 = vld [vmem:[#allocation11 + $0x38] sm:$0xf]
        %v1776 = vld [vmem:[#allocation11 + $0x3c] sm:$0xf]
        %v1793 = vunpack.c.l.b16 %v1761
        %v1794 = vunpack.c.l.b16 %v1762
        %v1795 = vunpack.c.l.b16 %v1763
        %v1796 = vunpack.c.l.b16 %v1764
        %v1797 = vunpack.c.l.b16 %v1765
        %v1798 = vunpack.c.l.b16 %v1766
        %v1799 = vunpack.c.l.b16 %v1767
        %v1800 = vunpack.c.l.b16 %v1768
        %v1801 = vunpack.c.l.b16 %v1769
        %v1802 = vunpack.c.l.b16 %v1770
        %v1803 = vunpack.c.l.b16 %v1771
        %v1804 = vunpack.c.l.b16 %v1772
        %v1805 = vunpack.c.l.b16 %v1773
        %v1806 = vunpack.c.l.b16 %v1774
        %v1807 = vunpack.c.l.b16 %v1775
        %v1808 = vunpack.c.l.b16 %v1776
        %v1809 = vpack.c.b16 %v1794, %v1793
        %v1810 = vpack.c.b16 %v1796, %v1795
        %v1811 = vpack.c.b16 %v1798, %v1797
        %v1812 = vpack.c.b16 %v1800, %v1799
        %v1813 = vpack.c.b16 %v1802, %v1801
        %v1814 = vpack.c.b16 %v1804, %v1803
        %v1815 = vpack.c.b16 %v1806, %v1805
        %v1816 = vpack.c.b16 %v1808, %v1807
        %1825 = vmatprep.subr.bf16.mxu0 0
        %1826 = vmatpush1.bf16.msra.mxu0 %v1816
        %1827 = vmatprep.subr.bf16.mxu0 0
        %1828 = vmatpush1.bf16.msra.mxu0 %v1815
        %1829 = vmatprep.subr.bf16.mxu0 0
        %1830 = vmatpush1.bf16.msra.mxu0 %v1814
        %1831 = vmatprep.subr.bf16.mxu0 0
        %1832 = vmatpush1.bf16.msra.mxu0 %v1813
        %1833 = vmatprep.subr.bf16.mxu0 0
        %1834 = vmatpush1.bf16.msra.mxu0 %v1812
        %1835 = vmatprep.subr.bf16.mxu0 0
        %1836 = vmatpush1.bf16.msra.mxu0 %v1811
        %1837 = vmatprep.subr.bf16.mxu0 0
        %1838 = vmatpush1.bf16.msra.mxu0 %v1810
        %1839 = vmatprep.subr.bf16.mxu0 0
        %1840 = vmatpush1.bf16.msra.mxu0 %v1809
        %1841 = vmatprep.subr.bf16.mxu0 0
        %1842 = vmatpush2.bf16.msra.mxu0 0
        %1843 = vmatprep.subr.bf16.mxu0 0
        %1844 = vmatpush2.bf16.msra.mxu0 0
        %1845 = vmatprep.subr.bf16.mxu0 0
        %1846 = vmatpush2.bf16.msra.mxu0 0
        %1847 = vmatprep.subr.bf16.mxu0 0
        %1848 = vmatpush2.bf16.msra.mxu0 0
        %1849 = vmatprep.subr.bf16.mxu0 0
        %1850 = vmatpush2.bf16.msra.mxu0 0
        %1851 = vmatprep.subr.bf16.mxu0 0
        %1852 = vmatpush2.bf16.msra.mxu0 0
        %1853 = vmatprep.subr.bf16.mxu0 0
        %1854 = vmatpush2.bf16.msra.mxu0 0
        %1855 = vmatprep.subr.bf16.mxu0 0
        %1856 = vmatpush2.bf16.msra.mxu0 0
        %1857 = vmatprep.mubr.bf16.mxu0 0
        %1858 = vmatmul.mubr.bf16.gmra.mxu0 %v1753
        %v1859 = vpop.f32.mrf.mxu0
        %v1860 = vadd.f32 0.0, %v1859
        %v1861 = vpop.f32.mrf.mxu0
        %v1862 = vpop.f32.mrf.mxu0
        %v1863 = vadd.f32 0.0, %v1862
        %v1864 = vpop.f32.mrf.mxu0
        %1865 = vmatprep.mubr.bf16.mxu0 0
        %1866 = vmatmul.mubr.bf16.gmra.mxu0 %v1754
        %v1867 = vpop.f32.mrf.mxu0
        %v1868 = vadd.f32 0.0, %v1867
        %v1869 = vpop.f32.mrf.mxu0
        %v1870 = vpop.f32.mrf.mxu0
        %v1871 = vadd.f32 0.0, %v1870
        %v1872 = vpop.f32.mrf.mxu0
        %1873 = vmatprep.mubr.bf16.mxu0 0
        %1874 = vmatmul.mubr.bf16.gmra.mxu0 %v1755
        %v1875 = vpop.f32.mrf.mxu0
        %v1876 = vadd.f32 0.0, %v1875
        %v1877 = vpop.f32.mrf.mxu0
        %v1878 = vpop.f32.mrf.mxu0
        %v1879 = vadd.f32 0.0, %v1878
        %v1880 = vpop.f32.mrf.mxu0
        %1881 = vmatprep.mubr.bf16.mxu0 0
        %1882 = vmatmul.mubr.bf16.gmra.mxu0 %v1756
        %v1883 = vpop.f32.mrf.mxu0
        %v1884 = vadd.f32 0.0, %v1883
        %v1885 = vpop.f32.mrf.mxu0
        %v1886 = vpop.f32.mrf.mxu0
        %v1887 = vadd.f32 0.0, %v1886
        %v1888 = vpop.f32.mrf.mxu0
        %1889 = vmatprep.mubr.bf16.mxu0 0
        %1890 = vmatmul.mubr.bf16.gmra.mxu0 %v1757
        %v1891 = vpop.f32.mrf.mxu0
        %v1892 = vadd.f32 0.0, %v1891
        %v1893 = vpop.f32.mrf.mxu0
        %v1894 = vpop.f32.mrf.mxu0
        %v1895 = vadd.f32 0.0, %v1894
        %v1896 = vpop.f32.mrf.mxu0
        %1897 = vmatprep.mubr.bf16.mxu0 0
        %1898 = vmatmul.mubr.bf16.gmra.mxu0 %v1758
        %v1899 = vpop.f32.mrf.mxu0
        %v1900 = vadd.f32 0.0, %v1899
        %v1901 = vpop.f32.mrf.mxu0
        %v1902 = vpop.f32.mrf.mxu0
        %v1903 = vadd.f32 0.0, %v1902
        %v1904 = vpop.f32.mrf.mxu0
        %1905 = vmatprep.mubr.bf16.mxu0 0
        %1906 = vmatmul.mubr.bf16.gmra.mxu0 %v1759
        %v1907 = vpop.f32.mrf.mxu0
        %v1908 = vadd.f32 0.0, %v1907
        %v1909 = vpop.f32.mrf.mxu0
        %v1910 = vpop.f32.mrf.mxu0
        %v1911 = vadd.f32 0.0, %v1910
        %v1912 = vpop.f32.mrf.mxu0
        %1913 = vmatprep.mubr.bf16.mxu0 0
        %1914 = vmatmul.mubr.bf16.gmra.mxu0 %v1760
        %v1915 = vpop.f32.mrf.mxu0
        %v1916 = vadd.f32 0.0, %v1915
        %v1917 = vpop.f32.mrf.mxu0
        %v1918 = vpop.f32.mrf.mxu0
        %v1919 = vadd.f32 0.0, %v1918
        %v1920 = vpop.f32.mrf.mxu0
        %1921 = vdwg.mxu0
        %1922 = vst [vmem:[%s465] sm:$0xff] %v1860
        %1923 = vst [vmem:[%s465 + $0x8] sm:$0xff] %v1863
        %1924 = vst [vmem:[%s465 + $0x10] sm:$0xff] %v1868
        %1925 = vst [vmem:[%s465 + $0x18] sm:$0xff] %v1871
        %1926 = vst [vmem:[%s465 + $0x20] sm:$0xff] %v1876
        %1927 = vst [vmem:[%s465 + $0x28] sm:$0xff] %v1879
        %1928 = vst [vmem:[%s465 + $0x30] sm:$0xff] %v1884
        %1929 = vst [vmem:[%s465 + $0x38] sm:$0xff] %v1887
        %1930 = vst [vmem:[%s465 + $0x40] sm:$0xff] %v1892
        %1931 = vst [vmem:[%s465 + $0x48] sm:$0xff] %v1895
        %1932 = vst [vmem:[%s465 + $0x50] sm:$0xff] %v1900
        %1933 = vst [vmem:[%s465 + $0x58] sm:$0xff] %v1903
        %1934 = vst [vmem:[%s465 + $0x60] sm:$0xff] %v1908
        %1935 = vst [vmem:[%s465 + $0x68] sm:$0xff] %v1911
        %1936 = vst [vmem:[%s465 + $0x70] sm:$0xff] %v1916
        %1937 = vst [vmem:[%s465 + $0x78] sm:$0xff] %v1919
        %s1938 = sand.u32 %s235, 1
        %s1939 = scalar_lea.sflag [#allocation4], %s1938
        %s1940 = sand.u32 %s235, 1
        %s1941 = smul.addr %s1940, 128
        %s1942 = scalar_lea.vmem [#allocation13], %s1941
        // Predicated region
        $region73: #{tpu_custom_call.1} parent=47 // pred_check
          %p1943 = pneg %p245
        $region74: #{tpu_custom_call.1} parent=47 // pred_check_branch
          %1945 = sbr.rel (%p1943) target = $region76
        $region75: #{tpu_custom_call.1} parent=47 // pred_region
          %s1946 = smul.u32 16, %s33
          %s1948 = ssub.s32 2048, 2048
          %1949 = vsyncadd %s1939, %s1948
          %s1950 = smul.addr %s34, 32
          %s1951 = sadd.s32 %s1946, %s1950
          %s1952 = smul.addr %s1951, 128
          %s1953 = scalar_lea.hbm %s7, %s1952
          %s1954 = sshll.u32 %s1942, 4
          %s1955 = int_to_ptr.vmem [resolvable:$true] %s1954
          %1960 = dma.vmem_to_hbm [thread:$0]  %s1955, 2048, %s1953, %s1939, 128, 128, 8
        $region76: #{tpu_custom_call.1} parent=47 // pred_fallthru
          _
      $region48: #{tpu_custom_call.1} parent=5 // pred_fallthru
        _
      %p1961 = scmp.le.s32.totalorder 2, %s24
      // Predicated region
      $region77: #{tpu_custom_call.1} parent=5 // pred_check
        %p1962 = pneg %p1961
      $region78: #{tpu_custom_call.1} parent=5 // pred_check_branch
        %1964 = sbr.rel (%p1962) target = $region80
      $region79: #{tpu_custom_call.1} parent=5 // pred_region
        %s1965 = ssub.s32 %s24, 2
        // Predicated region
        $region81: #{tpu_custom_call.1} parent=79 // pred_check
          %p1966 = pneg %p251
        $region82: #{tpu_custom_call.1} parent=79 // pred_check_branch
          %1968 = sbr.rel (%p1966) target = $region84
        $region83: #{tpu_custom_call.1} parent=79 // pred_region
          %s1969 = sand.u32 %s236, 1
          %s1970 = scalar_lea.sflag [#allocation4], %s1969
          %s1971 = sand.u32 %s236, 1
          %s1972 = smul.addr %s1971, 128
          %s1973 = scalar_lea.vmem [#allocation13], %s1972
          %1974 = dma.done %s1970, 2048
        $region84: #{tpu_custom_call.1} parent=79 // pred_fallthru
          _
      $region80: #{tpu_custom_call.1} parent=5 // pred_fallthru
        _
    $region6: #{tpu_custom_call.1} parent=1 // loop_footer
      %s28 = sadd.s32 1, %s24
    $region7: #{tpu_custom_call.1} parent=1 // loop_footer_branch
      %23 = sbr.rel target = $region3
    $region8: #{tpu_custom_call.1} parent=1 // loop_exit
      _
    %1975 = vsyncpa [#allocation3], 1
    %s1976 = scalar_lea.sflag [#allocation3], 1
    %1977 = vsyncpa %s1976, 1
    %1978 = vsyncpa [#allocation6], 1
    %s1979 = scalar_lea.sflag [#allocation6], 1
    %1980 = vsyncpa %s1979, 1
    %1981 = vsyncpa [#allocation9], 1
    %1982 = vsyncpa [#allocation12], 1
    %1983 = vsyncpa [#allocation4], 1
    %s1984 = scalar_lea.sflag [#allocation4], 1
    %1985 = vsyncpa %s1984, 1

// kernel: tpu_custom_call.1
$region0: #{tpu_custom_call.1}
  #allocation0 [shape = 'u32[]', space=smem, size = 0x4, offset = 0x4, fixed_abs, tag = 'smem constant byte address 0x4 - core index']
  #allocation1 [shape = 'u32[144,128]{1,0:T(1,128)}', space=vmem, size = 0x12000, scoped, tag = 'internal scratch']
  %s0 = inlined_call_operand.hbm [shape: f32[2,256,128], index: 0, kind: input, shape index: {}]
  %s1 = inlined_call_operand.hbm [shape: f32[2,256,128], index: 1, kind: input, shape index: {}]
  %s2 = inlined_call_operand.hbm [shape: f32[2,256,128], index: 2, kind: input, shape index: {}]
  %s3 = inlined_call_operand.hbm [shape: bf16[128,256], index: 3, kind: input, shape index: {}]
  %s4 = inlined_call_operand.hbm [shape: f32[1,256], index: 4, kind: input, shape index: {}]
  %s5 = inlined_call_operand.vmem [shape: f32[6,128], index: 5, kind: input, shape index: {}]
  %s6 = inlined_call_operand.hbm [shape: bf16[128,128], index: 6, kind: input, shape index: {}]
  %s7 = inlined_call_operand.hbm [shape: f32[2,256,128], index: 7, kind: output, shape index: {}]
  %s8 = sld [smem:[#allocation0]]
  $region85: #{tpu_custom_call.1} parent=0
    _
  %s10 = ssub.s32 1, %s8
  %s11 = scalar_select 0, %s10, %s8
  $region1: #{tpu_custom_call.1} parent=0
    #allocation2 [shape = 'u8[131072]{0}', space=vmem, size = 0x20000, scoped, tag = 'input window, operand 0']
    #allocation3 [shape = 's32[2]{0}', space=sflag, size = 0x8, scoped, tag = 'scoped memory for tpu_custom_call.1']
    #allocation4 [shape = 's32[2]{0}', space=sflag, size = 0x8, scoped, tag = 'scoped memory for tpu_custom_call.1']
    #allocation5 [shape = 'u8[16384]{0}', space=vmem, size = 0x4000, scoped, tag = 'input window, operand 1']
    #allocation6 [shape = 's32[2]{0}', space=sflag, size = 0x8, scoped, tag = 'scoped memory for tpu_custom_call.1']
    #allocation7 [shape = 'u8[16384]{0}', space=vmem, size = 0x4000, scoped, tag = 'input window, operand 2']
    #allocation8 [shape = 'u8[65536]{0}', space=vmem, size = 0x10000, scoped, tag = 'input window, operand 3, single buffered']
    #allocation9 [shape = 's32[1]{0}', space=sflag, size = 0x4, scoped, tag = 'scoped memory for tpu_custom_call.1']
    #allocation10 [shape = 'u8[1024]{0}', space=vmem, size = 0x400, scoped, tag = 'input window, operand 4, single buffered']
    #allocation11 [shape = 'u8[32768]{0}', space=vmem, size = 0x8000, scoped, tag = 'input window, operand 6, single buffered']
    #allocation12 [shape = 's32[1]{0}', space=sflag, size = 0x4, scoped, tag = 'scoped memory for tpu_custom_call.1']
    #allocation13 [shape = 'u8[131072]{0}', space=vmem, size = 0x20000, scoped, tag = 'output window, operand 0']
    %12 = vsyncpa [#allocation3], 0
    %s13 = scalar_lea.sflag [#allocation3], 1
    %14 = vsyncpa %s13, 0
    %15 = vsyncpa [#allocation6], 0
    %s16 = scalar_lea.sflag [#allocation6], 1
    %17 = vsyncpa %s16, 0
    %18 = vsyncpa [#allocation9], 0
    %19 = vsyncpa [#allocation12], 0
    %20 = vsyncpa [#allocation4], 0
    %s21 = scalar_lea.sflag [#allocation4], 1
    %22 = vsyncpa %s21, 0
    loop: start=0, step=1, limit=6
    $region2: #{tpu_custom_call.1} parent=1 // loop_pre_header
      _
    $region3: #{tpu_custom_call.1} parent=1 // loop_header
      %s24 = sphi 0, %s28
      %p25 = scmp.ge.s32.totalorder %s24, 6
      %s31 = sphi 0, %s43
      %s32 = sphi 0, %s39
      %s33 = sphi 0, %s31
      %s34 = sphi 0, %s32
      %s35 = sphi 0, %s33
      %s36 = sphi 0, %s34
      %s48 = sphi 0, %s50
      %s51 = sphi 0, %s48
      %s52 = sphi 0, %s51
      %s68 = sphi 0, %s52
      %s84 = sphi 0, %s86
      %s87 = sphi 0, %s84
      %s88 = sphi 0, %s87
      %s104 = sphi 0, %s88
      %s120 = sphi 0, %s122
      %s123 = sphi 0, %s120
      %s124 = sphi 0, %s123
      %s140 = sphi 0, %s124
      %s144 = sphi 0, %s144
      %s146 = sphi 0, %s144
      %s147 = sphi 0, %s146
      %s161 = sphi 0, %s147
      %s165 = sphi 0, %s165
      %s167 = sphi 0, %s165
      %s168 = sphi 0, %s167
      %s182 = sphi 0, %s168
      %s186 = sphi 0, %s186
      %s188 = sphi 0, %s186
      %s189 = sphi 0, %s188
      %s203 = sphi 0, %s189
      %s207 = sphi 0, %s207
      %s209 = sphi 0, %s207
      %s210 = sphi 0, %s209
      %s224 = sphi 0, %s210
      %s232 = sphi 0, %s234
      %s235 = sphi 0, %s232
      %s236 = sphi 0, %s235
      %s252 = sphi 0, %s236
    $region4: #{tpu_custom_call.1} parent=1 // loop_header_branch
      %27 = sbr.rel (%p25) target = $region8
    $region5: #{tpu_custom_call.1} parent=1 // loop_body
      %s29 = ssub.s32 %s24, 1
      %s30 = ssub.s32 %s24, 2
      %s37 = sadd.s32 1, %s32
      %p38 = scmp.ge.s32.totalorder %s37, 2
      %s39 = scalar_select %p38, 0, %s37
      %s40 = sadd.s32 1, %s31
      %s41 = scalar_select %p38, %s40, %s31
      %p42 = scmp.ge.s32.totalorder %s41, 2
      %s43 = scalar_select %p42, 0, %s41
      %s44 = ssub.s32 %s32, %s39
      %s45 = ssub.s32 %s31, %s43
      %s46 = sor.u32 %s44, %s45
      %p47 = scmp.eq.s32.totalorder %s46, 0
      %s49 = sadd.s32 %s48, 1
      %s50 = scalar_select %p47, %s48, %s49
      %p53 = pneg %p47
      %p54 = scmp.eq.s32.totalorder %s24, 3
      %p55 = por %p53, %p54
      %p56 = scmp.ne.s32.totalorder %s48, %s51
      %p57 = scmp.eq.s32.totalorder %s24, 0
      %p58 = por %p56, %p57
      %p59 = scmp.ne.s32.totalorder %s48, %s51
      %p60 = scmp.eq.s32.totalorder %s29, 3
      %p61 = por %p59, %p60
      %p62 = scmp.ne.s32.totalorder %s51, %s52
      %p63 = scmp.eq.s32.totalorder %s29, 0
      %p64 = por %p62, %p63
      %p65 = scmp.ne.s32.totalorder %s51, %s52
      %p66 = scmp.eq.s32.totalorder %s30, 3
      %p67 = por %p65, %p66
      %p69 = scmp.ne.s32.totalorder %s52, %s68
      %p70 = scmp.eq.s32.totalorder %s30, 0
      %p71 = por %p69, %p70
      %s72 = smul.u32 %s31, 8
      %s73 = ssub.s32 %s72, 1
      %p74 = scmp.gt.s32.totalorder %s73, 0
      %s75 = scalar_select %p74, %s73, 0
      %s76 = smul.u32 %s43, 8
      %s77 = ssub.s32 %s76, 1
      %p78 = scmp.gt.s32.totalorder %s77, 0
      %s79 = scalar_select %p78, %s77, 0
      %s80 = ssub.s32 %s32, %s39
      %s81 = ssub.s32 %s75, %s79
      %s82 = sor.u32 %s80, %s81
      %p83 = scmp.eq.s32.totalorder %s82, 0
      %s85 = sadd.s32 %s84, 1
      %s86 = scalar_select %p83, %s84, %s85
      %p89 = pneg %p83
      %p90 = scmp.eq.s32.totalorder %s24, 3
      %p91 = por %p89, %p90
      %p92 = scmp.ne.s32.totalorder %s84, %s87
      %p93 = scmp.eq.s32.totalorder %s24, 0
      %p94 = por %p92, %p93
      %p95 = scmp.ne.s32.totalorder %s84, %s87
      %p96 = scmp.eq.s32.totalorder %s29, 3
      %p97 = por %p95, %p96
      %p98 = scmp.ne.s32.totalorder %s87, %s88
      %p99 = scmp.eq.s32.totalorder %s29, 0
      %p100 = por %p98, %p99
      %p101 = scmp.ne.s32.totalorder %s87, %s88
      %p102 = scmp.eq.s32.totalorder %s30, 3
      %p103 = por %p101, %p102
      %p105 = scmp.ne.s32.totalorder %s88, %s104
      %p106 = scmp.eq.s32.totalorder %s30, 0
      %p107 = por %p105, %p106
      %s108 = sadd.s32 %s31, 1
      %s109 = smul.u32 %s108, 8
      %p110 = scmp.lt.s32.totalorder %s109, 15
      %s111 = scalar_select %p110, %s109, 15
      %s112 = sadd.s32 %s43, 1
      %s113 = smul.u32 %s112, 8
      %p114 = scmp.lt.s32.totalorder %s113, 15
      %s115 = scalar_select %p114, %s113, 15
      %s116 = ssub.s32 %s32, %s39
      %s117 = ssub.s32 %s111, %s115
      %s118 = sor.u32 %s116, %s117
      %p119 = scmp.eq.s32.totalorder %s118, 0
      %s121 = sadd.s32 %s120, 1
      %s122 = scalar_select %p119, %s120, %s121
      %p125 = pneg %p119
      %p126 = scmp.eq.s32.totalorder %s24, 3
      %p127 = por %p125, %p126
      %p128 = scmp.ne.s32.totalorder %s120, %s123
      %p129 = scmp.eq.s32.totalorder %s24, 0
      %p130 = por %p128, %p129
      %p131 = scmp.ne.s32.totalorder %s120, %s123
      %p132 = scmp.eq.s32.totalorder %s29, 3
      %p133 = por %p131, %p132
      %p134 = scmp.ne.s32.totalorder %s123, %s124
      %p135 = scmp.eq.s32.totalorder %s29, 0
      %p136 = por %p134, %p135
      %p137 = scmp.ne.s32.totalorder %s123, %s124
      %p138 = scmp.eq.s32.totalorder %s30, 3
      %p139 = por %p137, %p138
      %p141 = scmp.ne.s32.totalorder %s124, %s140
      %p142 = scmp.eq.s32.totalorder %s30, 0
      %p143 = por %p141, %p142
      %s145 = sadd.s32 %s144, 1
      %p148 = scmp.eq.s32.totalorder %s24, 3
      %p149 = scmp.ne.s32.totalorder %s144, %s146
      %p150 = scmp.eq.s32.totalorder %s24, 0
      %p151 = por %p149, %p150
      %p152 = scmp.ne.s32.totalorder %s144, %s146
      %p153 = scmp.eq.s32.totalorder %s29, 3
      %p154 = por %p152, %p153
      %p155 = scmp.ne.s32.totalorder %s146, %s147
      %p156 = scmp.eq.s32.totalorder %s29, 0
      %p157 = por %p155, %p156
      %p158 = scmp.ne.s32.totalorder %s146, %s147
      %p159 = scmp.eq.s32.totalorder %s30, 3
      %p160 = por %p158, %p159
      %p162 = scmp.ne.s32.totalorder %s147, %s161
      %p163 = scmp.eq.s32.totalorder %s30, 0
      %p164 = por %p162, %p163
      %s166 = sadd.s32 %s165, 1
      %p169 = scmp.eq.s32.totalorder %s24, 3
      %p170 = scmp.ne.s32.totalorder %s165, %s167
      %p171 = scmp.eq.s32.totalorder %s24, 0
      %p172 = por %p170, %p171
      %p173 = scmp.ne.s32.totalorder %s165, %s167
      %p174 = scmp.eq.s32.totalorder %s29, 3
      %p175 = por %p173, %p174
      %p176 = scmp.ne.s32.totalorder %s167, %s168
      %p177 = scmp.eq.s32.totalorder %s29, 0
      %p178 = por %p176, %p177
      %p179 = scmp.ne.s32.totalorder %s167, %s168
      %p180 = scmp.eq.s32.totalorder %s30, 3
      %p181 = por %p179, %p180
      %p183 = scmp.ne.s32.totalorder %s168, %s182
      %p184 = scmp.eq.s32.totalorder %s30, 0
      %p185 = por %p183, %p184
      %s187 = sadd.s32 %s186, 1
      %p190 = scmp.eq.s32.totalorder %s24, 3
      %p191 = scmp.ne.s32.totalorder %s186, %s188
      %p192 = scmp.eq.s32.totalorder %s24, 0
      %p193 = por %p191, %p192
      %p194 = scmp.ne.s32.totalorder %s186, %s188
      %p195 = scmp.eq.s32.totalorder %s29, 3
      %p196 = por %p194, %p195
      %p197 = scmp.ne.s32.totalorder %s188, %s189
      %p198 = scmp.eq.s32.totalorder %s29, 0
      %p199 = por %p197, %p198
      %p200 = scmp.ne.s32.totalorder %s188, %s189
      %p201 = scmp.eq.s32.totalorder %s30, 3
      %p202 = por %p200, %p201
      %p204 = scmp.ne.s32.totalorder %s189, %s203
      %p205 = scmp.eq.s32.totalorder %s30, 0
      %p206 = por %p204, %p205
      %s208 = sadd.s32 %s207, 1
      %p211 = scmp.eq.s32.totalorder %s24, 3
      %p212 = scmp.ne.s32.totalorder %s207, %s209
      %p213 = scmp.eq.s32.totalorder %s24, 0
      %p214 = por %p212, %p213
      %p215 = scmp.ne.s32.totalorder %s207, %s209
      %p216 = scmp.eq.s32.totalorder %s29, 3
      %p217 = por %p215, %p216
      %p218 = scmp.ne.s32.totalorder %s209, %s210
      %p219 = scmp.eq.s32.totalorder %s29, 0
      %p220 = por %p218, %p219
      %p221 = scmp.ne.s32.totalorder %s209, %s210
      %p222 = scmp.eq.s32.totalorder %s30, 3
      %p223 = por %p221, %p222
      %p225 = scmp.ne.s32.totalorder %s210, %s224
      %p226 = scmp.eq.s32.totalorder %s30, 0
      %p227 = por %p225, %p226
      %s228 = ssub.s32 %s32, %s39
      %s229 = ssub.s32 %s31, %s43
      %s230 = sor.u32 %s228, %s229
      %p231 = scmp.eq.s32.totalorder %s230, 0
      %s233 = sadd.s32 %s232, 1
      %s234 = scalar_select %p231, %s232, %s233
      %p237 = pneg %p231
      %p238 = scmp.eq.s32.totalorder %s24, 3
      %p239 = por %p237, %p238
      %p240 = scmp.ne.s32.totalorder %s232, %s235
      %p241 = scmp.eq.s32.totalorder %s24, 0
      %p242 = por %p240, %p241
      %p243 = scmp.ne.s32.totalorder %s232, %s235
      %p244 = scmp.eq.s32.totalorder %s29, 3
      %p245 = por %p243, %p244
      %p246 = scmp.ne.s32.totalorder %s235, %s236
      %p247 = scmp.eq.s32.totalorder %s29, 0
      %p248 = por %p246, %p247
      %p249 = scmp.ne.s32.totalorder %s235, %s236
      %p250 = scmp.eq.s32.totalorder %s30, 3
      %p251 = por %p249, %p250
      %p253 = scmp.ne.s32.totalorder %s236, %s252
      %p254 = scmp.eq.s32.totalorder %s30, 0
      %p255 = por %p253, %p254
      %p256 = scmp.le.s32.totalorder 1, %s24
      %p257 = scmp.lt.s32.totalorder %s24, 5
      %p258 = pnand %p256, %p257
      %p259 = pneg %p258
      // Predicated region
      $region9: #{tpu_custom_call.1} parent=5 // pred_check
        _
      $region10: #{tpu_custom_call.1} parent=5 // pred_check_branch
        %261 = sbr.rel (%p258) target = $region12
      $region11: #{tpu_custom_call.1} parent=5 // pred_region
        %s262 = ssub.s32 %s24, 1
        // Predicated region
        $region13: #{tpu_custom_call.1} parent=11 // pred_check
          %p263 = pneg %p157
        $region14: #{tpu_custom_call.1} parent=11 // pred_check_branch
          %265 = sbr.rel (%p263) target = $region16
        $region15: #{tpu_custom_call.1} parent=11 // pred_region
          %s267 = ssub.s32 2048, 2048
          %268 = vsyncadd [#allocation9], %s267
          %s269 = sshll.u32 [#allocation8], 4
          %s270 = int_to_ptr.vmem [resolvable:$true] %s269
          %275 = dma.hbm_to_vmem [thread:$0]  %s3, 2048, %s270, [#allocation9], 128, 128, 8
        $region16: #{tpu_custom_call.1} parent=11 // pred_fallthru
          _
        // Predicated region
        $region17: #{tpu_custom_call.1} parent=11 // pred_check
          %p276 = pneg %p178
        $region18: #{tpu_custom_call.1} parent=11 // pred_check_branch
          %278 = sbr.rel (%p276) target = $region20
        $region19: #{tpu_custom_call.1} parent=11 // pred_region
          %s280 = ssub.s32 32, 32
          %281 = vsyncadd [#allocation9], %s280
          %s283 = sshll.u32 [#allocation10], 4
          %s284 = int_to_ptr.vmem [resolvable:$true] %s283
          %286 = dma.hbm_to_vmem [thread:$0]  %s4, 32, %s284, [#allocation9]
        $region20: #{tpu_custom_call.1} parent=11 // pred_fallthru
          _
        // Predicated region
        $region21: #{tpu_custom_call.1} parent=11 // pred_check
          %p287 = pneg %p199
        $region22: #{tpu_custom_call.1} parent=11 // pred_check_branch
          %289 = sbr.rel (%p287) target = $region24
        $region23: #{tpu_custom_call.1} parent=11 // pred_region
          _
        $region24: #{tpu_custom_call.1} parent=11 // pred_fallthru
          _
        // Predicated region
        $region25: #{tpu_custom_call.1} parent=11 // pred_check
          %p290 = pneg %p220
        $region26: #{tpu_custom_call.1} parent=11 // pred_check_branch
          %292 = sbr.rel (%p290) target = $region28
        $region27: #{tpu_custom_call.1} parent=11 // pred_region
          %s294 = ssub.s32 1024, 1024
          %295 = vsyncadd [#allocation12], %s294
          %s296 = sshll.u32 [#allocation11], 4
          %s297 = int_to_ptr.vmem [resolvable:$true] %s296
          %302 = dma.hbm_to_vmem [thread:$0]  %s6, 1024, %s297, [#allocation12], 64, 64, 4
        $region28: #{tpu_custom_call.1} parent=11 // pred_fallthru
          _
      $region12: #{tpu_custom_call.1} parent=5 // pred_fallthru
        _
      %p303 = scmp.lt.s32.totalorder %s24, 4
      // Predicated region
      $region29: #{tpu_custom_call.1} parent=5 // pred_check
        %p304 = pneg %p303
      $region30: #{tpu_custom_call.1} parent=5 // pred_check_branch
        %306 = sbr.rel (%p304) target = $region32
      $region31: #{tpu_custom_call.1} parent=5 // pred_region
        // Predicated region
        $region33: #{tpu_custom_call.1} parent=31 // pred_check
          %p307 = pneg %p58
        $region34: #{tpu_custom_call.1} parent=31 // pred_check_branch
          %309 = sbr.rel (%p307) target = $region36
        $region35: #{tpu_custom_call.1} parent=31 // pred_region
          %s310 = sand.u32 %s48, 1
          %s311 = scalar_lea.sflag [#allocation3], %s310
          %s312 = sand.u32 %s48, 1
          %s313 = smul.addr %s312, 128
          %s314 = scalar_lea.vmem [#allocation2], %s313
          %s315 = smul.u32 16, %s31
          %s317 = ssub.s32 2048, 2048
          %318 = vsyncadd %s311, %s317
          %s319 = smul.addr %s32, 32
          %s320 = sadd.s32 %s315, %s319
          %s321 = smul.addr %s320, 128
          %s322 = scalar_lea.hbm %s0, %s321
          %s323 = sshll.u32 %s314, 4
          %s324 = int_to_ptr.vmem [resolvable:$true] %s323
          %329 = dma.hbm_to_vmem [thread:$0]  %s322, 2048, %s324, %s311, 128, 128, 8
        $region36: #{tpu_custom_call.1} parent=31 // pred_fallthru
          _
        // Predicated region
        $region37: #{tpu_custom_call.1} parent=31 // pred_check
          %p330 = pneg %p94
        $region38: #{tpu_custom_call.1} parent=31 // pred_check_branch
          %332 = sbr.rel (%p330) target = $region40
        $region39: #{tpu_custom_call.1} parent=31 // pred_region
          %s333 = sand.u32 %s24, 1
          %s334 = scalar_lea.sflag [#allocation6], %s333
          %s335 = sand.u32 %s84, 1
          %s336 = smul.addr %s335, 16
          %s337 = scalar_lea.vmem [#allocation5], %s336
          %s338 = smul.u32 %s31, 8
          %s339 = ssub.s32 %s338, 1
          %p340 = scmp.gt.s32.totalorder %s339, 0
          %s341 = scalar_select %p340, %s339, 0
          %s342 = smul.u32 2, %s341
          %s344 = ssub.s32 256, 256
          %345 = vsyncadd %s334, %s344
          %s346 = smul.addr %s32, 32
          %s347 = sadd.s32 %s342, %s346
          %s348 = smul.addr %s347, 128
          %s349 = scalar_lea.hbm %s1, %s348
          %s350 = sshll.u32 %s337, 4
          %s351 = int_to_ptr.vmem [resolvable:$true] %s350
          %356 = dma.hbm_to_vmem [thread:$0]  %s349, 256, %s351, %s334, 128, 128, 8
        $region40: #{tpu_custom_call.1} parent=31 // pred_fallthru
          _
        // Predicated region
        $region41: #{tpu_custom_call.1} parent=31 // pred_check
          %p357 = pneg %p130
        $region42: #{tpu_custom_call.1} parent=31 // pred_check_branch
          %359 = sbr.rel (%p357) target = $region44
        $region43: #{tpu_custom_call.1} parent=31 // pred_region
          %s360 = sand.u32 %s24, 1
          %s361 = scalar_lea.sflag [#allocation6], %s360
          %s362 = sand.u32 %s120, 1
          %s363 = smul.addr %s362, 16
          %s364 = scalar_lea.vmem [#allocation7], %s363
          %s365 = sadd.s32 %s31, 1
          %s366 = smul.u32 %s365, 8
          %p367 = scmp.lt.s32.totalorder %s366, 15
          %s368 = scalar_select %p367, %s366, 15
          %s369 = smul.u32 2, %s368
          %s371 = ssub.s32 256, 256
          %372 = vsyncadd %s361, %s371
          %s373 = smul.addr %s32, 32
          %s374 = sadd.s32 %s369, %s373
          %s375 = smul.addr %s374, 128
          %s376 = scalar_lea.hbm %s2, %s375
          %s377 = sshll.u32 %s364, 4
          %s378 = int_to_ptr.vmem [resolvable:$true] %s377
          %383 = dma.hbm_to_vmem [thread:$0]  %s376, 256, %s378, %s361, 128, 128, 8
        $region44: #{tpu_custom_call.1} parent=31 // pred_fallthru
          _
      $region32: #{tpu_custom_call.1} parent=5 // pred_fallthru
        _
      %p384 = scmp.le.s32.totalorder 1, %s24
      %p385 = scmp.lt.s32.totalorder %s24, 5
      %p386 = pnand %p384, %p385
      %p387 = pneg %p386
      // Predicated region
      $region45: #{tpu_custom_call.1} parent=5 // pred_check
        _
      $region46: #{tpu_custom_call.1} parent=5 // pred_check_branch
        %389 = sbr.rel (%p386) target = $region48
      $region47: #{tpu_custom_call.1} parent=5 // pred_region
        %s390 = ssub.s32 %s24, 1
        %s391 = sand.u32 %s51, 1
        %s392 = scalar_lea.sflag [#allocation3], %s391
        %s393 = sand.u32 %s51, 1
        %s394 = smul.addr %s393, 128
        %s395 = scalar_lea.vmem [#allocation2], %s394
        // Predicated region
        $region49: #{tpu_custom_call.1} parent=47 // pred_check
          %p396 = pneg %p64
        $region50: #{tpu_custom_call.1} parent=47 // pred_check_branch
          %398 = sbr.rel (%p396) target = $region52
        $region51: #{tpu_custom_call.1} parent=47 // pred_region
          %399 = dma.done %s392, 2048
        $region52: #{tpu_custom_call.1} parent=47 // pred_fallthru
          _
        %s400 = sand.u32 %s29, 1
        %s401 = scalar_lea.sflag [#allocation6], %s400
        %s402 = sand.u32 %s87, 1
        %s403 = smul.addr %s402, 16
        %s404 = scalar_lea.vmem [#allocation5], %s403
        // Predicated region
        $region53: #{tpu_custom_call.1} parent=47 // pred_check
          %p405 = pneg %p100
        $region54: #{tpu_custom_call.1} parent=47 // pred_check_branch
          %407 = sbr.rel (%p405) target = $region56
        $region55: #{tpu_custom_call.1} parent=47 // pred_region
          %408 = dma.done %s401, 256
        $region56: #{tpu_custom_call.1} parent=47 // pred_fallthru
          _
        %s409 = sand.u32 %s29, 1
        %s410 = scalar_lea.sflag [#allocation6], %s409
        %s411 = sand.u32 %s123, 1
        %s412 = smul.addr %s411, 16
        %s413 = scalar_lea.vmem [#allocation7], %s412
        // Predicated region
        $region57: #{tpu_custom_call.1} parent=47 // pred_check
          %p414 = pneg %p136
        $region58: #{tpu_custom_call.1} parent=47 // pred_check_branch
          %416 = sbr.rel (%p414) target = $region60
        $region59: #{tpu_custom_call.1} parent=47 // pred_region
          %417 = dma.done %s410, 256
        $region60: #{tpu_custom_call.1} parent=47 // pred_fallthru
          _
        // Predicated region
        $region61: #{tpu_custom_call.1} parent=47 // pred_check
          %p418 = pneg %p157
        $region62: #{tpu_custom_call.1} parent=47 // pred_check_branch
          %420 = sbr.rel (%p418) target = $region64
        $region63: #{tpu_custom_call.1} parent=47 // pred_region
          %421 = dma.done [#allocation9], 2048
        $region64: #{tpu_custom_call.1} parent=47 // pred_fallthru
          _
        // Predicated region
        $region65: #{tpu_custom_call.1} parent=47 // pred_check
          %p422 = pneg %p178
        $region66: #{tpu_custom_call.1} parent=47 // pred_check_branch
          %424 = sbr.rel (%p422) target = $region68
        $region67: #{tpu_custom_call.1} parent=47 // pred_region
          %425 = dma.done [#allocation9], 32
        $region68: #{tpu_custom_call.1} parent=47 // pred_fallthru
          _
        // Predicated region
        $region69: #{tpu_custom_call.1} parent=47 // pred_check
          %p426 = pneg %p220
        $region70: #{tpu_custom_call.1} parent=47 // pred_check_branch
          %428 = sbr.rel (%p426) target = $region72
        $region71: #{tpu_custom_call.1} parent=47 // pred_region
          %429 = dma.done [#allocation12], 1024
        $region72: #{tpu_custom_call.1} parent=47 // pred_fallthru
          _
        %s430 = sand.u32 %s51, 1
        %s431 = scalar_lea.sflag [#allocation3], %s430
        %s432 = sand.u32 %s51, 1
        %s433 = smul.addr %s432, 128
        %s434 = scalar_lea.vmem [#allocation2], %s433
        %p435 = pneg %p64
        %p436 = pneg %p61
        %s437 = sand.u32 %s29, 1
        %s438 = scalar_lea.sflag [#allocation6], %s437
        %s439 = sand.u32 %s87, 1
        %s440 = smul.addr %s439, 16
        %s441 = scalar_lea.vmem [#allocation5], %s440
        %p442 = pneg %p100
        %p443 = pneg %p97
        %s444 = sand.u32 %s29, 1
        %s445 = scalar_lea.sflag [#allocation6], %s444
        %s446 = sand.u32 %s123, 1
        %s447 = smul.addr %s446, 16
        %s448 = scalar_lea.vmem [#allocation7], %s447
        %p449 = pneg %p136
        %p450 = pneg %p133
        %p451 = pneg %p157
        %p452 = pneg %p154
        %p453 = pneg %p178
        %p454 = pneg %p175
        %p455 = pneg %p199
        %p456 = pneg %p196
        %p457 = pneg %p220
        %p458 = pneg %p217
        %p459 = pneg %p248
        %p460 = pneg %p245
        %s461 = sand.u32 %s235, 1
        %s462 = scalar_lea.sflag [#allocation4], %s461
        %s463 = sand.u32 %s235, 1
        %s464 = smul.addr %s463, 128
        %s465 = scalar_lea.vmem [#allocation13], %s464
        %s466 = smul.u32 16, %s33
        %s467 = smul.u32 %s33, 8
        %s468 = ssub.s32 %s467, 1
        %p469 = scmp.gt.s32.totalorder %s468, 0
        %s470 = scalar_select %p469, %s468, 0
        %s471 = smul.u32 2, %s470
        %s472 = sadd.s32 %s33, 1
        %s473 = smul.u32 %s472, 8
        %p474 = scmp.lt.s32.totalorder %s473, 15
        %s475 = scalar_select %p474, %s473, 15
        %s476 = smul.u32 2, %s475
        %s477 = smul.u32 16, %s33
        %v479 = vld [vmem:[%s404] sm:$0xff]
        %v480 = vld [vmem:[%s404 + $0x8] sm:$0xff]
        %v481 = vld [vmem:[%s395] sm:$0xff]
        %v482 = vld [vmem:[%s395 + $0x8] sm:$0xff]
        %v483 = vld [vmem:[%s395 + $0x10] sm:$0xff]
        %v484 = vld [vmem:[%s395 + $0x18] sm:$0xff]
        %v485 = vld [vmem:[%s395 + $0x20] sm:$0xff]
        %v486 = vld [vmem:[%s395 + $0x28] sm:$0xff]
        %v487 = vld [vmem:[%s395 + $0x30] sm:$0xff]
        %v488 = vld [vmem:[%s395 + $0x38] sm:$0xff]
        %v489 = vld [vmem:[%s395 + $0x40] sm:$0xff]
        %v490 = vld [vmem:[%s395 + $0x48] sm:$0xff]
        %v491 = vld [vmem:[%s395 + $0x50] sm:$0xff]
        %v492 = vld [vmem:[%s395 + $0x58] sm:$0xff]
        %v493 = vld [vmem:[%s395 + $0x60] sm:$0xff]
        %v494 = vld [vmem:[%s395 + $0x68] sm:$0xff]
        %v495 = vld [vmem:[%s395 + $0x70] sm:$0xff]
        %v496 = vld [vmem:[%s395 + $0x78] sm:$0xff]
        %v497 = vld [vmem:[%s413] sm:$0xff]
        %v498 = vld [vmem:[%s413 + $0x8] sm:$0xff]
        %499 = vadd.xlane.f32.xlu0 %v479
        %v500 = vpop.xlane.xlu0 %499
        %501 = vadd.xlane.f32.xlu0 %v480
        %v502 = vpop.xlane.xlu0 %501
        %v503 = vmul.f32 %v479, %v479
        %v504 = vmul.f32 %v480, %v480
        %505 = vadd.xlane.f32.xlu0 %v503
        %v506 = vpop.xlane.xlu0 %505
        %507 = vadd.xlane.f32.xlu0 %v504
        %v508 = vpop.xlane.xlu0 %507
        %v509 = vmul.f32 %v500, 0.0078125
        %v510 = vmul.f32 %v502, 0.0078125
        %v511 = vmul.f32 %v506, 0.0078125
        %v512 = vmul.f32 %v508, 0.0078125
        %v513 = vmul.f32 %v509, %v509
        %v514 = vmul.f32 %v510, %v510
        %v515 = vsub.f32 %v511, %v513
        %v516 = vsub.f32 %v512, %v514
        %v517 = vsub.f32 %v479, %v509
        %v518 = vsub.f32 %v480, %v510
        %v519 = vadd.f32 %v515, 1e-05
        %v520 = vadd.f32 %v516, 1e-05
        %v521 = vrsqrt.pop %v519
        %v522 = vrsqrt.pop %v520
        %v523 = vmul.f32 %v517, %v521
        %v524 = vmul.f32 %v518, %v522
        %v525 = vpack.c.bf16 %v524, %v523
        %526 = vadd.xlane.f32.xlu0 %v481
        %v527 = vpop.xlane.xlu0 %526
        %528 = vadd.xlane.f32.xlu0 %v482
        %v529 = vpop.xlane.xlu0 %528
        %530 = vadd.xlane.f32.xlu0 %v483
        %v531 = vpop.xlane.xlu0 %530
        %532 = vadd.xlane.f32.xlu0 %v484
        %v533 = vpop.xlane.xlu0 %532
        %534 = vadd.xlane.f32.xlu0 %v485
        %v535 = vpop.xlane.xlu0 %534
        %536 = vadd.xlane.f32.xlu0 %v486
        %v537 = vpop.xlane.xlu0 %536
        %538 = vadd.xlane.f32.xlu0 %v487
        %v539 = vpop.xlane.xlu0 %538
        %540 = vadd.xlane.f32.xlu0 %v488
        %v541 = vpop.xlane.xlu0 %540
        %542 = vadd.xlane.f32.xlu0 %v489
        %v543 = vpop.xlane.xlu0 %542
        %544 = vadd.xlane.f32.xlu0 %v490
        %v545 = vpop.xlane.xlu0 %544
        %546 = vadd.xlane.f32.xlu0 %v491
        %v547 = vpop.xlane.xlu0 %546
        %548 = vadd.xlane.f32.xlu0 %v492
        %v549 = vpop.xlane.xlu0 %548
        %550 = vadd.xlane.f32.xlu0 %v493
        %v551 = vpop.xlane.xlu0 %550
        %552 = vadd.xlane.f32.xlu0 %v494
        %v553 = vpop.xlane.xlu0 %552
        %554 = vadd.xlane.f32.xlu0 %v495
        %v555 = vpop.xlane.xlu0 %554
        %556 = vadd.xlane.f32.xlu0 %v496
        %v557 = vpop.xlane.xlu0 %556
        %v558 = vmul.f32 %v481, %v481
        %v559 = vmul.f32 %v482, %v482
        %v560 = vmul.f32 %v483, %v483
        %v561 = vmul.f32 %v484, %v484
        %v562 = vmul.f32 %v485, %v485
        %v563 = vmul.f32 %v486, %v486
        %v564 = vmul.f32 %v487, %v487
        %v565 = vmul.f32 %v488, %v488
        %v566 = vmul.f32 %v489, %v489
        %v567 = vmul.f32 %v490, %v490
        %v568 = vmul.f32 %v491, %v491
        %v569 = vmul.f32 %v492, %v492
        %v570 = vmul.f32 %v493, %v493
        %v571 = vmul.f32 %v494, %v494
        %v572 = vmul.f32 %v495, %v495
        %v573 = vmul.f32 %v496, %v496
        %574 = vadd.xlane.f32.xlu0 %v558
        %v575 = vpop.xlane.xlu0 %574
        %576 = vadd.xlane.f32.xlu0 %v559
        %v577 = vpop.xlane.xlu0 %576
        %578 = vadd.xlane.f32.xlu0 %v560
        %v579 = vpop.xlane.xlu0 %578
        %580 = vadd.xlane.f32.xlu0 %v561
        %v581 = vpop.xlane.xlu0 %580
        %582 = vadd.xlane.f32.xlu0 %v562
        %v583 = vpop.xlane.xlu0 %582
        %584 = vadd.xlane.f32.xlu0 %v563
        %v585 = vpop.xlane.xlu0 %584
        %586 = vadd.xlane.f32.xlu0 %v564
        %v587 = vpop.xlane.xlu0 %586
        %588 = vadd.xlane.f32.xlu0 %v565
        %v589 = vpop.xlane.xlu0 %588
        %590 = vadd.xlane.f32.xlu0 %v566
        %v591 = vpop.xlane.xlu0 %590
        %592 = vadd.xlane.f32.xlu0 %v567
        %v593 = vpop.xlane.xlu0 %592
        %594 = vadd.xlane.f32.xlu0 %v568
        %v595 = vpop.xlane.xlu0 %594
        %596 = vadd.xlane.f32.xlu0 %v569
        %v597 = vpop.xlane.xlu0 %596
        %598 = vadd.xlane.f32.xlu0 %v570
        %v599 = vpop.xlane.xlu0 %598
        %600 = vadd.xlane.f32.xlu0 %v571
        %v601 = vpop.xlane.xlu0 %600
        %602 = vadd.xlane.f32.xlu0 %v572
        %v603 = vpop.xlane.xlu0 %602
        %604 = vadd.xlane.f32.xlu0 %v573
        %v605 = vpop.xlane.xlu0 %604
        %v606 = vmul.f32 %v527, 0.0078125
        %v607 = vmul.f32 %v529, 0.0078125
        %v608 = vmul.f32 %v531, 0.0078125
        %v609 = vmul.f32 %v533, 0.0078125
        %v610 = vmul.f32 %v535, 0.0078125
        %v611 = vmul.f32 %v537, 0.0078125
        %v612 = vmul.f32 %v539, 0.0078125
        %v613 = vmul.f32 %v541, 0.0078125
        %v614 = vmul.f32 %v543, 0.0078125
        %v615 = vmul.f32 %v545, 0.0078125
        %v616 = vmul.f32 %v547, 0.0078125
        %v617 = vmul.f32 %v549, 0.0078125
        %v618 = vmul.f32 %v551, 0.0078125
        %v619 = vmul.f32 %v553, 0.0078125
        %v620 = vmul.f32 %v555, 0.0078125
        %v621 = vmul.f32 %v557, 0.0078125
        %v622 = vmul.f32 %v575, 0.0078125
        %v623 = vmul.f32 %v577, 0.0078125
        %v624 = vmul.f32 %v579, 0.0078125
        %v625 = vmul.f32 %v581, 0.0078125
        %v626 = vmul.f32 %v583, 0.0078125
        %v627 = vmul.f32 %v585, 0.0078125
        %v628 = vmul.f32 %v587, 0.0078125
        %v629 = vmul.f32 %v589, 0.0078125
        %v630 = vmul.f32 %v591, 0.0078125
        %v631 = vmul.f32 %v593, 0.0078125
        %v632 = vmul.f32 %v595, 0.0078125
        %v633 = vmul.f32 %v597, 0.0078125
        %v634 = vmul.f32 %v599, 0.0078125
        %v635 = vmul.f32 %v601, 0.0078125
        %v636 = vmul.f32 %v603, 0.0078125
        %v637 = vmul.f32 %v605, 0.0078125
        %v638 = vmul.f32 %v606, %v606
        %v639 = vmul.f32 %v607, %v607
        %v640 = vmul.f32 %v608, %v608
        %v641 = vmul.f32 %v609, %v609
        %v642 = vmul.f32 %v610, %v610
        %v643 = vmul.f32 %v611, %v611
        %v644 = vmul.f32 %v612, %v612
        %v645 = vmul.f32 %v613, %v613
        %v646 = vmul.f32 %v614, %v614
        %v647 = vmul.f32 %v615, %v615
        %v648 = vmul.f32 %v616, %v616
        %v649 = vmul.f32 %v617, %v617
        %v650 = vmul.f32 %v618, %v618
        %v651 = vmul.f32 %v619, %v619
        %v652 = vmul.f32 %v620, %v620
        %v653 = vmul.f32 %v621, %v621
        %v654 = vsub.f32 %v622, %v638
        %v655 = vsub.f32 %v623, %v639
        %v656 = vsub.f32 %v624, %v640
        %v657 = vsub.f32 %v625, %v641
        %v658 = vsub.f32 %v626, %v642
        %v659 = vsub.f32 %v627, %v643
        %v660 = vsub.f32 %v628, %v644
        %v661 = vsub.f32 %v629, %v645
        %v662 = vsub.f32 %v630, %v646
        %v663 = vsub.f32 %v631, %v647
        %v664 = vsub.f32 %v632, %v648
        %v665 = vsub.f32 %v633, %v649
        %v666 = vsub.f32 %v634, %v650
        %v667 = vsub.f32 %v635, %v651
        %v668 = vsub.f32 %v636, %v652
        %v669 = vsub.f32 %v637, %v653
        %v670 = vsub.f32 %v481, %v606
        %v671 = vsub.f32 %v482, %v607
        %v672 = vsub.f32 %v483, %v608
        %v673 = vsub.f32 %v484, %v609
        %v674 = vsub.f32 %v485, %v610
        %v675 = vsub.f32 %v486, %v611
        %v676 = vsub.f32 %v487, %v612
        %v677 = vsub.f32 %v488, %v613
        %v678 = vsub.f32 %v489, %v614
        %v679 = vsub.f32 %v490, %v615
        %v680 = vsub.f32 %v491, %v616
        %v681 = vsub.f32 %v492, %v617
        %v682 = vsub.f32 %v493, %v618
        %v683 = vsub.f32 %v494, %v619
        %v684 = vsub.f32 %v495, %v620
        %v685 = vsub.f32 %v496, %v621
        %v686 = vadd.f32 %v654, 1e-05
        %v687 = vadd.f32 %v655, 1e-05
        %v688 = vadd.f32 %v656, 1e-05
        %v689 = vadd.f32 %v657, 1e-05
        %v690 = vadd.f32 %v658, 1e-05
        %v691 = vadd.f32 %v659, 1e-05
        %v692 = vadd.f32 %v660, 1e-05
        %v693 = vadd.f32 %v661, 1e-05
        %v694 = vadd.f32 %v662, 1e-05
        %v695 = vadd.f32 %v663, 1e-05
        %v696 = vadd.f32 %v664, 1e-05
        %v697 = vadd.f32 %v665, 1e-05
        %v698 = vadd.f32 %v666, 1e-05
        %v699 = vadd.f32 %v667, 1e-05
        %v700 = vadd.f32 %v668, 1e-05
        %v701 = vadd.f32 %v669, 1e-05
        %v702 = vrsqrt.pop %v686
        %v703 = vrsqrt.pop %v687
        %v704 = vrsqrt.pop %v688
        %v705 = vrsqrt.pop %v689
        %v706 = vrsqrt.pop %v690
        %v707 = vrsqrt.pop %v691
        %v708 = vrsqrt.pop %v692
        %v709 = vrsqrt.pop %v693
        %v710 = vrsqrt.pop %v694
        %v711 = vrsqrt.pop %v695
        %v712 = vrsqrt.pop %v696
        %v713 = vrsqrt.pop %v697
        %v714 = vrsqrt.pop %v698
        %v715 = vrsqrt.pop %v699
        %v716 = vrsqrt.pop %v700
        %v717 = vrsqrt.pop %v701
        %v718 = vmul.f32 %v670, %v702
        %v719 = vmul.f32 %v671, %v703
        %v720 = vmul.f32 %v672, %v704
        %v721 = vmul.f32 %v673, %v705
        %v722 = vmul.f32 %v674, %v706
        %v723 = vmul.f32 %v675, %v707
        %v724 = vmul.f32 %v676, %v708
        %v725 = vmul.f32 %v677, %v709
        %v726 = vmul.f32 %v678, %v710
        %v727 = vmul.f32 %v679, %v711
        %v728 = vmul.f32 %v680, %v712
        %v729 = vmul.f32 %v681, %v713
        %v730 = vmul.f32 %v682, %v714
        %v731 = vmul.f32 %v683, %v715
        %v732 = vmul.f32 %v684, %v716
        %v733 = vmul.f32 %v685, %v717
        %v734 = vpack.c.bf16 %v719, %v718
        %v735 = vpack.c.bf16 %v721, %v720
        %v736 = vpack.c.bf16 %v723, %v722
        %v737 = vpack.c.bf16 %v725, %v724
        %v738 = vpack.c.bf16 %v727, %v726
        %v739 = vpack.c.bf16 %v729, %v728
        %v740 = vpack.c.bf16 %v731, %v730
        %v741 = vpack.c.bf16 %v733, %v732
        %742 = vadd.xlane.f32.xlu0 %v497
        %v743 = vpop.xlane.xlu0 %742
        %744 = vadd.xlane.f32.xlu0 %v498
        %v745 = vpop.xlane.xlu0 %744
        %v746 = vmul.f32 %v497, %v497
        %v747 = vmul.f32 %v498, %v498
        %748 = vadd.xlane.f32.xlu0 %v746
        %v749 = vpop.xlane.xlu0 %748
        %750 = vadd.xlane.f32.xlu0 %v747
        %v751 = vpop.xlane.xlu0 %750
        %v752 = vmul.f32 %v743, 0.0078125
        %v753 = vmul.f32 %v745, 0.0078125
        %v754 = vmul.f32 %v749, 0.0078125
        %v755 = vmul.f32 %v751, 0.0078125
        %v756 = vmul.f32 %v752, %v752
        %v757 = vmul.f32 %v753, %v753
        %v758 = vsub.f32 %v754, %v756
        %v759 = vsub.f32 %v755, %v757
        %v760 = vsub.f32 %v497, %v752
        %v761 = vsub.f32 %v498, %v753
        %v762 = vadd.f32 %v758, 1e-05
        %v763 = vadd.f32 %v759, 1e-05
        %v764 = vrsqrt.pop %v762
        %v765 = vrsqrt.pop %v763
        %v766 = vmul.f32 %v760, %v764
        %v767 = vmul.f32 %v761, %v765
        %v768 = vpack.c.bf16 %v767, %v766
        %v769 = vld [vmem:[#allocation8] sm:$0xff]
        %v770 = vld [vmem:[#allocation8 + $0x8] sm:$0xff]
        %v771 = vld [vmem:[#allocation8 + $0x10] sm:$0xff]
        %v772 = vld [vmem:[#allocation8 + $0x18] sm:$0xff]
        %v773 = vld [vmem:[#allocation8 + $0x20] sm:$0xff]
        %v774 = vld [vmem:[#allocation8 + $0x28] sm:$0xff]
        %v775 = vld [vmem:[#allocation8 + $0x30] sm:$0xff]
        %v776 = vld [vmem:[#allocation8 + $0x38] sm:$0xff]
        %v777 = vld [vmem:[#allocation8 + $0x40] sm:$0xff]
        %v778 = vld [vmem:[#allocation8 + $0x48] sm:$0xff]
        %v779 = vld [vmem:[#allocation8 + $0x50] sm:$0xff]
        %v780 = vld [vmem:[#allocation8 + $0x58] sm:$0xff]
        %v781 = vld [vmem:[#allocation8 + $0x60] sm:$0xff]
        %v782 = vld [vmem:[#allocation8 + $0x68] sm:$0xff]
        %v783 = vld [vmem:[#allocation8 + $0x70] sm:$0xff]
        %v784 = vld [vmem:[#allocation8 + $0x78] sm:$0xff]
        %v785 = vld [vmem:[#allocation10] sm:$0x3]
        %v787 = vlaneseq
        %v788 = vshrl.u32 %v787, 7
        %v789 = vsub.s32 0, %v788
        %v790 = vrot.slane %v785, %v789
        %v791 = vlaneseq
        %v792 = vshrl.u32 %v791, 7
        %v793 = vsub.s32 1, %v792
        %v794 = vrot.slane %v785, %v793
        %v813 = vunpack.c.l.b16 %v769
        %v814 = vunpack.c.h.b16 %v769
        %v815 = vunpack.c.l.b16 %v770
        %v816 = vunpack.c.h.b16 %v770
        %v817 = vunpack.c.l.b16 %v771
        %v818 = vunpack.c.h.b16 %v771
        %v819 = vunpack.c.l.b16 %v772
        %v820 = vunpack.c.h.b16 %v772
        %v821 = vunpack.c.l.b16 %v773
        %v822 = vunpack.c.h.b16 %v773
        %v823 = vunpack.c.l.b16 %v774
        %v824 = vunpack.c.h.b16 %v774
        %v825 = vunpack.c.l.b16 %v775
        %v826 = vunpack.c.h.b16 %v775
        %v827 = vunpack.c.l.b16 %v776
        %v828 = vunpack.c.h.b16 %v776
        %v829 = vunpack.c.l.b16 %v777
        %v830 = vunpack.c.h.b16 %v777
        %v831 = vunpack.c.l.b16 %v778
        %v832 = vunpack.c.h.b16 %v778
        %v833 = vunpack.c.l.b16 %v779
        %v834 = vunpack.c.h.b16 %v779
        %v835 = vunpack.c.l.b16 %v780
        %v836 = vunpack.c.h.b16 %v780
        %v837 = vunpack.c.l.b16 %v781
        %v838 = vunpack.c.h.b16 %v781
        %v839 = vunpack.c.l.b16 %v782
        %v840 = vunpack.c.h.b16 %v782
        %v841 = vunpack.c.l.b16 %v783
        %v842 = vunpack.c.h.b16 %v783
        %v843 = vunpack.c.l.b16 %v784
        %v844 = vunpack.c.h.b16 %v784
        %v845 = vpack.c.b16 %v815, %v813
        %v846 = vpack.c.b16 %v816, %v814
        %v847 = vpack.c.b16 %v819, %v817
        %v848 = vpack.c.b16 %v820, %v818
        %v849 = vpack.c.b16 %v823, %v821
        %v850 = vpack.c.b16 %v824, %v822
        %v851 = vpack.c.b16 %v827, %v825
        %v852 = vpack.c.b16 %v828, %v826
        %v853 = vpack.c.b16 %v831, %v829
        %v854 = vpack.c.b16 %v832, %v830
        %v855 = vpack.c.b16 %v835, %v833
        %v856 = vpack.c.b16 %v836, %v834
        %v857 = vpack.c.b16 %v839, %v837
        %v858 = vpack.c.b16 %v840, %v838
        %v859 = vpack.c.b16 %v843, %v841
        %v860 = vpack.c.b16 %v844, %v842
        %877 = vmatprep.subr.bf16.mxu0 %v860
        %878 = vmatpush1.bf16.msra.mxu0 %v859
        %879 = vmatprep.subr.bf16.mxu0 %v858
        %880 = vmatpush1.bf16.msra.mxu0 %v857
        %881 = vmatprep.subr.bf16.mxu0 %v856
        %882 = vmatpush1.bf16.msra.mxu0 %v855
        %883 = vmatprep.subr.bf16.mxu0 %v854
        %884 = vmatpush1.bf16.msra.mxu0 %v853
        %885 = vmatprep.subr.bf16.mxu0 %v852
        %886 = vmatpush1.bf16.msra.mxu0 %v851
        %887 = vmatprep.subr.bf16.mxu0 %v850
        %888 = vmatpush1.bf16.msra.mxu0 %v849
        %889 = vmatprep.subr.bf16.mxu0 %v848
        %890 = vmatpush1.bf16.msra.mxu0 %v847
        %891 = vmatprep.subr.bf16.mxu0 %v846
        %892 = vmatpush1.bf16.msra.mxu0 %v845
        %893 = vmatprep.subr.bf16.mxu0 0
        %894 = vmatpush2.bf16.msra.mxu0 0
        %895 = vmatprep.subr.bf16.mxu0 0
        %896 = vmatpush2.bf16.msra.mxu0 0
        %897 = vmatprep.subr.bf16.mxu0 0
        %898 = vmatpush2.bf16.msra.mxu0 0
        %899 = vmatprep.subr.bf16.mxu0 0
        %900 = vmatpush2.bf16.msra.mxu0 0
        %901 = vmatprep.subr.bf16.mxu0 0
        %902 = vmatpush2.bf16.msra.mxu0 0
        %903 = vmatprep.subr.bf16.mxu0 0
        %904 = vmatpush2.bf16.msra.mxu0 0
        %905 = vmatprep.subr.bf16.mxu0 0
        %906 = vmatpush2.bf16.msra.mxu0 0
        %907 = vmatprep.subr.bf16.mxu0 0
        %908 = vmatpush2.bf16.msra.mxu0 0
        %909 = vmatprep.mubr.bf16.mxu0 0
        %910 = vmatmul.mubr.bf16.gmra.mxu0 %v525
        %v911 = vpop.f32.mrf.mxu0
        %v912 = vpop.f32.mrf.mxu0
        %v913 = vpop.f32.mrf.mxu0
        %v914 = vadd.f32 %v790, %v913
        %v915 = vpop.f32.mrf.mxu0
        %v916 = vadd.f32 %v794, %v915
        %917 = vmatprep.mubr.bf16.mxu0 0
        %918 = vmatmul.mubr.bf16.gmra.mxu0 %v734
        %v919 = vpop.f32.mrf.mxu0
        %v920 = vadd.f32 %v790, %v919
        %v921 = vpop.f32.mrf.mxu0
        %v922 = vadd.f32 %v794, %v921
        %v923 = vpop.f32.mrf.mxu0
        %v924 = vadd.f32 %v790, %v923
        %v925 = vpop.f32.mrf.mxu0
        %v926 = vadd.f32 %v794, %v925
        %927 = vmatprep.mubr.bf16.mxu0 0
        %928 = vmatmul.mubr.bf16.gmra.mxu0 %v735
        %v929 = vpop.f32.mrf.mxu0
        %v930 = vadd.f32 %v790, %v929
        %v931 = vpop.f32.mrf.mxu0
        %v932 = vadd.f32 %v794, %v931
        %v933 = vpop.f32.mrf.mxu0
        %v934 = vadd.f32 %v790, %v933
        %v935 = vpop.f32.mrf.mxu0
        %v936 = vadd.f32 %v794, %v935
        %937 = vmatprep.mubr.bf16.mxu0 0
        %938 = vmatmul.mubr.bf16.gmra.mxu0 %v736
        %v939 = vpop.f32.mrf.mxu0
        %v940 = vadd.f32 %v790, %v939
        %v941 = vpop.f32.mrf.mxu0
        %v942 = vadd.f32 %v794, %v941
        %v943 = vpop.f32.mrf.mxu0
        %v944 = vadd.f32 %v790, %v943
        %v945 = vpop.f32.mrf.mxu0
        %v946 = vadd.f32 %v794, %v945
        %947 = vmatprep.mubr.bf16.mxu0 0
        %948 = vmatmul.mubr.bf16.gmra.mxu0 %v737
        %v949 = vpop.f32.mrf.mxu0
        %v950 = vadd.f32 %v790, %v949
        %v951 = vpop.f32.mrf.mxu0
        %v952 = vadd.f32 %v794, %v951
        %v953 = vpop.f32.mrf.mxu0
        %v954 = vadd.f32 %v790, %v953
        %v955 = vpop.f32.mrf.mxu0
        %v956 = vadd.f32 %v794, %v955
        %957 = vmatprep.mubr.bf16.mxu0 0
        %958 = vmatmul.mubr.bf16.gmra.mxu0 %v738
        %v959 = vpop.f32.mrf.mxu0
        %v960 = vadd.f32 %v790, %v959
        %v961 = vpop.f32.mrf.mxu0
        %v962 = vadd.f32 %v794, %v961
        %v963 = vpop.f32.mrf.mxu0
        %v964 = vadd.f32 %v790, %v963
        %v965 = vpop.f32.mrf.mxu0
        %v966 = vadd.f32 %v794, %v965
        %967 = vmatprep.mubr.bf16.mxu0 0
        %968 = vmatmul.mubr.bf16.gmra.mxu0 %v739
        %v969 = vpop.f32.mrf.mxu0
        %v970 = vadd.f32 %v790, %v969
        %v971 = vpop.f32.mrf.mxu0
        %v972 = vadd.f32 %v794, %v971
        %v973 = vpop.f32.mrf.mxu0
        %v974 = vadd.f32 %v790, %v973
        %v975 = vpop.f32.mrf.mxu0
        %v976 = vadd.f32 %v794, %v975
        %977 = vmatprep.mubr.bf16.mxu0 0
        %978 = vmatmul.mubr.bf16.gmra.mxu0 %v740
        %v979 = vpop.f32.mrf.mxu0
        %v980 = vadd.f32 %v790, %v979
        %v981 = vpop.f32.mrf.mxu0
        %v982 = vadd.f32 %v794, %v981
        %v983 = vpop.f32.mrf.mxu0
        %v984 = vadd.f32 %v790, %v983
        %v985 = vpop.f32.mrf.mxu0
        %v986 = vadd.f32 %v794, %v985
        %987 = vmatprep.mubr.bf16.mxu0 0
        %988 = vmatmul.mubr.bf16.gmra.mxu0 %v741
        %v989 = vpop.f32.mrf.mxu0
        %v990 = vadd.f32 %v790, %v989
        %v991 = vpop.f32.mrf.mxu0
        %v992 = vadd.f32 %v794, %v991
        %v993 = vpop.f32.mrf.mxu0
        %v994 = vadd.f32 %v790, %v993
        %v995 = vpop.f32.mrf.mxu0
        %v996 = vadd.f32 %v794, %v995
        %997 = vmatprep.mubr.bf16.mxu0 0
        %998 = vmatmul.mubr.bf16.gmra.mxu0 %v768
        %v999 = vpop.f32.mrf.mxu0
        %v1000 = vadd.f32 %v790, %v999
        %v1001 = vpop.f32.mrf.mxu0
        %v1002 = vadd.f32 %v794, %v1001
        %v1003 = vpop.f32.mrf.mxu0
        %v1004 = vpop.f32.mrf.mxu0
        %1005 = vdwg.mxu0
        %v1006 = vxor.u32 %v916, 2147483648
        %v1007 = vxor.u32 %v922, 2147483648
        %v1008 = vxor.u32 %v926, 2147483648
        %v1009 = vxor.u32 %v932, 2147483648
        %v1010 = vxor.u32 %v936, 2147483648
        %v1011 = vxor.u32 %v942, 2147483648
        %v1012 = vxor.u32 %v946, 2147483648
        %v1013 = vxor.u32 %v952, 2147483648
        %v1014 = vxor.u32 %v956, 2147483648
        %v1015 = vxor.u32 %v962, 2147483648
        %v1016 = vxor.u32 %v966, 2147483648
        %v1017 = vxor.u32 %v972, 2147483648
        %v1018 = vxor.u32 %v976, 2147483648
        %v1019 = vxor.u32 %v982, 2147483648
        %v1020 = vxor.u32 %v986, 2147483648
        %v1021 = vxor.u32 %v992, 2147483648
        %v1022 = vxor.u32 %v996, 2147483648
        %v1023 = vxor.u32 %v1002, 2147483648
        %v1024 = vmul.f32 %v1006, 1.442695
        %v1025 = vpow.pop %v1024
        %v1026 = vmul.f32 %v1007, 1.442695
        %v1027 = vpow.pop %v1026
        %v1028 = vmul.f32 %v1008, 1.442695
        %v1029 = vpow.pop %v1028
        %v1030 = vmul.f32 %v1009, 1.442695
        %v1031 = vpow.pop %v1030
        %v1032 = vmul.f32 %v1010, 1.442695
        %v1033 = vpow.pop %v1032
        %v1034 = vmul.f32 %v1011, 1.442695
        %v1035 = vpow.pop %v1034
        %v1036 = vmul.f32 %v1012, 1.442695
        %v1037 = vpow.pop %v1036
        %v1038 = vmul.f32 %v1013, 1.442695
        %v1039 = vpow.pop %v1038
        %v1040 = vmul.f32 %v1014, 1.442695
        %v1041 = vpow.pop %v1040
        %v1042 = vmul.f32 %v1015, 1.442695
        %v1043 = vpow.pop %v1042
        %v1044 = vmul.f32 %v1016, 1.442695
        %v1045 = vpow.pop %v1044
        %v1046 = vmul.f32 %v1017, 1.442695
        %v1047 = vpow.pop %v1046
        %v1048 = vmul.f32 %v1018, 1.442695
        %v1049 = vpow.pop %v1048
        %v1050 = vmul.f32 %v1019, 1.442695
        %v1051 = vpow.pop %v1050
        %v1052 = vmul.f32 %v1020, 1.442695
        %v1053 = vpow.pop %v1052
        %v1054 = vmul.f32 %v1021, 1.442695
        %v1055 = vpow.pop %v1054
        %v1056 = vmul.f32 %v1022, 1.442695
        %v1057 = vpow.pop %v1056
        %v1058 = vmul.f32 %v1023, 1.442695
        %v1059 = vpow.pop %v1058
        %v1060 = vadd.f32 %v1025, 1.0
        %v1061 = vadd.f32 %v1027, 1.0
        %v1062 = vadd.f32 %v1029, 1.0
        %v1063 = vadd.f32 %v1031, 1.0
        %v1064 = vadd.f32 %v1033, 1.0
        %v1065 = vadd.f32 %v1035, 1.0
        %v1066 = vadd.f32 %v1037, 1.0
        %v1067 = vadd.f32 %v1039, 1.0
        %v1068 = vadd.f32 %v1041, 1.0
        %v1069 = vadd.f32 %v1043, 1.0
        %v1070 = vadd.f32 %v1045, 1.0
        %v1071 = vadd.f32 %v1047, 1.0
        %v1072 = vadd.f32 %v1049, 1.0
        %v1073 = vadd.f32 %v1051, 1.0
        %v1074 = vadd.f32 %v1053, 1.0
        %v1075 = vadd.f32 %v1055, 1.0
        %v1076 = vadd.f32 %v1057, 1.0
        %v1077 = vadd.f32 %v1059, 1.0
        %v1078 = vrcp.pop %v1060
        %v1079 = vmul.f32 1.0, %v1078
        %v1080 = vrcp.pop %v1061
        %v1081 = vmul.f32 1.0, %v1080
        %v1082 = vrcp.pop %v1062
        %v1083 = vmul.f32 1.0, %v1082
        %v1084 = vrcp.pop %v1063
        %v1085 = vmul.f32 1.0, %v1084
        %v1086 = vrcp.pop %v1064
        %v1087 = vmul.f32 1.0, %v1086
        %v1088 = vrcp.pop %v1065
        %v1089 = vmul.f32 1.0, %v1088
        %v1090 = vrcp.pop %v1066
        %v1091 = vmul.f32 1.0, %v1090
        %v1092 = vrcp.pop %v1067
        %v1093 = vmul.f32 1.0, %v1092
        %v1094 = vrcp.pop %v1068
        %v1095 = vmul.f32 1.0, %v1094
        %v1096 = vrcp.pop %v1069
        %v1097 = vmul.f32 1.0, %v1096
        %v1098 = vrcp.pop %v1070
        %v1099 = vmul.f32 1.0, %v1098
        %v1100 = vrcp.pop %v1071
        %v1101 = vmul.f32 1.0, %v1100
        %v1102 = vrcp.pop %v1072
        %v1103 = vmul.f32 1.0, %v1102
        %v1104 = vrcp.pop %v1073
        %v1105 = vmul.f32 1.0, %v1104
        %v1106 = vrcp.pop %v1074
        %v1107 = vmul.f32 1.0, %v1106
        %v1108 = vrcp.pop %v1075
        %v1109 = vmul.f32 1.0, %v1108
        %v1110 = vrcp.pop %v1076
        %v1111 = vmul.f32 1.0, %v1110
        %v1112 = vrcp.pop %v1077
        %v1113 = vmul.f32 1.0, %v1112
        %v1114 = vmul.f32 %v914, %v1079
        %v1115 = vmul.f32 %v920, %v1081
        %v1116 = vmul.f32 %v924, %v1083
        %v1117 = vmul.f32 %v930, %v1085
        %v1118 = vmul.f32 %v934, %v1087
        %v1119 = vmul.f32 %v940, %v1089
        %v1120 = vmul.f32 %v944, %v1091
        %v1121 = vmul.f32 %v950, %v1093
        %v1122 = vmul.f32 %v954, %v1095
        %v1123 = vmul.f32 %v960, %v1097
        %v1124 = vmul.f32 %v964, %v1099
        %v1125 = vmul.f32 %v970, %v1101
        %v1126 = vmul.f32 %v974, %v1103
        %v1127 = vmul.f32 %v980, %v1105
        %v1128 = vmul.f32 %v984, %v1107
        %v1129 = vmul.f32 %v990, %v1109
        %v1130 = vmul.f32 %v994, %v1111
        %v1131 = vmul.f32 %v1000, %v1113
        %v1132 = vlaneseq
        %v1133 = vshrl.u32 %v1132, 7
        %v1134 = vadd.s32 %v1133, 8
        %v1135 = vadd.s32 %v1133, 16
        %v1136 = vadd.s32 %v1133, 24
        %v1137 = vadd.s32 %v1133, 32
        %v1138 = vadd.s32 %v1133, 40
        %v1139 = vadd.s32 %v1133, 48
        %v1140 = vadd.s32 %v1133, 56
        %v1141 = vadd.s32 %v1133, 64
        %v1142 = vadd.s32 %v1133, 72
        %v1143 = vadd.s32 %v1133, 80
        %v1144 = vadd.s32 %v1133, 88
        %v1145 = vadd.s32 %v1133, 96
        %v1146 = vadd.s32 %v1133, 104
        %v1147 = vadd.s32 %v1133, 112
        %v1148 = vadd.s32 %v1133, 120
        %v1149 = vadd.s32 %v1133, 128
        %v1150 = vadd.s32 %v1133, 136
        %v1151 = vadd.s32 %v1133, 144
        %vm1152 = vcmp.ge.s32.totalorder %v1134, 16
        %vm1153 = vcmp.ge.s32.totalorder %v1135, 16
        %vm1154 = vcmp.ge.s32.totalorder %v1136, 16
        %vm1155 = vcmp.ge.s32.totalorder %v1137, 16
        %vm1156 = vcmp.ge.s32.totalorder %v1138, 16
        %vm1157 = vcmp.ge.s32.totalorder %v1139, 16
        %vm1158 = vcmp.ge.s32.totalorder %v1140, 16
        %vm1159 = vcmp.ge.s32.totalorder %v1141, 16
        %vm1160 = vcmp.ge.s32.totalorder %v1142, 16
        %vm1161 = vcmp.ge.s32.totalorder %v1143, 16
        %vm1162 = vcmp.ge.s32.totalorder %v1144, 16
        %vm1163 = vcmp.ge.s32.totalorder %v1145, 16
        %vm1164 = vcmp.ge.s32.totalorder %v1146, 16
        %vm1165 = vcmp.ge.s32.totalorder %v1147, 16
        %vm1166 = vcmp.ge.s32.totalorder %v1148, 16
        %vm1167 = vcmp.ge.s32.totalorder %v1149, 16
        %vm1168 = vcmp.ge.s32.totalorder %v1150, 16
        %vm1169 = vcmp.ge.s32.totalorder %v1151, 16
        %p1170 = scmp.gt.s32.totalorder %s33, 0
        %s1171 = scalar_select %p1170, 1, 0
        %v1172 = vstv %s1171
        %vm1173 = vcmp.eq.s32.totalorder %v1172, 1
        %vm1174 = vmor %vm1152, %vm1173
        %vm1175 = vmor %vm1153, %vm1173
        %vm1176 = vmor %vm1154, %vm1173
        %vm1177 = vmor %vm1155, %vm1173
        %vm1178 = vmor %vm1156, %vm1173
        %vm1179 = vmor %vm1157, %vm1173
        %vm1180 = vmor %vm1158, %vm1173
        %vm1181 = vmor %vm1159, %vm1173
        %vm1182 = vmor %vm1160, %vm1173
        %vm1183 = vmor %vm1161, %vm1173
        %vm1184 = vmor %vm1162, %vm1173
        %vm1185 = vmor %vm1163, %vm1173
        %vm1186 = vmor %vm1164, %vm1173
        %vm1187 = vmor %vm1165, %vm1173
        %vm1188 = vmor %vm1166, %vm1173
        %vm1189 = vmor %vm1167, %vm1173
        %vm1190 = vmor %vm1168, %vm1173
        %vm1191 = vmor %vm1169, %vm1173
        %vm1192 = vcmp.lt.s32.totalorder %v1134, 144
        %vm1193 = vcmp.lt.s32.totalorder %v1135, 144
        %vm1194 = vcmp.lt.s32.totalorder %v1136, 144
        %vm1195 = vcmp.lt.s32.totalorder %v1137, 144
        %vm1196 = vcmp.lt.s32.totalorder %v1138, 144
        %vm1197 = vcmp.lt.s32.totalorder %v1139, 144
        %vm1198 = vcmp.lt.s32.totalorder %v1140, 144
        %vm1199 = vcmp.lt.s32.totalorder %v1141, 144
        %vm1200 = vcmp.lt.s32.totalorder %v1142, 144
        %vm1201 = vcmp.lt.s32.totalorder %v1143, 144
        %vm1202 = vcmp.lt.s32.totalorder %v1144, 144
        %vm1203 = vcmp.lt.s32.totalorder %v1145, 144
        %vm1204 = vcmp.lt.s32.totalorder %v1146, 144
        %vm1205 = vcmp.lt.s32.totalorder %v1147, 144
        %vm1206 = vcmp.lt.s32.totalorder %v1148, 144
        %vm1207 = vcmp.lt.s32.totalorder %v1149, 144
        %vm1208 = vcmp.lt.s32.totalorder %v1150, 144
        %vm1209 = vcmp.lt.s32.totalorder %v1151, 144
        %p1210 = scmp.lt.s32.totalorder %s33, 1
        %s1211 = scalar_select %p1210, 1, 0
        %v1212 = vstv %s1211
        %vm1213 = vcmp.eq.s32.totalorder %v1212, 1
        %vm1214 = vmor %vm1192, %vm1213
        %vm1215 = vmor %vm1193, %vm1213
        %vm1216 = vmor %vm1194, %vm1213
        %vm1217 = vmor %vm1195, %vm1213
        %vm1218 = vmor %vm1196, %vm1213
        %vm1219 = vmor %vm1197, %vm1213
        %vm1220 = vmor %vm1198, %vm1213
        %vm1221 = vmor %vm1199, %vm1213
        %vm1222 = vmor %vm1200, %vm1213
        %vm1223 = vmor %vm1201, %vm1213
        %vm1224 = vmor %vm1202, %vm1213
        %vm1225 = vmor %vm1203, %vm1213
        %vm1226 = vmor %vm1204, %vm1213
        %vm1227 = vmor %vm1205, %vm1213
        %vm1228 = vmor %vm1206, %vm1213
        %vm1229 = vmor %vm1207, %vm1213
        %vm1230 = vmor %vm1208, %vm1213
        %vm1231 = vmor %vm1209, %vm1213
        %vm1232 = vmand %vm1174, %vm1214
        %vm1233 = vmand %vm1175, %vm1215
        %vm1234 = vmand %vm1176, %vm1216
        %vm1235 = vmand %vm1177, %vm1217
        %vm1236 = vmand %vm1178, %vm1218
        %vm1237 = vmand %vm1179, %vm1219
        %vm1238 = vmand %vm1180, %vm1220
        %vm1239 = vmand %vm1181, %vm1221
        %vm1240 = vmand %vm1182, %vm1222
        %vm1241 = vmand %vm1183, %vm1223
        %vm1242 = vmand %vm1184, %vm1224
        %vm1243 = vmand %vm1185, %vm1225
        %vm1244 = vmand %vm1186, %vm1226
        %vm1245 = vmand %vm1187, %vm1227
        %vm1246 = vmand %vm1188, %vm1228
        %vm1247 = vmand %vm1189, %vm1229
        %vm1248 = vmand %vm1190, %vm1230
        %vm1249 = vmand %vm1191, %vm1231
        %v1250 = vsel %vm1232, 1, 0
        %v1251 = vsel %vm1233, 1, 0
        %v1252 = vsel %vm1234, 1, 0
        %v1253 = vsel %vm1235, 1, 0
        %v1254 = vsel %vm1236, 1, 0
        %v1255 = vsel %vm1237, 1, 0
        %v1256 = vsel %vm1238, 1, 0
        %v1257 = vsel %vm1239, 1, 0
        %v1258 = vsel %vm1240, 1, 0
        %v1259 = vsel %vm1241, 1, 0
        %v1260 = vsel %vm1242, 1, 0
        %v1261 = vsel %vm1243, 1, 0
        %v1262 = vsel %vm1244, 1, 0
        %v1263 = vsel %vm1245, 1, 0
        %v1264 = vsel %vm1246, 1, 0
        %v1265 = vsel %vm1247, 1, 0
        %v1266 = vsel %vm1248, 1, 0
        %v1267 = vsel %vm1249, 1, 0
        %vm1268 = vcmp.eq.s32.totalorder %v1250, 1
        %vm1269 = vcmp.eq.s32.totalorder %v1251, 1
        %vm1270 = vcmp.eq.s32.totalorder %v1252, 1
        %vm1271 = vcmp.eq.s32.totalorder %v1253, 1
        %vm1272 = vcmp.eq.s32.totalorder %v1254, 1
        %vm1273 = vcmp.eq.s32.totalorder %v1255, 1
        %vm1274 = vcmp.eq.s32.totalorder %v1256, 1
        %vm1275 = vcmp.eq.s32.totalorder %v1257, 1
        %vm1276 = vcmp.eq.s32.totalorder %v1258, 1
        %vm1277 = vcmp.eq.s32.totalorder %v1259, 1
        %vm1278 = vcmp.eq.s32.totalorder %v1260, 1
        %vm1279 = vcmp.eq.s32.totalorder %v1261, 1
        %vm1280 = vcmp.eq.s32.totalorder %v1262, 1
        %vm1281 = vcmp.eq.s32.totalorder %v1263, 1
        %vm1282 = vcmp.eq.s32.totalorder %v1264, 1
        %vm1283 = vcmp.eq.s32.totalorder %v1265, 1
        %vm1284 = vcmp.eq.s32.totalorder %v1266, 1
        %vm1285 = vcmp.eq.s32.totalorder %v1267, 1
        %v1286 = vsel %vm1268, %v1114, 0.0
        %v1287 = vsel %vm1269, %v1115, 0.0
        %v1288 = vsel %vm1270, %v1116, 0.0
        %v1289 = vsel %vm1271, %v1117, 0.0
        %v1290 = vsel %vm1272, %v1118, 0.0
        %v1291 = vsel %vm1273, %v1119, 0.0
        %v1292 = vsel %vm1274, %v1120, 0.0
        %v1293 = vsel %vm1275, %v1121, 0.0
        %v1294 = vsel %vm1276, %v1122, 0.0
        %v1295 = vsel %vm1277, %v1123, 0.0
        %v1296 = vsel %vm1278, %v1124, 0.0
        %v1297 = vsel %vm1279, %v1125, 0.0
        %v1298 = vsel %vm1280, %v1126, 0.0
        %v1299 = vsel %vm1281, %v1127, 0.0
        %v1300 = vsel %vm1282, %v1128, 0.0
        %v1301 = vsel %vm1283, %v1129, 0.0
        %v1302 = vsel %vm1284, %v1130, 0.0
        %v1303 = vsel %vm1285, %v1131, 0.0
        %v1304 = vld [vmem:[%s5] sm:$0x3f]
        %v1305 = vrot.slane %v1286, 6
        %v1306 = vrot.slane %v1287, 6
        %v1307 = vrot.slane %v1288, 6
        %v1308 = vrot.slane %v1289, 6
        %v1309 = vrot.slane %v1290, 6
        %v1310 = vrot.slane %v1291, 6
        %v1311 = vrot.slane %v1292, 6
        %v1312 = vrot.slane %v1293, 6
        %v1313 = vrot.slane %v1294, 6
        %v1314 = vrot.slane %v1295, 6
        %v1315 = vrot.slane %v1296, 6
        %v1316 = vrot.slane %v1297, 6
        %v1317 = vrot.slane %v1298, 6
        %v1318 = vrot.slane %v1299, 6
        %v1319 = vrot.slane %v1300, 6
        %v1320 = vrot.slane %v1301, 6
        %v1321 = vrot.slane %v1302, 6
        %vm1322 = vcmp.lt.s32.totalorder %v1133, 2
        %v1323 = vsel %vm1322, %v1320, %v1321
        %v1324 = vsel %vm1322, %v1319, %v1320
        %v1325 = vsel %vm1322, %v1318, %v1319
        %v1326 = vsel %vm1322, %v1317, %v1318
        %v1327 = vsel %vm1322, %v1316, %v1317
        %v1328 = vsel %vm1322, %v1315, %v1316
        %v1329 = vsel %vm1322, %v1314, %v1315
        %v1330 = vsel %vm1322, %v1313, %v1314
        %v1331 = vsel %vm1322, %v1312, %v1313
        %v1332 = vsel %vm1322, %v1311, %v1312
        %v1333 = vsel %vm1322, %v1310, %v1311
        %v1334 = vsel %vm1322, %v1309, %v1310
        %v1335 = vsel %vm1322, %v1308, %v1309
        %v1336 = vsel %vm1322, %v1307, %v1308
        %v1337 = vsel %vm1322, %v1306, %v1307
        %v1338 = vsel %vm1322, %v1305, %v1306
        %v1339 = vlaneseq
        %v1340 = vshrl.u32 %v1339, 7
        %v1341 = vsub.s32 0, %v1340
        %v1342 = vrot.slane %v1304, %v1341
        %v1343 = vmul.f32 %v1338, %v1342
        %v1344 = vmul.f32 %v1337, %v1342
        %v1345 = vmul.f32 %v1336, %v1342
        %v1346 = vmul.f32 %v1335, %v1342
        %v1347 = vmul.f32 %v1334, %v1342
        %v1348 = vmul.f32 %v1333, %v1342
        %v1349 = vmul.f32 %v1332, %v1342
        %v1350 = vmul.f32 %v1331, %v1342
        %v1351 = vmul.f32 %v1330, %v1342
        %v1352 = vmul.f32 %v1329, %v1342
        %v1353 = vmul.f32 %v1328, %v1342
        %v1354 = vmul.f32 %v1327, %v1342
        %v1355 = vmul.f32 %v1326, %v1342
        %v1356 = vmul.f32 %v1325, %v1342
        %v1357 = vmul.f32 %v1324, %v1342
        %v1358 = vmul.f32 %v1323, %v1342
        %v1359 = vadd.f32 %v1343, 0.0
        %v1360 = vadd.f32 %v1344, 0.0
        %v1361 = vadd.f32 %v1345, 0.0
        %v1362 = vadd.f32 %v1346, 0.0
        %v1363 = vadd.f32 %v1347, 0.0
        %v1364 = vadd.f32 %v1348, 0.0
        %v1365 = vadd.f32 %v1349, 0.0
        %v1366 = vadd.f32 %v1350, 0.0
        %v1367 = vadd.f32 %v1351, 0.0
        %v1368 = vadd.f32 %v1352, 0.0
        %v1369 = vadd.f32 %v1353, 0.0
        %v1370 = vadd.f32 %v1354, 0.0
        %v1371 = vadd.f32 %v1355, 0.0
        %v1372 = vadd.f32 %v1356, 0.0
        %v1373 = vadd.f32 %v1357, 0.0
        %v1374 = vadd.f32 %v1358, 0.0
        %v1375 = vrot.slane %v1286, 7
        %v1376 = vrot.slane %v1287, 7
        %v1377 = vrot.slane %v1288, 7
        %v1378 = vrot.slane %v1289, 7
        %v1379 = vrot.slane %v1290, 7
        %v1380 = vrot.slane %v1291, 7
        %v1381 = vrot.slane %v1292, 7
        %v1382 = vrot.slane %v1293, 7
        %v1383 = vrot.slane %v1294, 7
        %v1384 = vrot.slane %v1295, 7
        %v1385 = vrot.slane %v1296, 7
        %v1386 = vrot.slane %v1297, 7
        %v1387 = vrot.slane %v1298, 7
        %v1388 = vrot.slane %v1299, 7
        %v1389 = vrot.slane %v1300, 7
        %v1390 = vrot.slane %v1301, 7
        %v1391 = vrot.slane %v1302, 7
        %vm1392 = vcmp.lt.s32.totalorder %v1133, 1
        %v1393 = vsel %vm1392, %v1390, %v1391
        %v1394 = vsel %vm1392, %v1389, %v1390
        %v1395 = vsel %vm1392, %v1388, %v1389
        %v1396 = vsel %vm1392, %v1387, %v1388
        %v1397 = vsel %vm1392, %v1386, %v1387
        %v1398 = vsel %vm1392, %v1385, %v1386
        %v1399 = vsel %vm1392, %v1384, %v1385
        %v1400 = vsel %vm1392, %v1383, %v1384
        %v1401 = vsel %vm1392, %v1382, %v1383
        %v1402 = vsel %vm1392, %v1381, %v1382
        %v1403 = vsel %vm1392, %v1380, %v1381
        %v1404 = vsel %vm1392, %v1379, %v1380
        %v1405 = vsel %vm1392, %v1378, %v1379
        %v1406 = vsel %vm1392, %v1377, %v1378
        %v1407 = vsel %vm1392, %v1376, %v1377
        %v1408 = vsel %vm1392, %v1375, %v1376
        %v1409 = vlaneseq
        %v1410 = vshrl.u32 %v1409, 7
        %v1411 = vsub.s32 1, %v1410
        %v1412 = vrot.slane %v1304, %v1411
        %v1413 = vmul.f32 %v1408, %v1412
        %v1414 = vmul.f32 %v1407, %v1412
        %v1415 = vmul.f32 %v1406, %v1412
        %v1416 = vmul.f32 %v1405, %v1412
        %v1417 = vmul.f32 %v1404, %v1412
        %v1418 = vmul.f32 %v1403, %v1412
        %v1419 = vmul.f32 %v1402, %v1412
        %v1420 = vmul.f32 %v1401, %v1412
        %v1421 = vmul.f32 %v1400, %v1412
        %v1422 = vmul.f32 %v1399, %v1412
        %v1423 = vmul.f32 %v1398, %v1412
        %v1424 = vmul.f32 %v1397, %v1412
        %v1425 = vmul.f32 %v1396, %v1412
        %v1426 = vmul.f32 %v1395, %v1412
        %v1427 = vmul.f32 %v1394, %v1412
        %v1428 = vmul.f32 %v1393, %v1412
        %v1429 = vadd.f32 %v1359, %v1413
        %v1430 = vadd.f32 %v1360, %v1414
        %v1431 = vadd.f32 %v1361, %v1415
        %v1432 = vadd.f32 %v1362, %v1416
        %v1433 = vadd.f32 %v1363, %v1417
        %v1434 = vadd.f32 %v1364, %v1418
        %v1435 = vadd.f32 %v1365, %v1419
        %v1436 = vadd.f32 %v1366, %v1420
        %v1437 = vadd.f32 %v1367, %v1421
        %v1438 = vadd.f32 %v1368, %v1422
        %v1439 = vadd.f32 %v1369, %v1423
        %v1440 = vadd.f32 %v1370, %v1424
        %v1441 = vadd.f32 %v1371, %v1425
        %v1442 = vadd.f32 %v1372, %v1426
        %v1443 = vadd.f32 %v1373, %v1427
        %v1444 = vadd.f32 %v1374, %v1428
        %v1445 = vlaneseq
        %v1446 = vshrl.u32 %v1445, 7
        %v1447 = vsub.s32 2, %v1446
        %v1448 = vrot.slane %v1304, %v1447
        %v1449 = vmul.f32 %v1287, %v1448
        %v1450 = vmul.f32 %v1288, %v1448
        %v1451 = vmul.f32 %v1289, %v1448
        %v1452 = vmul.f32 %v1290, %v1448
        %v1453 = vmul.f32 %v1291, %v1448
        %v1454 = vmul.f32 %v1292, %v1448
        %v1455 = vmul.f32 %v1293, %v1448
        %v1456 = vmul.f32 %v1294, %v1448
        %v1457 = vmul.f32 %v1295, %v1448
        %v1458 = vmul.f32 %v1296, %v1448
        %v1459 = vmul.f32 %v1297, %v1448
        %v1460 = vmul.f32 %v1298, %v1448
        %v1461 = vmul.f32 %v1299, %v1448
        %v1462 = vmul.f32 %v1300, %v1448
        %v1463 = vmul.f32 %v1301, %v1448
        %v1464 = vmul.f32 %v1302, %v1448
        %v1465 = vadd.f32 %v1429, %v1449
        %v1466 = vadd.f32 %v1430, %v1450
        %v1467 = vadd.f32 %v1431, %v1451
        %v1468 = vadd.f32 %v1432, %v1452
        %v1469 = vadd.f32 %v1433, %v1453
        %v1470 = vadd.f32 %v1434, %v1454
        %v1471 = vadd.f32 %v1435, %v1455
        %v1472 = vadd.f32 %v1436, %v1456
        %v1473 = vadd.f32 %v1437, %v1457
        %v1474 = vadd.f32 %v1438, %v1458
        %v1475 = vadd.f32 %v1439, %v1459
        %v1476 = vadd.f32 %v1440, %v1460
        %v1477 = vadd.f32 %v1441, %v1461
        %v1478 = vadd.f32 %v1442, %v1462
        %v1479 = vadd.f32 %v1443, %v1463
        %v1480 = vadd.f32 %v1444, %v1464
        %v1481 = vrot.slane %v1287, 1
        %v1482 = vrot.slane %v1288, 1
        %v1483 = vrot.slane %v1289, 1
        %v1484 = vrot.slane %v1290, 1
        %v1485 = vrot.slane %v1291, 1
        %v1486 = vrot.slane %v1292, 1
        %v1487 = vrot.slane %v1293, 1
        %v1488 = vrot.slane %v1294, 1
        %v1489 = vrot.slane %v1295, 1
        %v1490 = vrot.slane %v1296, 1
        %v1491 = vrot.slane %v1297, 1
        %v1492 = vrot.slane %v1298, 1
        %v1493 = vrot.slane %v1299, 1
        %v1494 = vrot.slane %v1300, 1
        %v1495 = vrot.slane %v1301, 1
        %v1496 = vrot.slane %v1302, 1
        %v1497 = vrot.slane %v1303, 1
        %vm1498 = vcmp.lt.s32.totalorder %v1133, 7
        %v1499 = vsel %vm1498, %v1496, %v1497
        %v1500 = vsel %vm1498, %v1495, %v1496
        %v1501 = vsel %vm1498, %v1494, %v1495
        %v1502 = vsel %vm1498, %v1493, %v1494
        %v1503 = vsel %vm1498, %v1492, %v1493
        %v1504 = vsel %vm1498, %v1491, %v1492
        %v1505 = vsel %vm1498, %v1490, %v1491
        %v1506 = vsel %vm1498, %v1489, %v1490
        %v1507 = vsel %vm1498, %v1488, %v1489
        %v1508 = vsel %vm1498, %v1487, %v1488
        %v1509 = vsel %vm1498, %v1486, %v1487
        %v1510 = vsel %vm1498, %v1485, %v1486
        %v1511 = vsel %vm1498, %v1484, %v1485
        %v1512 = vsel %vm1498, %v1483, %v1484
        %v1513 = vsel %vm1498, %v1482, %v1483
        %v1514 = vsel %vm1498, %v1481, %v1482
        %v1515 = vlaneseq
        %v1516 = vshrl.u32 %v1515, 7
        %v1517 = vsub.s32 3, %v1516
        %v1518 = vrot.slane %v1304, %v1517
        %v1519 = vmul.f32 %v1514, %v1518
        %v1520 = vmul.f32 %v1513, %v1518
        %v1521 = vmul.f32 %v1512, %v1518
        %v1522 = vmul.f32 %v1511, %v1518
        %v1523 = vmul.f32 %v1510, %v1518
        %v1524 = vmul.f32 %v1509, %v1518
        %v1525 = vmul.f32 %v1508, %v1518
        %v1526 = vmul.f32 %v1507, %v1518
        %v1527 = vmul.f32 %v1506, %v1518
        %v1528 = vmul.f32 %v1505, %v1518
        %v1529 = vmul.f32 %v1504, %v1518
        %v1530 = vmul.f32 %v1503, %v1518
        %v1531 = vmul.f32 %v1502, %v1518
        %v1532 = vmul.f32 %v1501, %v1518
        %v1533 = vmul.f32 %v1500, %v1518
        %v1534 = vmul.f32 %v1499, %v1518
        %v1535 = vadd.f32 %v1465, %v1519
        %v1536 = vadd.f32 %v1466, %v1520
        %v1537 = vadd.f32 %v1467, %v1521
        %v1538 = vadd.f32 %v1468, %v1522
        %v1539 = vadd.f32 %v1469, %v1523
        %v1540 = vadd.f32 %v1470, %v1524
        %v1541 = vadd.f32 %v1471, %v1525
        %v1542 = vadd.f32 %v1472, %v1526
        %v1543 = vadd.f32 %v1473, %v1527
        %v1544 = vadd.f32 %v1474, %v1528
        %v1545 = vadd.f32 %v1475, %v1529
        %v1546 = vadd.f32 %v1476, %v1530
        %v1547 = vadd.f32 %v1477, %v1531
        %v1548 = vadd.f32 %v1478, %v1532
        %v1549 = vadd.f32 %v1479, %v1533
        %v1550 = vadd.f32 %v1480, %v1534
        %v1551 = vrot.slane %v1287, 2
        %v1552 = vrot.slane %v1288, 2
        %v1553 = vrot.slane %v1289, 2
        %v1554 = vrot.slane %v1290, 2
        %v1555 = vrot.slane %v1291, 2
        %v1556 = vrot.slane %v1292, 2
        %v1557 = vrot.slane %v1293, 2
        %v1558 = vrot.slane %v1294, 2
        %v1559 = vrot.slane %v1295, 2
        %v1560 = vrot.slane %v1296, 2
        %v1561 = vrot.slane %v1297, 2
        %v1562 = vrot.slane %v1298, 2
        %v1563 = vrot.slane %v1299, 2
        %v1564 = vrot.slane %v1300, 2
        %v1565 = vrot.slane %v1301, 2
        %v1566 = vrot.slane %v1302, 2
        %v1567 = vrot.slane %v1303, 2
        %vm1568 = vcmp.lt.s32.totalorder %v1133, 6
        %v1569 = vsel %vm1568, %v1566, %v1567
        %v1570 = vsel %vm1568, %v1565, %v1566
        %v1571 = vsel %vm1568, %v1564, %v1565
        %v1572 = vsel %vm1568, %v1563, %v1564
        %v1573 = vsel %vm1568, %v1562, %v1563
        %v1574 = vsel %vm1568, %v1561, %v1562
        %v1575 = vsel %vm1568, %v1560, %v1561
        %v1576 = vsel %vm1568, %v1559, %v1560
        %v1577 = vsel %vm1568, %v1558, %v1559
        %v1578 = vsel %vm1568, %v1557, %v1558
        %v1579 = vsel %vm1568, %v1556, %v1557
        %v1580 = vsel %vm1568, %v1555, %v1556
        %v1581 = vsel %vm1568, %v1554, %v1555
        %v1582 = vsel %vm1568, %v1553, %v1554
        %v1583 = vsel %vm1568, %v1552, %v1553
        %v1584 = vsel %vm1568, %v1551, %v1552
        %v1585 = vlaneseq
        %v1586 = vshrl.u32 %v1585, 7
        %v1587 = vsub.s32 4, %v1586
        %v1588 = vrot.slane %v1304, %v1587
        %v1589 = vmul.f32 %v1584, %v1588
        %v1590 = vmul.f32 %v1583, %v1588
        %v1591 = vmul.f32 %v1582, %v1588
        %v1592 = vmul.f32 %v1581, %v1588
        %v1593 = vmul.f32 %v1580, %v1588
        %v1594 = vmul.f32 %v1579, %v1588
        %v1595 = vmul.f32 %v1578, %v1588
        %v1596 = vmul.f32 %v1577, %v1588
        %v1597 = vmul.f32 %v1576, %v1588
        %v1598 = vmul.f32 %v1575, %v1588
        %v1599 = vmul.f32 %v1574, %v1588
        %v1600 = vmul.f32 %v1573, %v1588
        %v1601 = vmul.f32 %v1572, %v1588
        %v1602 = vmul.f32 %v1571, %v1588
        %v1603 = vmul.f32 %v1570, %v1588
        %v1604 = vmul.f32 %v1569, %v1588
        %v1605 = vadd.f32 %v1535, %v1589
        %v1606 = vadd.f32 %v1536, %v1590
        %v1607 = vadd.f32 %v1537, %v1591
        %v1608 = vadd.f32 %v1538, %v1592
        %v1609 = vadd.f32 %v1539, %v1593
        %v1610 = vadd.f32 %v1540, %v1594
        %v1611 = vadd.f32 %v1541, %v1595
        %v1612 = vadd.f32 %v1542, %v1596
        %v1613 = vadd.f32 %v1543, %v1597
        %v1614 = vadd.f32 %v1544, %v1598
        %v1615 = vadd.f32 %v1545, %v1599
        %v1616 = vadd.f32 %v1546, %v1600
        %v1617 = vadd.f32 %v1547, %v1601
        %v1618 = vadd.f32 %v1548, %v1602
        %v1619 = vadd.f32 %v1549, %v1603
        %v1620 = vadd.f32 %v1550, %v1604
        %v1621 = vlaneseq
        %v1622 = vshrl.u32 %v1621, 7
        %v1623 = vsub.s32 5, %v1622
        %v1624 = vrot.slane %v1304, %v1623
        %v1625 = vadd.f32 %v1605, %v1624
        %v1626 = vadd.f32 %v1606, %v1624
        %v1627 = vadd.f32 %v1607, %v1624
        %v1628 = vadd.f32 %v1608, %v1624
        %v1629 = vadd.f32 %v1609, %v1624
        %v1630 = vadd.f32 %v1610, %v1624
        %v1631 = vadd.f32 %v1611, %v1624
        %v1632 = vadd.f32 %v1612, %v1624
        %v1633 = vadd.f32 %v1613, %v1624
        %v1634 = vadd.f32 %v1614, %v1624
        %v1635 = vadd.f32 %v1615, %v1624
        %v1636 = vadd.f32 %v1616, %v1624
        %v1637 = vadd.f32 %v1617, %v1624
        %v1638 = vadd.f32 %v1618, %v1624
        %v1639 = vadd.f32 %v1619, %v1624
        %v1640 = vadd.f32 %v1620, %v1624
        %v1641 = vxor.u32 %v1625, 2147483648
        %v1642 = vxor.u32 %v1626, 2147483648
        %v1643 = vxor.u32 %v1627, 2147483648
        %v1644 = vxor.u32 %v1628, 2147483648
        %v1645 = vxor.u32 %v1629, 2147483648
        %v1646 = vxor.u32 %v1630, 2147483648
        %v1647 = vxor.u32 %v1631, 2147483648
        %v1648 = vxor.u32 %v1632, 2147483648
        %v1649 = vxor.u32 %v1633, 2147483648
        %v1650 = vxor.u32 %v1634, 2147483648
        %v1651 = vxor.u32 %v1635, 2147483648
        %v1652 = vxor.u32 %v1636, 2147483648
        %v1653 = vxor.u32 %v1637, 2147483648
        %v1654 = vxor.u32 %v1638, 2147483648
        %v1655 = vxor.u32 %v1639, 2147483648
        %v1656 = vxor.u32 %v1640, 2147483648
        %v1657 = vmul.f32 %v1641, 1.442695
        %v1658 = vpow.pop %v1657
        %v1659 = vmul.f32 %v1642, 1.442695
        %v1660 = vpow.pop %v1659
        %v1661 = vmul.f32 %v1643, 1.442695
        %v1662 = vpow.pop %v1661
        %v1663 = vmul.f32 %v1644, 1.442695
        %v1664 = vpow.pop %v1663
        %v1665 = vmul.f32 %v1645, 1.442695
        %v1666 = vpow.pop %v1665
        %v1667 = vmul.f32 %v1646, 1.442695
        %v1668 = vpow.pop %v1667
        %v1669 = vmul.f32 %v1647, 1.442695
        %v1670 = vpow.pop %v1669
        %v1671 = vmul.f32 %v1648, 1.442695
        %v1672 = vpow.pop %v1671
        %v1673 = vmul.f32 %v1649, 1.442695
        %v1674 = vpow.pop %v1673
        %v1675 = vmul.f32 %v1650, 1.442695
        %v1676 = vpow.pop %v1675
        %v1677 = vmul.f32 %v1651, 1.442695
        %v1678 = vpow.pop %v1677
        %v1679 = vmul.f32 %v1652, 1.442695
        %v1680 = vpow.pop %v1679
        %v1681 = vmul.f32 %v1653, 1.442695
        %v1682 = vpow.pop %v1681
        %v1683 = vmul.f32 %v1654, 1.442695
        %v1684 = vpow.pop %v1683
        %v1685 = vmul.f32 %v1655, 1.442695
        %v1686 = vpow.pop %v1685
        %v1687 = vmul.f32 %v1656, 1.442695
        %v1688 = vpow.pop %v1687
        %v1689 = vadd.f32 %v1658, 1.0
        %v1690 = vadd.f32 %v1660, 1.0
        %v1691 = vadd.f32 %v1662, 1.0
        %v1692 = vadd.f32 %v1664, 1.0
        %v1693 = vadd.f32 %v1666, 1.0
        %v1694 = vadd.f32 %v1668, 1.0
        %v1695 = vadd.f32 %v1670, 1.0
        %v1696 = vadd.f32 %v1672, 1.0
        %v1697 = vadd.f32 %v1674, 1.0
        %v1698 = vadd.f32 %v1676, 1.0
        %v1699 = vadd.f32 %v1678, 1.0
        %v1700 = vadd.f32 %v1680, 1.0
        %v1701 = vadd.f32 %v1682, 1.0
        %v1702 = vadd.f32 %v1684, 1.0
        %v1703 = vadd.f32 %v1686, 1.0
        %v1704 = vadd.f32 %v1688, 1.0
        %v1705 = vrcp.pop %v1689
        %v1706 = vmul.f32 1.0, %v1705
        %v1707 = vrcp.pop %v1690
        %v1708 = vmul.f32 1.0, %v1707
        %v1709 = vrcp.pop %v1691
        %v1710 = vmul.f32 1.0, %v1709
        %v1711 = vrcp.pop %v1692
        %v1712 = vmul.f32 1.0, %v1711
        %v1713 = vrcp.pop %v1693
        %v1714 = vmul.f32 1.0, %v1713
        %v1715 = vrcp.pop %v1694
        %v1716 = vmul.f32 1.0, %v1715
        %v1717 = vrcp.pop %v1695
        %v1718 = vmul.f32 1.0, %v1717
        %v1719 = vrcp.pop %v1696
        %v1720 = vmul.f32 1.0, %v1719
        %v1721 = vrcp.pop %v1697
        %v1722 = vmul.f32 1.0, %v1721
        %v1723 = vrcp.pop %v1698
        %v1724 = vmul.f32 1.0, %v1723
        %v1725 = vrcp.pop %v1699
        %v1726 = vmul.f32 1.0, %v1725
        %v1727 = vrcp.pop %v1700
        %v1728 = vmul.f32 1.0, %v1727
        %v1729 = vrcp.pop %v1701
        %v1730 = vmul.f32 1.0, %v1729
        %v1731 = vrcp.pop %v1702
        %v1732 = vmul.f32 1.0, %v1731
        %v1733 = vrcp.pop %v1703
        %v1734 = vmul.f32 1.0, %v1733
        %v1735 = vrcp.pop %v1704
        %v1736 = vmul.f32 1.0, %v1735
        %v1737 = vmul.f32 %v1625, %v1706
        %v1738 = vmul.f32 %v1626, %v1708
        %v1739 = vmul.f32 %v1627, %v1710
        %v1740 = vmul.f32 %v1628, %v1712
        %v1741 = vmul.f32 %v1629, %v1714
        %v1742 = vmul.f32 %v1630, %v1716
        %v1743 = vmul.f32 %v1631, %v1718
        %v1744 = vmul.f32 %v1632, %v1720
        %v1745 = vmul.f32 %v1633, %v1722
        %v1746 = vmul.f32 %v1634, %v1724
        %v1747 = vmul.f32 %v1635, %v1726
        %v1748 = vmul.f32 %v1636, %v1728
        %v1749 = vmul.f32 %v1637, %v1730
        %v1750 = vmul.f32 %v1638, %v1732
        %v1751 = vmul.f32 %v1639, %v1734
        %v1752 = vmul.f32 %v1640, %v1736
        %v1753 = vpack.c.bf16 %v1738, %v1737
        %v1754 = vpack.c.bf16 %v1740, %v1739
        %v1755 = vpack.c.bf16 %v1742, %v1741
        %v1756 = vpack.c.bf16 %v1744, %v1743
        %v1757 = vpack.c.bf16 %v1746, %v1745
        %v1758 = vpack.c.bf16 %v1748, %v1747
        %v1759 = vpack.c.bf16 %v1750, %v1749
        %v1760 = vpack.c.bf16 %v1752, %v1751
        %v1761 = vld [vmem:[#allocation11] sm:$0xf]
        %v1762 = vld [vmem:[#allocation11 + $0x4] sm:$0xf]
        %v1763 = vld [vmem:[#allocation11 + $0x8] sm:$0xf]
        %v1764 = vld [vmem:[#allocation11 + $0xc] sm:$0xf]
        %v1765 = vld [vmem:[#allocation11 + $0x10] sm:$0xf]
        %v1766 = vld [vmem:[#allocation11 + $0x14] sm:$0xf]
        %v1767 = vld [vmem:[#allocation11 + $0x18] sm:$0xf]
        %v1768 = vld [vmem:[#allocation11 + $0x1c] sm:$0xf]
        %v1769 = vld [vmem:[#allocation11 + $0x20] sm:$0xf]
        %v1770 = vld [vmem:[#allocation11 + $0x24] sm:$0xf]
        %v1771 = vld [vmem:[#allocation11 + $0x28] sm:$0xf]
        %v1772 = vld [vmem:[#allocation11 + $0x2c] sm:$0xf]
        %v1773 = vld [vmem:[#allocation11 + $0x30] sm:$0xf]
        %v1774 = vld [vmem:[#allocation11 + $0x34] sm:$0xf]
        %v1775 = vld [vmem:[#allocation11 + $0x38] sm:$0xf]
        %v1776 = vld [vmem:[#allocation11 + $0x3c] sm:$0xf]
        %v1793 = vunpack.c.l.b16 %v1761
        %v1794 = vunpack.c.l.b16 %v1762
        %v1795 = vunpack.c.l.b16 %v1763
        %v1796 = vunpack.c.l.b16 %v1764
        %v1797 = vunpack.c.l.b16 %v1765
        %v1798 = vunpack.c.l.b16 %v1766
        %v1799 = vunpack.c.l.b16 %v1767
        %v1800 = vunpack.c.l.b16 %v1768
        %v1801 = vunpack.c.l.b16 %v1769
        %v1802 = vunpack.c.l.b16 %v1770
        %v1803 = vunpack.c.l.b16 %v1771
        %v1804 = vunpack.c.l.b16 %v1772
        %v1805 = vunpack.c.l.b16 %v1773
        %v1806 = vunpack.c.l.b16 %v1774
        %v1807 = vunpack.c.l.b16 %v1775
        %v1808 = vunpack.c.l.b16 %v1776
        %v1809 = vpack.c.b16 %v1794, %v1793
        %v1810 = vpack.c.b16 %v1796, %v1795
        %v1811 = vpack.c.b16 %v1798, %v1797
        %v1812 = vpack.c.b16 %v1800, %v1799
        %v1813 = vpack.c.b16 %v1802, %v1801
        %v1814 = vpack.c.b16 %v1804, %v1803
        %v1815 = vpack.c.b16 %v1806, %v1805
        %v1816 = vpack.c.b16 %v1808, %v1807
        %1825 = vmatprep.subr.bf16.mxu0 0
        %1826 = vmatpush1.bf16.msra.mxu0 %v1816
        %1827 = vmatprep.subr.bf16.mxu0 0
        %1828 = vmatpush1.bf16.msra.mxu0 %v1815
        %1829 = vmatprep.subr.bf16.mxu0 0
        %1830 = vmatpush1.bf16.msra.mxu0 %v1814
        %1831 = vmatprep.subr.bf16.mxu0 0
        %1832 = vmatpush1.bf16.msra.mxu0 %v1813
        %1833 = vmatprep.subr.bf16.mxu0 0
        %1834 = vmatpush1.bf16.msra.mxu0 %v1812
        %1835 = vmatprep.subr.bf16.mxu0 0
        %1836 = vmatpush1.bf16.msra.mxu0 %v1811
        %1837 = vmatprep.subr.bf16.mxu0 0
        %1838 = vmatpush1.bf16.msra.mxu0 %v1810
        %1839 = vmatprep.subr.bf16.mxu0 0
        %1840 = vmatpush1.bf16.msra.mxu0 %v1809
        %1841 = vmatprep.subr.bf16.mxu0 0
        %1842 = vmatpush2.bf16.msra.mxu0 0
        %1843 = vmatprep.subr.bf16.mxu0 0
        %1844 = vmatpush2.bf16.msra.mxu0 0
        %1845 = vmatprep.subr.bf16.mxu0 0
        %1846 = vmatpush2.bf16.msra.mxu0 0
        %1847 = vmatprep.subr.bf16.mxu0 0
        %1848 = vmatpush2.bf16.msra.mxu0 0
        %1849 = vmatprep.subr.bf16.mxu0 0
        %1850 = vmatpush2.bf16.msra.mxu0 0
        %1851 = vmatprep.subr.bf16.mxu0 0
        %1852 = vmatpush2.bf16.msra.mxu0 0
        %1853 = vmatprep.subr.bf16.mxu0 0
        %1854 = vmatpush2.bf16.msra.mxu0 0
        %1855 = vmatprep.subr.bf16.mxu0 0
        %1856 = vmatpush2.bf16.msra.mxu0 0
        %1857 = vmatprep.mubr.bf16.mxu0 0
        %1858 = vmatmul.mubr.bf16.gmra.mxu0 %v1753
        %v1859 = vpop.f32.mrf.mxu0
        %v1860 = vadd.f32 0.0, %v1859
        %v1861 = vpop.f32.mrf.mxu0
        %v1862 = vpop.f32.mrf.mxu0
        %v1863 = vadd.f32 0.0, %v1862
        %v1864 = vpop.f32.mrf.mxu0
        %1865 = vmatprep.mubr.bf16.mxu0 0
        %1866 = vmatmul.mubr.bf16.gmra.mxu0 %v1754
        %v1867 = vpop.f32.mrf.mxu0
        %v1868 = vadd.f32 0.0, %v1867
        %v1869 = vpop.f32.mrf.mxu0
        %v1870 = vpop.f32.mrf.mxu0
        %v1871 = vadd.f32 0.0, %v1870
        %v1872 = vpop.f32.mrf.mxu0
        %1873 = vmatprep.mubr.bf16.mxu0 0
        %1874 = vmatmul.mubr.bf16.gmra.mxu0 %v1755
        %v1875 = vpop.f32.mrf.mxu0
        %v1876 = vadd.f32 0.0, %v1875
        %v1877 = vpop.f32.mrf.mxu0
        %v1878 = vpop.f32.mrf.mxu0
        %v1879 = vadd.f32 0.0, %v1878
        %v1880 = vpop.f32.mrf.mxu0
        %1881 = vmatprep.mubr.bf16.mxu0 0
        %1882 = vmatmul.mubr.bf16.gmra.mxu0 %v1756
        %v1883 = vpop.f32.mrf.mxu0
        %v1884 = vadd.f32 0.0, %v1883
        %v1885 = vpop.f32.mrf.mxu0
        %v1886 = vpop.f32.mrf.mxu0
        %v1887 = vadd.f32 0.0, %v1886
        %v1888 = vpop.f32.mrf.mxu0
        %1889 = vmatprep.mubr.bf16.mxu0 0
        %1890 = vmatmul.mubr.bf16.gmra.mxu0 %v1757
        %v1891 = vpop.f32.mrf.mxu0
        %v1892 = vadd.f32 0.0, %v1891
        %v1893 = vpop.f32.mrf.mxu0
        %v1894 = vpop.f32.mrf.mxu0
        %v1895 = vadd.f32 0.0, %v1894
        %v1896 = vpop.f32.mrf.mxu0
        %1897 = vmatprep.mubr.bf16.mxu0 0
        %1898 = vmatmul.mubr.bf16.gmra.mxu0 %v1758
        %v1899 = vpop.f32.mrf.mxu0
        %v1900 = vadd.f32 0.0, %v1899
        %v1901 = vpop.f32.mrf.mxu0
        %v1902 = vpop.f32.mrf.mxu0
        %v1903 = vadd.f32 0.0, %v1902
        %v1904 = vpop.f32.mrf.mxu0
        %1905 = vmatprep.mubr.bf16.mxu0 0
        %1906 = vmatmul.mubr.bf16.gmra.mxu0 %v1759
        %v1907 = vpop.f32.mrf.mxu0
        %v1908 = vadd.f32 0.0, %v1907
        %v1909 = vpop.f32.mrf.mxu0
        %v1910 = vpop.f32.mrf.mxu0
        %v1911 = vadd.f32 0.0, %v1910
        %v1912 = vpop.f32.mrf.mxu0
        %1913 = vmatprep.mubr.bf16.mxu0 0
        %1914 = vmatmul.mubr.bf16.gmra.mxu0 %v1760
        %v1915 = vpop.f32.mrf.mxu0
        %v1916 = vadd.f32 0.0, %v1915
        %v1917 = vpop.f32.mrf.mxu0
        %v1918 = vpop.f32.mrf.mxu0
        %v1919 = vadd.f32 0.0, %v1918
        %v1920 = vpop.f32.mrf.mxu0
        %1921 = vdwg.mxu0
        %1922 = vst [vmem:[%s465] sm:$0xff] %v1860
        %1923 = vst [vmem:[%s465 + $0x8] sm:$0xff] %v1863
        %1924 = vst [vmem:[%s465 + $0x10] sm:$0xff] %v1868
        %1925 = vst [vmem:[%s465 + $0x18] sm:$0xff] %v1871
        %1926 = vst [vmem:[%s465 + $0x20] sm:$0xff] %v1876
        %1927 = vst [vmem:[%s465 + $0x28] sm:$0xff] %v1879
        %1928 = vst [vmem:[%s465 + $0x30] sm:$0xff] %v1884
        %1929 = vst [vmem:[%s465 + $0x38] sm:$0xff] %v1887
        %1930 = vst [vmem:[%s465 + $0x40] sm:$0xff] %v1892
        %1931 = vst [vmem:[%s465 + $0x48] sm:$0xff] %v1895
        %1932 = vst [vmem:[%s465 + $0x50] sm:$0xff] %v1900
        %1933 = vst [vmem:[%s465 + $0x58] sm:$0xff] %v1903
        %1934 = vst [vmem:[%s465 + $0x60] sm:$0xff] %v1908
        %1935 = vst [vmem:[%s465 + $0x68] sm:$0xff] %v1911
        %1936 = vst [vmem:[%s465 + $0x70] sm:$0xff] %v1916
        %1937 = vst [vmem:[%s465 + $0x78] sm:$0xff] %v1919
        %s1938 = sand.u32 %s235, 1
        %s1939 = scalar_lea.sflag [#allocation4], %s1938
        %s1940 = sand.u32 %s235, 1
        %s1941 = smul.addr %s1940, 128
        %s1942 = scalar_lea.vmem [#allocation13], %s1941
        // Predicated region
        $region73: #{tpu_custom_call.1} parent=47 // pred_check
          %p1943 = pneg %p245
        $region74: #{tpu_custom_call.1} parent=47 // pred_check_branch
          %1945 = sbr.rel (%p1943) target = $region76
        $region75: #{tpu_custom_call.1} parent=47 // pred_region
          %s1946 = smul.u32 16, %s33
          %s1948 = ssub.s32 2048, 2048
          %1949 = vsyncadd %s1939, %s1948
          %s1950 = smul.addr %s34, 32
          %s1951 = sadd.s32 %s1946, %s1950
          %s1952 = smul.addr %s1951, 128
          %s1953 = scalar_lea.hbm %s7, %s1952
          %s1954 = sshll.u32 %s1942, 4
          %s1955 = int_to_ptr.vmem [resolvable:$true] %s1954
          %1960 = dma.vmem_to_hbm [thread:$0]  %s1955, 2048, %s1953, %s1939, 128, 128, 8
        $region76: #{tpu_custom_call.1} parent=47 // pred_fallthru
          _
      $region48: #{tpu_custom_call.1} parent=5 // pred_fallthru
        _
      %p1961 = scmp.le.s32.totalorder 2, %s24
      // Predicated region
      $region77: #{tpu_custom_call.1} parent=5 // pred_check
        %p1962 = pneg %p1961
      $region78: #{tpu_custom_call.1} parent=5 // pred_check_branch
        %1964 = sbr.rel (%p1962) target = $region80
      $region79: #{tpu_custom_call.1} parent=5 // pred_region
        %s1965 = ssub.s32 %s24, 2
        // Predicated region
        $region81: #{tpu_custom_call.1} parent=79 // pred_check
          %p1966 = pneg %p251
        $region82: #{tpu_custom_call.1} parent=79 // pred_check_branch
          %1968 = sbr.rel (%p1966) target = $region84
        $region83: #{tpu_custom_call.1} parent=79 // pred_region
          %s1969 = sand.u32 %s236, 1
          %s1970 = scalar_lea.sflag [#allocation4], %s1969
          %s1971 = sand.u32 %s236, 1
          %s1972 = smul.addr %s1971, 128
          %s1973 = scalar_lea.vmem [#allocation13], %s1972
          %1974 = dma.done %s1970, 2048
        $region84: #{tpu_custom_call.1} parent=79 // pred_fallthru
          _
      $region80: #{tpu_custom_call.1} parent=5 // pred_fallthru
        _
    $region6: #{tpu_custom_call.1} parent=1 // loop_footer
      %s28 = sadd.s32 1, %s24
    $region7: #{tpu_custom_call.1} parent=1 // loop_footer_branch
      %23 = sbr.rel target = $region3
    $region8: #{tpu_custom_call.1} parent=1 // loop_exit
      _
    %1975 = vsyncpa [#allocation3], 1
    %s1976 = scalar_lea.sflag [#allocation3], 1
    %1977 = vsyncpa %s1976, 1
    %1978 = vsyncpa [#allocation6], 1
    %s1979 = scalar_lea.sflag [#allocation6], 1
    %1980 = vsyncpa %s1979, 1
    %1981 = vsyncpa [#allocation9], 1
    %1982 = vsyncpa [#allocation12], 1
    %1983 = vsyncpa [#allocation4], 1
    %s1984 = scalar_lea.sflag [#allocation4], 1
    %1985 = vsyncpa %s1984, 1

</llo_original>
